<compile_context>
chip_gen: v6e
topology: v6e:2x2x1
jax: 0.10.0
libtpu: 0.0.40
codegen_flags: <defaults>
</compile_context>

<pallas_src>
import functools

import jax
import jax.numpy as jnp
from jax.experimental import pallas as pl
from jax.experimental.pallas import tpu as pltpu

EPS = 1e-4
LAMBDA_INSIDE = 4.0
LAMBDA_CODE = 1.0
LAMBDA_COORD = 1.0

_NUM_CHANNELS = 7
_PIX_PER_ROW = 128
_LANES = _NUM_CHANNELS * _PIX_PER_ROW      # 896 lanes = 128 pixels x 7 channels
_NUM_SPLITS = 2                            # leading "parallel" axis (2 TCs on v7x)
_NUM_PLANES = 4                            # labels/indicators, BCE-pos, BCE-neg, coord
_MAX_BLOCK_ROWS = 256                      # 256*896*4B ~= 0.9 MiB per input block


# ----------------------------------------------------------------------------
# In-kernel helpers
# ----------------------------------------------------------------------------
def _shift_left(x, k):
    """out[:, l] = x[:, l + k]; the last k lanes are zero-filled.
    (Pure-jnp lane shift; pltpu.roll is the native alternative.)"""
    pad = jnp.zeros((x.shape[0], k), x.dtype)
    return jnp.concatenate([x[:, k:], pad], axis=1)


def _shift_right(x, k):
    """out[:, l] = x[:, l - k]; the first k lanes are zero-filled."""
    pad = jnp.zeros((x.shape[0], k), x.dtype)
    return jnp.concatenate([pad, x[:, : x.shape[1] - k]], axis=1)


def _fold_rows(x, fold_rows):
    """(R, L) -> (fold_rows, L) partial sums using aligned vreg adds."""
    r, l = x.shape
    if r == fold_rows:
        return x
    if fold_rows == 8:
        return jnp.sum(x.reshape(r // 8, 8, l), axis=0)
    return jnp.sum(x, axis=0, keepdims=True)


def _accumulate(pred, true, valid, acc_ref, fold_rows):
    """Add this tile's lane-dense partial sums into the 4-plane accumulator.

    Per-channel sums recovered in the wrapper (lane % 7 == channel):
      plane 0: ch0 = sum(labels), ch1 = sum(vertex labels),
               ch2 = sum(positive_weights), ch3 = sum(vertex_weights)
      plane 1: ch0 = sum(l*log(p+eps)), ch1+ch2 = sum(pw * vl*log(vp+eps))
      plane 2: ch0 = sum((1-l)*log(1-p+eps)), ch1+ch2 = sum(pw*(1-vl)*log(1-vp+eps))
      plane 3: ch3 = sum(vw * (smooth_l1_sum - 2) / quad_norm)
    """
    f32 = jnp.float32
    _, l = true.shape

    # Static per-lane channel pattern, built at (1, L): ~7 vregs, negligible.
    ch = jax.lax.broadcasted_iota(jnp.int32, (1, l), 1) % _NUM_CHANNELS
    is1 = ch == 1
    is2 = ch == 2
    m0 = (ch == 0).astype(f32)
    m01 = (ch <= 1).astype(f32)
    m23 = jnp.logical_and(ch >= 2, ch <= 3).astype(f32)
    m3 = (ch == 3).astype(f32)

    # Indicator (x == 1) per lane, shifted so ch1/ch2 lanes see the pixel's ch0
    # indicator (positive_weights) and ch3 lanes see its ch1 indicator
    # (vertex_weights).  Shifts never cross a pixel group (7 lanes) boundary.
    ind = (true == 1.0).astype(f32)
    shr1 = _shift_right(ind, 1)
    shr2 = _shift_right(ind, 2)

    # Per-lane weight for the BCE planes: 1 at ch0, pw at ch1/ch2, 0 at ch3..6.
    w = jnp.where(is1, shr1, jnp.where(is2, shr2, m0))
    if valid is not None:
        w = jnp.where(valid, w, 0.0)

    # ---- balanced BCE (inside-score ch0 + side-vertex-code ch1/ch2),
    #      module's exact log(x + eps) forms -------------------------------
    p = 1.0 / (1.0 + jnp.exp(-pred))
    lp = jnp.log(p + EPS)
    ln = jnp.log(1.0 - p + EPS)
    plane_pos = w * (true * lp)
    plane_neg = w * ((1.0 - true) * ln)

    # ---- side-vertex-coord: smooth-L1 / quad-norm, gathered at ch3 lanes ---
    a = jnp.abs(pred - true)
    sl1 = jnp.where(a < 1.0, 0.5 * a * a, a)
    u = sl1 + _shift_left(sl1, 1)
    s4 = u + _shift_left(u, 2)                 # ch3 lane: sum of the 4 coord terms

    d = true - _shift_left(true, 2)            # ch3: t3 - t5, ch4: t4 - t6
    sq = d * d
    ssq = sq + _shift_left(sq, 1)              # ch3: squared quad diagonal
    n_q = jnp.sqrt(ssq) * 4.0 + EPS
    plane_coord = (m3 * shr2) * (s4 - 2.0) / n_q   # shr2 @ ch3 == vertex_weights

    # ---- label / indicator sums, packed into one plane ---------------------
    plane_lab = true * m01 + shr2 * m23

    f = fold_rows
    acc_ref[0 * f:1 * f, :] += _fold_rows(plane_lab, f)
    acc_ref[1 * f:2 * f, :] += _fold_rows(plane_pos, f)
    acc_ref[2 * f:3 * f, :] += _fold_rows(plane_neg, f)
    acc_ref[3 * f:4 * f, :] += _fold_rows(plane_coord, f)


def _quad_loss_kernel(pred_ref, true_ref, acc_ref, *, n_pixels, block_rows,
                      tiles_per_split, fold_rows):
    c = pl.program_id(0)          # megacore split axis ("parallel")
    j = pl.program_id(1)          # pixel-tile axis ("arbitrary", reduction)

    @pl.when(j == 0)
    def _init():
        acc_ref[...] = jnp.zeros_like(acc_ref)

    pred = pred_ref[...].astype(jnp.float32)
    true = true_ref[...].astype(jnp.float32)

    tile_idx = c * tiles_per_split + j            # logical (unclamped) tile index
    row0 = tile_idx * block_rows
    is_full = (row0 + block_rows) * _PIX_PER_ROW <= n_pixels

    @pl.when(is_full)
    def _fast():                                  # full tiles: no masking at all
        _accumulate(pred, true, None, acc_ref, fold_rows)

    @pl.when(jnp.logical_not(is_full))
    def _ragged():
        # Ragged / overshoot tile: lanes of pixels >= n_pixels are zeroed before
        # any arithmetic (exact-zero contribution, NaN-safe against OOB padding).
        rows = jax.lax.broadcasted_iota(jnp.int32, pred.shape, 0)
        lanes = jax.lax.broadcasted_iota(jnp.int32, pred.shape, 1)
        # pixel = global_row*128 + lane//7 < n_pixels  <=>  lane < 7*(n_pixels - row*128)
        valid = lanes < _NUM_CHANNELS * (
            n_pixels - (row0 + rows) * _PIX_PER_ROW)
        _accumulate(jnp.where(valid, pred, 0.0), jnp.where(valid, true, 0.0),
                    valid, acc_ref, fold_rows)


# ----------------------------------------------------------------------------
# Wrapper
# ----------------------------------------------------------------------------
def quad_loss_pallas(y_pred, y_true, *, max_block_rows=_MAX_BLOCK_ROWS):
    """QUADLoss forward.  y_pred / y_true: [B, H, W, 7] NHWC, float32 or bfloat16."""
    assert y_pred.shape == y_true.shape
    b, h, w_, c = y_pred.shape
    assert c == _NUM_CHANNELS, "expected 1 score + 2 vertex-code + 4 quad-coord channels"
    n_pix = b * h * w_

    pred2d = y_pred.reshape(n_pix, c)
    true2d = y_true.reshape(n_pix, c)
    if n_pix % _PIX_PER_ROW:
        # TODO(synk): this pad is one extra HBM copy; keep B*H*W % 128 == 0 (or pad
        # upstream) to stay single-pass.
        pad = _PIX_PER_ROW - n_pix % _PIX_PER_ROW
        pred2d = jnp.pad(pred2d, ((0, pad), (0, 0)))
        true2d = jnp.pad(true2d, ((0, pad), (0, 0)))
    n_rows = pred2d.shape[0] // _PIX_PER_ROW

    # Lane-dense, copy-free view: each row = 128 consecutive pixels x 7 channels.
    pred2d = pred2d.reshape(n_rows, _LANES)
    true2d = true2d.reshape(n_rows, _LANES)

    # Block rows: whole array if it is small, else a multiple of 8 capped by the
    # VMEM budget (inputs: 2 arrays x 2 buffers x block_rows*896*4 B).
    block_rows = n_rows if n_rows <= max_block_rows else max_block_rows
    fold_rows = 8 if block_rows % 8 == 0 else 1
    acc_rows = _NUM_PLANES * fold_rows

    n_blocks = pl.cdiv(n_rows, block_rows)
    tps = pl.cdiv(n_blocks, _NUM_SPLITS)
    grid = (_NUM_SPLITS, tps)

    def in_map(ci, ji):
        return (jnp.minimum(ci * tps + ji, n_blocks - 1), 0)

    kernel = functools.partial(
        _quad_loss_kernel, n_pixels=n_pix, block_rows=block_rows,
        tiles_per_split=tps, fold_rows=fold_rows)

    partial_sums = pl.pallas_call(
        kernel,
        out_shape=jax.ShapeDtypeStruct((_NUM_SPLITS, acc_rows, _LANES), jnp.float32),
        grid=grid,
        in_specs=[pl.BlockSpec((block_rows, _LANES), in_map),
                  pl.BlockSpec((block_rows, _LANES), in_map)],
        out_specs=pl.BlockSpec((None, acc_rows, _LANES), lambda ci, ji: (ci, 0, 0)),
        compiler_params=pltpu.CompilerParams(
            # TODO(synk): switch axis 0 to pltpu.CORE_PARALLEL for guaranteed
            # dual-TensorCore sharding on v7x; "parallel" is harmless on v5e/v6e.
            dimension_semantics=("parallel", "arbitrary"),
            vmem_limit_bytes=32 * 1024 * 1024),
    )(pred2d, true2d)

    # Tiny final combine: reduce splits / rows / pixel groups, resolve channels.
    acc = jnp.sum(partial_sums, axis=0)                                    # (acc_rows, 896)
    per_ch = jnp.sum(
        acc.reshape(_NUM_PLANES, fold_rows, _PIX_PER_ROW, _NUM_CHANNELS),
        axis=(1, 2))                                                       # (4, 7)

    s_lab, s_vlab, s_pw, s_vw = per_ch[0, 0], per_ch[0, 1], per_ch[0, 2], per_ch[0, 3]
    a_pos, a_vpos = per_ch[1, 0], per_ch[1, 1] + per_ch[1, 2]
    a_neg, a_vneg = per_ch[2, 0], per_ch[2, 1] + per_ch[2, 2]
    s_coord = per_ch[3, 3]

    n = jnp.float32(n_pix)
    mean_lab = s_lab / n
    beta = 1.0 - mean_lab
    inside = -LAMBDA_INSIDE * (beta * a_pos + (1.0 - beta) * a_neg) / n

    vbeta = 1.0 - (s_vlab / n) / (mean_lab + EPS)
    code = -LAMBDA_CODE * (vbeta * a_vpos + (1.0 - vbeta) * a_vneg) / (s_pw + EPS)

    coord = LAMBDA_COORD * s_coord / (s_vw + EPS)
    return inside + code + coord


# ----------------------------------------------------------------------------
# Pure-JAX reference (mirrors the PyTorch module exactly)
# ----------------------------------------------------------------------------
def quad_loss_ref(y_pred, y_true):
    eps = EPS
    logits = y_pred[..., :1]
    labels = y_true[..., :1]
    beta = 1.0 - jnp.mean(labels)
    p = jax.nn.sigmoid(logits)
    inside = jnp.mean(-(beta * labels * jnp.log(p + eps)
                        + (1.0 - beta) * (1.0 - labels) * jnp.log(1.0 - p + eps)))
    inside = inside * LAMBDA_INSIDE

    vlogits = y_pred[..., 1:3]
    vlabels = y_true[..., 1:3]
    vbeta = 1.0 - jnp.mean(y_true[..., 1:2]) / (jnp.mean(labels) + eps)
    vp = jax.nn.sigmoid(vlogits)
    pos = -vbeta * vlabels * jnp.log(vp + eps)
    neg = -(1.0 - vbeta) * (1.0 - vlabels) * jnp.log(1.0 - vp + eps)
    pw = (y_true[..., 0] == 1.0).astype(jnp.float32)
    code = jnp.sum(jnp.sum(pos + neg, -1) * pw) / (jnp.sum(pw) + eps)
    code = code * LAMBDA_CODE

    gh = y_pred[..., 3:]
    gt = y_true[..., 3:]
    vw = (y_true[..., 1] == 1.0).astype(jnp.float32)
    dxy = gt.reshape(-1, 2, 2)
    diff = dxy[:, 0, :] - dxy[:, 1, :]
    n_q = (jnp.sqrt(jnp.sum(diff * diff, -1)) * 4.0 + eps).reshape(vw.shape)
    d = gh - gt
    a = jnp.abs(d)
    m = (a < 1.0).astype(jnp.float32)
    pls = jnp.sum(m * 0.5 * a * a + (1.0 - m) * a - 0.5, -1) / n_q * vw
    coord = jnp.sum(pls) / (jnp.sum(vw) + eps)
    return inside + code + coord * LAMBDA_COORD


if __name__ == "__main__":
    key = jax.random.PRNGKey(0)

    def make_inputs(k, B, H, W):
        k1, k2, k3, k4 = jax.random.split(k, 4)
        y_pred = jax.random.normal(k1, (B, H, W, 7), dtype=jnp.float32)
        score = (jax.random.uniform(k2, (B, H, W, 1)) < 0.3).astype(jnp.float32)
        vcode = (jax.random.uniform(k3, (B, H, W, 2)) < 0.5).astype(jnp.float32)
        coords = jax.random.normal(k4, (B, H, W, 4), dtype=jnp.float32)
        y_true = jnp.concatenate([score, vcode, coords], axis=-1)
        return y_pred, y_true

    ka, kb = jax.random.split(key)
    loss_fn = jax.jit(quad_loss_pallas)

    # case 1: P = 512 -> single tile; the second core-split is fully masked
    yp, yt = make_inputs(ka, 2, 16, 16)
    out = jax.block_until_ready(loss_fn(yp, yt))
    ref = quad_loss_ref(yp, yt)
    assert jnp.allclose(out, ref, rtol=1e-2, atol=1e-2), (out, ref)

    # case 2: P = 384 -> 3-row (non multiple-of-8) block, exercises the small path
    yp, yt = make_inputs(kb, 1, 24, 16)
    out = jax.block_until_ready(loss_fn(yp, yt))
    ref = quad_loss_ref(yp, yt)
    assert jnp.allclose(out, ref, rtol=1e-2, atol=1e-2), (out, ref)

    print("KERNEL_OK")
</pallas_src>

<mosaic_0001>
module attributes {stable_mosaic.version = 11 : i64} {
  func.func @_quad_loss_kernel(%arg0: i32, %arg1: i32, %arg2: memref<4x896xf32, #tpu.memory_space<vmem>>, %arg3: memref<4x896xf32, #tpu.memory_space<vmem>>, %arg4: memref<1x4x896xf32, #tpu.memory_space<vmem>>) attributes {dimension_semantics = [#tpu.dimension_semantics<parallel>, #tpu.dimension_semantics<arbitrary>], iteration_bounds = array<i64: 2, 1>, scalar_prefetch = 0 : i64, scratch_operands = 0 : i64, tpu.core_type = #tpu.core_type<tc>, window_params = [{transform_indices = @transform_0, window_bounds = array<i64: 4, 896>}, {transform_indices = @transform_1, window_bounds = array<i64: 4, 896>}, {transform_indices = @transform_2, window_bounds = array<i64: 1, 4, 896>}]} {
    %c0_i32 = arith.constant 0 : i32
    %0 = arith.cmpi eq, %arg1, %c0_i32 : i32
    %1 = arith.extui %0 : i1 to i32
    %c0_i32_0 = arith.constant 0 : i32
    %2 = arith.cmpi ne, %1, %c0_i32_0 : i32
    scf.if %2 {
      %cst = arith.constant 0.000000e+00 : f32
      %16 = vector.broadcast %cst : f32 to vector<4x896xf32>
      %c0_7 = arith.constant 0 : index
      %c0_8 = arith.constant 0 : index
      %c0_9 = arith.constant 0 : index
      %17 = vector.load %arg4[%c0_7, %c0_8, %c0_9] : memref<1x4x896xf32, #tpu.memory_space<vmem>>, vector<1x4x896xf32>
      %18 = vector.shape_cast %17 : vector<1x4x896xf32> to vector<4x896xf32>
      %19 = vector.shape_cast %16 : vector<4x896xf32> to vector<1x4x896xf32>
      tpu.vector_store %arg4[%c0_7, %c0_8, %c0_9], %19 {strides = array<i32>} : memref<1x4x896xf32, #tpu.memory_space<vmem>>, vector<1x4x896xf32>,
    } else {
    }
    %c0 = arith.constant 0 : index
    %c0_1 = arith.constant 0 : index
    %3 = vector.load %arg2[%c0, %c0_1] : memref<4x896xf32, #tpu.memory_space<vmem>>, vector<4x896xf32>
    %c0_2 = arith.constant 0 : index
    %c0_3 = arith.constant 0 : index
    %4 = vector.load %arg3[%c0_2, %c0_3] : memref<4x896xf32, #tpu.memory_space<vmem>>, vector<4x896xf32>
    %c1_i32 = arith.constant 1 : i32
    %5 = arith.muli %arg0, %c1_i32 : i32
    %6 = arith.addi %5, %arg1 : i32
    %c4_i32 = arith.constant 4 : i32
    %7 = arith.muli %6, %c4_i32 : i32
    %c4_i32_4 = arith.constant 4 : i32
    %8 = arith.addi %7, %c4_i32_4 : i32
    %c128_i32 = arith.constant 128 : i32
    %9 = arith.muli %8, %c128_i32 : i32
    %c512_i32 = arith.constant 512 : i32
    %10 = arith.cmpi sle, %9, %c512_i32 : i32
    %11 = arith.extui %10 : i1 to i32
    %c0_i32_5 = arith.constant 0 : i32
    %12 = arith.cmpi ne, %11, %c0_i32_5 : i32
    scf.if %12 {
      %16 = tpu.iota {dimensions = array<i32: 1>} : vector<1x896xi32>
      %c7_i32 = arith.constant 7 : i32
      %c0_i32_7 = arith.constant 0 : i32
      %17 = arith.cmpi eq, %c7_i32, %c0_i32_7 : i32
      %c1_i32_8 = arith.constant 1 : i32
      %18 = arith.select %17, %c1_i32_8, %c7_i32 : i32
      %19 = vector.broadcast %18 : i32 to vector<1x896xi32>
      %20 = arith.remsi %16, %19 : vector<1x896xi32>
      %c0_i32_9 = arith.constant 0 : i32
      %21 = vector.broadcast %c0_i32_9 : i32 to vector<1x896xi32>
      %22 = arith.cmpi ne, %20, %21 : vector<1x896xi32>
      %c0_i32_10 = arith.constant 0 : i32
      %23 = vector.broadcast %c0_i32_10 : i32 to vector<1x896xi32>
      %24 = arith.cmpi slt, %20, %23 : vector<1x896xi32>
      %c0_i32_11 = arith.constant 0 : i32
      %25 = arith.cmpi slt, %18, %c0_i32_11 : i32
      %26 = vector.broadcast %25 : i1 to vector<1x896xi1>
      %27 = vector.broadcast %26 : vector<1x896xi1> to vector<1x896xi1>
      %28 = arith.xori %24, %27 : vector<1x896xi1>
      %29 = arith.andi %28, %22 : vector<1x896xi1>
      %30 = vector.broadcast %18 : i32 to vector<1x896xi32>
      %31 = arith.addi %20, %30 : vector<1x896xi32>
      %32 = arith.select %29, %31, %20 : vector<1x896xi1>, vector<1x896xi32>
      %c1_i32_12 = arith.constant 1 : i32
      %33 = vector.broadcast %c1_i32_12 : i32 to vector<1x896xi32>
      %34 = arith.cmpi eq, %32, %33 : vector<1x896xi32>
      %c2_i32 = arith.constant 2 : i32
      %35 = vector.broadcast %c2_i32 : i32 to vector<1x896xi32>
      %36 = arith.cmpi eq, %32, %35 : vector<1x896xi32>
      %c0_i32_13 = arith.constant 0 : i32
      %37 = vector.broadcast %c0_i32_13 : i32 to vector<1x896xi32>
      %38 = arith.cmpi eq, %32, %37 : vector<1x896xi32>
      %39 = arith.extui %38 : vector<1x896xi1> to vector<1x896xi32>
      %40 = arith.sitofp %39 : vector<1x896xi32> to vector<1x896xf32>
      %c1_i32_14 = arith.constant 1 : i32
      %41 = vector.broadcast %c1_i32_14 : i32 to vector<1x896xi32>
      %42 = arith.cmpi sle, %32, %41 : vector<1x896xi32>
      %43 = arith.extui %42 : vector<1x896xi1> to vector<1x896xi32>
      %44 = arith.sitofp %43 : vector<1x896xi32> to vector<1x896xf32>
      %c2_i32_15 = arith.constant 2 : i32
      %45 = vector.broadcast %c2_i32_15 : i32 to vector<1x896xi32>
      %46 = arith.cmpi sge, %32, %45 : vector<1x896xi32>
      %c3_i32 = arith.constant 3 : i32
      %47 = vector.broadcast %c3_i32 : i32 to vector<1x896xi32>
      %48 = arith.cmpi sle, %32, %47 : vector<1x896xi32>
      %49 = arith.andi %46, %48 : vector<1x896xi1>
      %50 = arith.extui %49 : vector<1x896xi1> to vector<1x896xi32>
      %51 = arith.sitofp %50 : vector<1x896xi32> to vector<1x896xf32>
      %c3_i32_16 = arith.constant 3 : i32
      %52 = vector.broadcast %c3_i32_16 : i32 to vector<1x896xi32>
      %53 = arith.cmpi eq, %32, %52 : vector<1x896xi32>
      %54 = arith.extui %53 : vector<1x896xi1> to vector<1x896xi32>
      %55 = arith.sitofp %54 : vector<1x896xi32> to vector<1x896xf32>
      %cst = arith.constant 1.000000e+00 : f32
      %56 = vector.broadcast %cst : f32 to vector<4x896xf32>
      %57 = arith.cmpf oeq, %4, %56 : vector<4x896xf32>
      %58 = arith.extui %57 : vector<4x896xi1> to vector<4x896xi32>
      %59 = arith.sitofp %58 : vector<4x896xi32> to vector<4x896xf32>
      %cst_17 = arith.constant 0.000000e+00 : f32
      %60 = vector.broadcast %cst_17 : f32 to vector<4x1xf32>
      %61 = vector.extract_strided_slice %59 {offsets = [0, 0], sizes = [4, 895], strides = [1, 1]} : vector<4x896xf32> to vector<4x895xf32>
      %62 = tpu.concatenate %60, %61 in 1 : vector<4x1xf32>, vector<4x895xf32> -> vector<4x896xf32>
      %cst_18 = arith.constant 0.000000e+00 : f32
      %63 = vector.broadcast %cst_18 : f32 to vector<4x2xf32>
      %64 = vector.extract_strided_slice %59 {offsets = [0, 0], sizes = [4, 894], strides = [1, 1]} : vector<4x896xf32> to vector<4x894xf32>
      %65 = tpu.concatenate %63, %64 in 1 : vector<4x2xf32>, vector<4x894xf32> -> vector<4x896xf32>
      %66 = vector.shape_cast %36 : vector<1x896xi1> to vector<1x896xi1>
      %67 = vector.broadcast %66 : vector<1x896xi1> to vector<4x896xi1>
      %68 = vector.shape_cast %40 : vector<1x896xf32> to vector<1x896xf32>
      %69 = vector.broadcast %68 : vector<1x896xf32> to vector<4x896xf32>
      %70 = arith.select %67, %65, %69 : vector<4x896xi1>, vector<4x896xf32>
      %71 = vector.shape_cast %34 : vector<1x896xi1> to vector<1x896xi1>
      %72 = vector.broadcast %71 : vector<1x896xi1> to vector<4x896xi1>
      %73 = arith.select %72, %62, %70 : vector<4x896xi1>, vector<4x896xf32>
      %cst_19 = arith.constant 0.000000e+00 : f32
      %74 = vector.broadcast %cst_19 : f32 to vector<4x896xf32>
      %75 = arith.subf %74, %3 : vector<4x896xf32>
      %76 = math.exp %75 : vector<4x896xf32>
      %cst_20 = arith.constant 1.000000e+00 : f32
      %77 = vector.broadcast %cst_20 : f32 to vector<4x896xf32>
      %78 = arith.addf %77, %76 : vector<4x896xf32>
      %cst_21 = arith.constant 1.000000e+00 : f32
      %79 = vector.broadcast %cst_21 : f32 to vector<4x896xf32>
      %80 = arith.divf %79, %78 : vector<4x896xf32>
      %cst_22 = arith.constant 9.99999974E-5 : f32
      %81 = vector.broadcast %cst_22 : f32 to vector<4x896xf32>
      %82 = arith.addf %80, %81 : vector<4x896xf32>
      %83 = math.log %82 : vector<4x896xf32>
      %cst_23 = arith.constant 1.000000e+00 : f32
      %84 = vector.broadcast %cst_23 : f32 to vector<4x896xf32>
      %85 = arith.subf %84, %80 : vector<4x896xf32>
      %cst_24 = arith.constant 9.99999974E-5 : f32
      %86 = vector.broadcast %cst_24 : f32 to vector<4x896xf32>
      %87 = arith.addf %85, %86 : vector<4x896xf32>
      %88 = math.log %87 : vector<4x896xf32>
      %89 = arith.mulf %4, %83 : vector<4x896xf32>
      %90 = arith.mulf %73, %89 : vector<4x896xf32>
      %cst_25 = arith.constant 1.000000e+00 : f32
      %91 = vector.broadcast %cst_25 : f32 to vector<4x896xf32>
      %92 = arith.subf %91, %4 : vector<4x896xf32>
      %93 = arith.mulf %92, %88 : vector<4x896xf32>
      %94 = arith.mulf %73, %93 : vector<4x896xf32>
      %95 = arith.subf %3, %4 : vector<4x896xf32>
      %96 = math.absf %95 : vector<4x896xf32>
      %cst_26 = arith.constant 1.000000e+00 : f32
      %97 = vector.broadcast %cst_26 : f32 to vector<4x896xf32>
      %98 = arith.cmpf olt, %96, %97 : vector<4x896xf32>
      %cst_27 = arith.constant 5.000000e-01 : f32
      %99 = vector.broadcast %cst_27 : f32 to vector<4x896xf32>
      %100 = arith.mulf %99, %96 : vector<4x896xf32>
      %101 = arith.mulf %100, %96 : vector<4x896xf32>
      %102 = arith.select %98, %101, %96 : vector<4x896xi1>, vector<4x896xf32>
      %cst_28 = arith.constant 0.000000e+00 : f32
      %103 = vector.broadcast %cst_28 : f32 to vector<4x1xf32>
      %104 = vector.extract_strided_slice %102 {offsets = [0, 1], sizes = [4, 895], strides = [1, 1]} : vector<4x896xf32> to vector<4x895xf32>
      %105 = tpu.concatenate %104, %103 in 1 : vector<4x895xf32>, vector<4x1xf32> -> vector<4x896xf32>
      %106 = arith.addf %102, %105 : vector<4x896xf32>
      %cst_29 = arith.constant 0.000000e+00 : f32
      %107 = vector.broadcast %cst_29 : f32 to vector<4x2xf32>
      %108 = vector.extract_strided_slice %106 {offsets = [0, 2], sizes = [4, 894], strides = [1, 1]} : vector<4x896xf32> to vector<4x894xf32>
      %109 = tpu.concatenate %108, %107 in 1 : vector<4x894xf32>, vector<4x2xf32> -> vector<4x896xf32>
      %110 = arith.addf %106, %109 : vector<4x896xf32>
      %cst_30 = arith.constant 0.000000e+00 : f32
      %111 = vector.broadcast %cst_30 : f32 to vector<4x2xf32>
      %112 = vector.extract_strided_slice %4 {offsets = [0, 2], sizes = [4, 894], strides = [1, 1]} : vector<4x896xf32> to vector<4x894xf32>
      %113 = tpu.concatenate %112, %111 in 1 : vector<4x894xf32>, vector<4x2xf32> -> vector<4x896xf32>
      %114 = arith.subf %4, %113 : vector<4x896xf32>
      %115 = arith.mulf %114, %114 : vector<4x896xf32>
      %cst_31 = arith.constant 0.000000e+00 : f32
      %116 = vector.broadcast %cst_31 : f32 to vector<4x1xf32>
      %117 = vector.extract_strided_slice %115 {offsets = [0, 1], sizes = [4, 895], strides = [1, 1]} : vector<4x896xf32> to vector<4x895xf32>
      %118 = tpu.concatenate %117, %116 in 1 : vector<4x895xf32>, vector<4x1xf32> -> vector<4x896xf32>
      %119 = arith.addf %115, %118 : vector<4x896xf32>
      %120 = math.sqrt %119 : vector<4x896xf32>
      %cst_32 = arith.constant 4.000000e+00 : f32
      %121 = vector.broadcast %cst_32 : f32 to vector<4x896xf32>
      %122 = arith.mulf %120, %121 : vector<4x896xf32>
      %cst_33 = arith.constant 9.99999974E-5 : f32
      %123 = vector.broadcast %cst_33 : f32 to vector<4x896xf32>
      %124 = arith.addf %122, %123 : vector<4x896xf32>
      %125 = vector.broadcast %55 : vector<1x896xf32> to vector<4x896xf32>
      %126 = arith.mulf %125, %65 : vector<4x896xf32>
      %cst_34 = arith.constant 2.000000e+00 : f32
      %127 = vector.broadcast %cst_34 : f32 to vector<4x896xf32>
      %128 = arith.subf %110, %127 : vector<4x896xf32>
      %129 = arith.mulf %126, %128 : vector<4x896xf32>
      %130 = arith.divf %129, %124 : vector<4x896xf32>
      %131 = vector.broadcast %44 : vector<1x896xf32> to vector<4x896xf32>
      %132 = arith.mulf %4, %131 : vector<4x896xf32>
      %133 = vector.broadcast %51 : vector<1x896xf32> to vector<4x896xf32>
      %134 = arith.mulf %65, %133 : vector<4x896xf32>
      %135 = arith.addf %132, %134 : vector<4x896xf32>
      %c0_35 = arith.constant 0 : index
      %c0_36 = arith.constant 0 : index
      %c0_37 = arith.constant 0 : index
      %136 = vector.load %arg4[%c0_35, %c0_36, %c0_37] : memref<1x4x896xf32, #tpu.memory_space<vmem>>, vector<1x1x896xf32>
      %137 = vector.shape_cast %136 : vector<1x1x896xf32> to vector<1x896xf32>
      %cst_38 = arith.constant dense<0.000000e+00> : vector<896xf32>
      %138 = vector.multi_reduction <add>, %135, %cst_38 [0] : vector<4x896xf32> to vector<896xf32>
      %139 = vector.shape_cast %138 : vector<896xf32> to vector<1x896xf32>
      %140 = arith.addf %137, %139 : vector<1x896xf32>
      %c0_39 = arith.constant 0 : index
      %c0_40 = arith.constant 0 : index
      %c0_41 = arith.constant 0 : index
      %141 = vector.load %arg4[%c0_39, %c0_40, %c0_41] : memref<1x4x896xf32, #tpu.memory_space<vmem>>, vector<1x1x896xf32>
      %142 = vector.shape_cast %141 : vector<1x1x896xf32> to vector<1x896xf32>
      %143 = vector.shape_cast %140 : vector<1x896xf32> to vector<1x1x896xf32>
      tpu.vector_store %arg4[%c0_39, %c0_40, %c0_41], %143 {strides = array<i32>} : memref<1x4x896xf32, #tpu.memory_space<vmem>>, vector<1x1x896xf32>,
      %c0_42 = arith.constant 0 : index
      %c1 = arith.constant 1 : index
      %c0_43 = arith.constant 0 : index
      %144 = vector.load %arg4[%c0_42, %c1, %c0_43] : memref<1x4x896xf32, #tpu.memory_space<vmem>>, vector<1x1x896xf32>
      %145 = vector.shape_cast %144 : vector<1x1x896xf32> to vector<1x896xf32>
      %cst_44 = arith.constant dense<0.000000e+00> : vector<896xf32>
      %146 = vector.multi_reduction <add>, %90, %cst_44 [0] : vector<4x896xf32> to vector<896xf32>
      %147 = vector.shape_cast %146 : vector<896xf32> to vector<1x896xf32>
      %148 = arith.addf %145, %147 : vector<1x896xf32>
      %c0_45 = arith.constant 0 : index
      %c1_46 = arith.constant 1 : index
      %c0_47 = arith.constant 0 : index
      %149 = vector.load %arg4[%c0_45, %c1_46, %c0_47] : memref<1x4x896xf32, #tpu.memory_space<vmem>>, vector<1x1x896xf32>
      %150 = vector.shape_cast %149 : vector<1x1x896xf32> to vector<1x896xf32>
      %151 = vector.shape_cast %148 : vector<1x896xf32> to vector<1x1x896xf32>
      tpu.vector_store %arg4[%c0_45, %c1_46, %c0_47], %151 {strides = array<i32>} : memref<1x4x896xf32, #tpu.memory_space<vmem>>, vector<1x1x896xf32>,
      %c0_48 = arith.constant 0 : index
      %c2 = arith.constant 2 : index
      %c0_49 = arith.constant 0 : index
      %152 = vector.load %arg4[%c0_48, %c2, %c0_49] : memref<1x4x896xf32, #tpu.memory_space<vmem>>, vector<1x1x896xf32>
      %153 = vector.shape_cast %152 : vector<1x1x896xf32> to vector<1x896xf32>
      %cst_50 = arith.constant dense<0.000000e+00> : vector<896xf32>
      %154 = vector.multi_reduction <add>, %94, %cst_50 [0] : vector<4x896xf32> to vector<896xf32>
      %155 = vector.shape_cast %154 : vector<896xf32> to vector<1x896xf32>
      %156 = arith.addf %153, %155 : vector<1x896xf32>
      %c0_51 = arith.constant 0 : index
      %c2_52 = arith.constant 2 : index
      %c0_53 = arith.constant 0 : index
      %157 = vector.load %arg4[%c0_51, %c2_52, %c0_53] : memref<1x4x896xf32, #tpu.memory_space<vmem>>, vector<1x1x896xf32>
      %158 = vector.shape_cast %157 : vector<1x1x896xf32> to vector<1x896xf32>
      %159 = vector.shape_cast %156 : vector<1x896xf32> to vector<1x1x896xf32>
      tpu.vector_store %arg4[%c0_51, %c2_52, %c0_53], %159 {strides = array<i32>} : memref<1x4x896xf32, #tpu.memory_space<vmem>>, vector<1x1x896xf32>,
      %c0_54 = arith.constant 0 : index
      %c3 = arith.constant 3 : index
      %c0_55 = arith.constant 0 : index
      %160 = vector.load %arg4[%c0_54, %c3, %c0_55] : memref<1x4x896xf32, #tpu.memory_space<vmem>>, vector<1x1x896xf32>
      %161 = vector.shape_cast %160 : vector<1x1x896xf32> to vector<1x896xf32>
      %cst_56 = arith.constant dense<0.000000e+00> : vector<896xf32>
      %162 = vector.multi_reduction <add>, %130, %cst_56 [0] : vector<4x896xf32> to vector<896xf32>
      %163 = vector.shape_cast %162 : vector<896xf32> to vector<1x896xf32>
      %164 = arith.addf %161, %163 : vector<1x896xf32>
      %c0_57 = arith.constant 0 : index
      %c3_58 = arith.constant 3 : index
      %c0_59 = arith.constant 0 : index
      %165 = vector.load %arg4[%c0_57, %c3_58, %c0_59] : memref<1x4x896xf32, #tpu.memory_space<vmem>>, vector<1x1x896xf32>
      %166 = vector.shape_cast %165 : vector<1x1x896xf32> to vector<1x896xf32>
      %167 = vector.shape_cast %164 : vector<1x896xf32> to vector<1x1x896xf32>
      tpu.vector_store %arg4[%c0_57, %c3_58, %c0_59], %167 {strides = array<i32>} : memref<1x4x896xf32, #tpu.memory_space<vmem>>, vector<1x1x896xf32>,
    } else {
    }
    %true = arith.constant true
    %13 = arith.xori %10, %true : i1
    %14 = arith.extui %13 : i1 to i32
    %c0_i32_6 = arith.constant 0 : i32
    %15 = arith.cmpi ne, %14, %c0_i32_6 : i32
    scf.if %15 {
      %16 = tpu.iota {dimensions = array<i32: 0>} : vector<4x896xi32>
      %17 = tpu.iota {dimensions = array<i32: 1>} : vector<4x896xi32>
      %18 = vector.broadcast %7 : i32 to vector<4x896xi32>
      %19 = arith.addi %18, %16 : vector<4x896xi32>
      %c128_i32_7 = arith.constant 128 : i32
      %20 = vector.broadcast %c128_i32_7 : i32 to vector<4x896xi32>
      %21 = arith.muli %19, %20 : vector<4x896xi32>
      %c512_i32_8 = arith.constant 512 : i32
      %22 = vector.broadcast %c512_i32_8 : i32 to vector<4x896xi32>
      %23 = arith.subi %22, %21 : vector<4x896xi32>
      %c7_i32 = arith.constant 7 : i32
      %24 = vector.broadcast %c7_i32 : i32 to vector<4x896xi32>
      %25 = arith.muli %24, %23 : vector<4x896xi32>
      %26 = arith.cmpi slt, %17, %25 : vector<4x896xi32>
      %cst = arith.constant 0.000000e+00 : f32
      %27 = vector.broadcast %cst : f32 to vector<4x896xf32>
      %28 = arith.select %26, %3, %27 : vector<4x896xi1>, vector<4x896xf32>
      %cst_9 = arith.constant 0.000000e+00 : f32
      %29 = vector.broadcast %cst_9 : f32 to vector<4x896xf32>
      %30 = arith.select %26, %4, %29 : vector<4x896xi1>, vector<4x896xf32>
      %31 = tpu.iota {dimensions = array<i32: 1>} : vector<1x896xi32>
      %c7_i32_10 = arith.constant 7 : i32
      %c0_i32_11 = arith.constant 0 : i32
      %32 = arith.cmpi eq, %c7_i32_10, %c0_i32_11 : i32
      %c1_i32_12 = arith.constant 1 : i32
      %33 = arith.select %32, %c1_i32_12, %c7_i32_10 : i32
      %34 = vector.broadcast %33 : i32 to vector<1x896xi32>
      %35 = arith.remsi %31, %34 : vector<1x896xi32>
      %c0_i32_13 = arith.constant 0 : i32
      %36 = vector.broadcast %c0_i32_13 : i32 to vector<1x896xi32>
      %37 = arith.cmpi ne, %35, %36 : vector<1x896xi32>
      %c0_i32_14 = arith.constant 0 : i32
      %38 = vector.broadcast %c0_i32_14 : i32 to vector<1x896xi32>
      %39 = arith.cmpi slt, %35, %38 : vector<1x896xi32>
      %c0_i32_15 = arith.constant 0 : i32
      %40 = arith.cmpi slt, %33, %c0_i32_15 : i32
      %41 = vector.broadcast %40 : i1 to vector<1x896xi1>
      %42 = vector.broadcast %41 : vector<1x896xi1> to vector<1x896xi1>
      %43 = arith.xori %39, %42 : vector<1x896xi1>
      %44 = arith.andi %43, %37 : vector<1x896xi1>
      %45 = vector.broadcast %33 : i32 to vector<1x896xi32>
      %46 = arith.addi %35, %45 : vector<1x896xi32>
      %47 = arith.select %44, %46, %35 : vector<1x896xi1>, vector<1x896xi32>
      %c1_i32_16 = arith.constant 1 : i32
      %48 = vector.broadcast %c1_i32_16 : i32 to vector<1x896xi32>
      %49 = arith.cmpi eq, %47, %48 : vector<1x896xi32>
      %c2_i32 = arith.constant 2 : i32
      %50 = vector.broadcast %c2_i32 : i32 to vector<1x896xi32>
      %51 = arith.cmpi eq, %47, %50 : vector<1x896xi32>
      %c0_i32_17 = arith.constant 0 : i32
      %52 = vector.broadcast %c0_i32_17 : i32 to vector<1x896xi32>
      %53 = arith.cmpi eq, %47, %52 : vector<1x896xi32>
      %54 = arith.extui %53 : vector<1x896xi1> to vector<1x896xi32>
      %55 = arith.sitofp %54 : vector<1x896xi32> to vector<1x896xf32>
      %c1_i32_18 = arith.constant 1 : i32
      %56 = vector.broadcast %c1_i32_18 : i32 to vector<1x896xi32>
      %57 = arith.cmpi sle, %47, %56 : vector<1x896xi32>
      %58 = arith.extui %57 : vector<1x896xi1> to vector<1x896xi32>
      %59 = arith.sitofp %58 : vector<1x896xi32> to vector<1x896xf32>
      %c2_i32_19 = arith.constant 2 : i32
      %60 = vector.broadcast %c2_i32_19 : i32 to vector<1x896xi32>
      %61 = arith.cmpi sge, %47, %60 : vector<1x896xi32>
      %c3_i32 = arith.constant 3 : i32
      %62 = vector.broadcast %c3_i32 : i32 to vector<1x896xi32>
      %63 = arith.cmpi sle, %47, %62 : vector<1x896xi32>
      %64 = arith.andi %61, %63 : vector<1x896xi1>
      %65 = arith.extui %64 : vector<1x896xi1> to vector<1x896xi32>
      %66 = arith.sitofp %65 : vector<1x896xi32> to vector<1x896xf32>
      %c3_i32_20 = arith.constant 3 : i32
      %67 = vector.broadcast %c3_i32_20 : i32 to vector<1x896xi32>
      %68 = arith.cmpi eq, %47, %67 : vector<1x896xi32>
      %69 = arith.extui %68 : vector<1x896xi1> to vector<1x896xi32>
      %70 = arith.sitofp %69 : vector<1x896xi32> to vector<1x896xf32>
      %cst_21 = arith.constant 1.000000e+00 : f32
      %71 = vector.broadcast %cst_21 : f32 to vector<4x896xf32>
      %72 = arith.cmpf oeq, %30, %71 : vector<4x896xf32>
      %73 = arith.extui %72 : vector<4x896xi1> to vector<4x896xi32>
      %74 = arith.sitofp %73 : vector<4x896xi32> to vector<4x896xf32>
      %cst_22 = arith.constant 0.000000e+00 : f32
      %75 = vector.broadcast %cst_22 : f32 to vector<4x1xf32>
      %76 = vector.extract_strided_slice %74 {offsets = [0, 0], sizes = [4, 895], strides = [1, 1]} : vector<4x896xf32> to vector<4x895xf32>
      %77 = tpu.concatenate %75, %76 in 1 : vector<4x1xf32>, vector<4x895xf32> -> vector<4x896xf32>
      %cst_23 = arith.constant 0.000000e+00 : f32
      %78 = vector.broadcast %cst_23 : f32 to vector<4x2xf32>
      %79 = vector.extract_strided_slice %74 {offsets = [0, 0], sizes = [4, 894], strides = [1, 1]} : vector<4x896xf32> to vector<4x894xf32>
      %80 = tpu.concatenate %78, %79 in 1 : vector<4x2xf32>, vector<4x894xf32> -> vector<4x896xf32>
      %81 = vector.shape_cast %51 : vector<1x896xi1> to vector<1x896xi1>
      %82 = vector.broadcast %81 : vector<1x896xi1> to vector<4x896xi1>
      %83 = vector.shape_cast %55 : vector<1x896xf32> to vector<1x896xf32>
      %84 = vector.broadcast %83 : vector<1x896xf32> to vector<4x896xf32>
      %85 = arith.select %82, %80, %84 : vector<4x896xi1>, vector<4x896xf32>
      %86 = vector.shape_cast %49 : vector<1x896xi1> to vector<1x896xi1>
      %87 = vector.broadcast %86 : vector<1x896xi1> to vector<4x896xi1>
      %88 = arith.select %87, %77, %85 : vector<4x896xi1>, vector<4x896xf32>
      %cst_24 = arith.constant 0.000000e+00 : f32
      %89 = vector.broadcast %cst_24 : f32 to vector<4x896xf32>
      %90 = arith.select %26, %88, %89 : vector<4x896xi1>, vector<4x896xf32>
      %cst_25 = arith.constant 0.000000e+00 : f32
      %91 = vector.broadcast %cst_25 : f32 to vector<4x896xf32>
      %92 = arith.subf %91, %28 : vector<4x896xf32>
      %93 = math.exp %92 : vector<4x896xf32>
      %cst_26 = arith.constant 1.000000e+00 : f32
      %94 = vector.broadcast %cst_26 : f32 to vector<4x896xf32>
      %95 = arith.addf %94, %93 : vector<4x896xf32>
      %cst_27 = arith.constant 1.000000e+00 : f32
      %96 = vector.broadcast %cst_27 : f32 to vector<4x896xf32>
      %97 = arith.divf %96, %95 : vector<4x896xf32>
      %cst_28 = arith.constant 9.99999974E-5 : f32
      %98 = vector.broadcast %cst_28 : f32 to vector<4x896xf32>
      %99 = arith.addf %97, %98 : vector<4x896xf32>
      %100 = math.log %99 : vector<4x896xf32>
      %cst_29 = arith.constant 1.000000e+00 : f32
      %101 = vector.broadcast %cst_29 : f32 to vector<4x896xf32>
      %102 = arith.subf %101, %97 : vector<4x896xf32>
      %cst_30 = arith.constant 9.99999974E-5 : f32
      %103 = vector.broadcast %cst_30 : f32 to vector<4x896xf32>
      %104 = arith.addf %102, %103 : vector<4x896xf32>
      %105 = math.log %104 : vector<4x896xf32>
      %106 = arith.mulf %30, %100 : vector<4x896xf32>
      %107 = arith.mulf %90, %106 : vector<4x896xf32>
      %cst_31 = arith.constant 1.000000e+00 : f32
      %108 = vector.broadcast %cst_31 : f32 to vector<4x896xf32>
      %109 = arith.subf %108, %30 : vector<4x896xf32>
      %110 = arith.mulf %109, %105 : vector<4x896xf32>
      %111 = arith.mulf %90, %110 : vector<4x896xf32>
      %112 = arith.subf %28, %30 : vector<4x896xf32>
      %113 = math.absf %112 : vector<4x896xf32>
      %cst_32 = arith.constant 1.000000e+00 : f32
      %114 = vector.broadcast %cst_32 : f32 to vector<4x896xf32>
      %115 = arith.cmpf olt, %113, %114 : vector<4x896xf32>
      %cst_33 = arith.constant 5.000000e-01 : f32
      %116 = vector.broadcast %cst_33 : f32 to vector<4x896xf32>
      %117 = arith.mulf %116, %113 : vector<4x896xf32>
      %118 = arith.mulf %117, %113 : vector<4x896xf32>
      %119 = arith.select %115, %118, %113 : vector<4x896xi1>, vector<4x896xf32>
      %cst_34 = arith.constant 0.000000e+00 : f32
      %120 = vector.broadcast %cst_34 : f32 to vector<4x1xf32>
      %121 = vector.extract_strided_slice %119 {offsets = [0, 1], sizes = [4, 895], strides = [1, 1]} : vector<4x896xf32> to vector<4x895xf32>
      %122 = tpu.concatenate %121, %120 in 1 : vector<4x895xf32>, vector<4x1xf32> -> vector<4x896xf32>
      %123 = arith.addf %119, %122 : vector<4x896xf32>
      %cst_35 = arith.constant 0.000000e+00 : f32
      %124 = vector.broadcast %cst_35 : f32 to vector<4x2xf32>
      %125 = vector.extract_strided_slice %123 {offsets = [0, 2], sizes = [4, 894], strides = [1, 1]} : vector<4x896xf32> to vector<4x894xf32>
      %126 = tpu.concatenate %125, %124 in 1 : vector<4x894xf32>, vector<4x2xf32> -> vector<4x896xf32>
      %127 = arith.addf %123, %126 : vector<4x896xf32>
      %cst_36 = arith.constant 0.000000e+00 : f32
      %128 = vector.broadcast %cst_36 : f32 to vector<4x2xf32>
      %129 = vector.extract_strided_slice %30 {offsets = [0, 2], sizes = [4, 894], strides = [1, 1]} : vector<4x896xf32> to vector<4x894xf32>
      %130 = tpu.concatenate %129, %128 in 1 : vector<4x894xf32>, vector<4x2xf32> -> vector<4x896xf32>
      %131 = arith.subf %30, %130 : vector<4x896xf32>
      %132 = arith.mulf %131, %131 : vector<4x896xf32>
      %cst_37 = arith.constant 0.000000e+00 : f32
      %133 = vector.broadcast %cst_37 : f32 to vector<4x1xf32>
      %134 = vector.extract_strided_slice %132 {offsets = [0, 1], sizes = [4, 895], strides = [1, 1]} : vector<4x896xf32> to vector<4x895xf32>
      %135 = tpu.concatenate %134, %133 in 1 : vector<4x895xf32>, vector<4x1xf32> -> vector<4x896xf32>
      %136 = arith.addf %132, %135 : vector<4x896xf32>
      %137 = math.sqrt %136 : vector<4x896xf32>
      %cst_38 = arith.constant 4.000000e+00 : f32
      %138 = vector.broadcast %cst_38 : f32 to vector<4x896xf32>
      %139 = arith.mulf %137, %138 : vector<4x896xf32>
      %cst_39 = arith.constant 9.99999974E-5 : f32
      %140 = vector.broadcast %cst_39 : f32 to vector<4x896xf32>
      %141 = arith.addf %139, %140 : vector<4x896xf32>
      %142 = vector.broadcast %70 : vector<1x896xf32> to vector<4x896xf32>
      %143 = arith.mulf %142, %80 : vector<4x896xf32>
      %cst_40 = arith.constant 2.000000e+00 : f32
      %144 = vector.broadcast %cst_40 : f32 to vector<4x896xf32>
      %145 = arith.subf %127, %144 : vector<4x896xf32>
      %146 = arith.mulf %143, %145 : vector<4x896xf32>
      %147 = arith.divf %146, %141 : vector<4x896xf32>
      %148 = vector.broadcast %59 : vector<1x896xf32> to vector<4x896xf32>
      %149 = arith.mulf %30, %148 : vector<4x896xf32>
      %150 = vector.broadcast %66 : vector<1x896xf32> to vector<4x896xf32>
      %151 = arith.mulf %80, %150 : vector<4x896xf32>
      %152 = arith.addf %149, %151 : vector<4x896xf32>
      %c0_41 = arith.constant 0 : index
      %c0_42 = arith.constant 0 : index
      %c0_43 = arith.constant 0 : index
      %153 = vector.load %arg4[%c0_41, %c0_42, %c0_43] : memref<1x4x896xf32, #tpu.memory_space<vmem>>, vector<1x1x896xf32>
      %154 = vector.shape_cast %153 : vector<1x1x896xf32> to vector<1x896xf32>
      %cst_44 = arith.constant dense<0.000000e+00> : vector<896xf32>
      %155 = vector.multi_reduction <add>, %152, %cst_44 [0] : vector<4x896xf32> to vector<896xf32>
      %156 = vector.shape_cast %155 : vector<896xf32> to vector<1x896xf32>
      %157 = arith.addf %154, %156 : vector<1x896xf32>
      %c0_45 = arith.constant 0 : index
      %c0_46 = arith.constant 0 : index
      %c0_47 = arith.constant 0 : index
      %158 = vector.load %arg4[%c0_45, %c0_46, %c0_47] : memref<1x4x896xf32, #tpu.memory_space<vmem>>, vector<1x1x896xf32>
      %159 = vector.shape_cast %158 : vector<1x1x896xf32> to vector<1x896xf32>
      %160 = vector.shape_cast %157 : vector<1x896xf32> to vector<1x1x896xf32>
      tpu.vector_store %arg4[%c0_45, %c0_46, %c0_47], %160 {strides = array<i32>} : memref<1x4x896xf32, #tpu.memory_space<vmem>>, vector<1x1x896xf32>,
      %c0_48 = arith.constant 0 : index
      %c1 = arith.constant 1 : index
      %c0_49 = arith.constant 0 : index
      %161 = vector.load %arg4[%c0_48, %c1, %c0_49] : memref<1x4x896xf32, #tpu.memory_space<vmem>>, vector<1x1x896xf32>
      %162 = vector.shape_cast %161 : vector<1x1x896xf32> to vector<1x896xf32>
      %cst_50 = arith.constant dense<0.000000e+00> : vector<896xf32>
      %163 = vector.multi_reduction <add>, %107, %cst_50 [0] : vector<4x896xf32> to vector<896xf32>
      %164 = vector.shape_cast %163 : vector<896xf32> to vector<1x896xf32>
      %165 = arith.addf %162, %164 : vector<1x896xf32>
      %c0_51 = arith.constant 0 : index
      %c1_52 = arith.constant 1 : index
      %c0_53 = arith.constant 0 : index
      %166 = vector.load %arg4[%c0_51, %c1_52, %c0_53] : memref<1x4x896xf32, #tpu.memory_space<vmem>>, vector<1x1x896xf32>
      %167 = vector.shape_cast %166 : vector<1x1x896xf32> to vector<1x896xf32>
      %168 = vector.shape_cast %165 : vector<1x896xf32> to vector<1x1x896xf32>
      tpu.vector_store %arg4[%c0_51, %c1_52, %c0_53], %168 {strides = array<i32>} : memref<1x4x896xf32, #tpu.memory_space<vmem>>, vector<1x1x896xf32>,
      %c0_54 = arith.constant 0 : index
      %c2 = arith.constant 2 : index
      %c0_55 = arith.constant 0 : index
      %169 = vector.load %arg4[%c0_54, %c2, %c0_55] : memref<1x4x896xf32, #tpu.memory_space<vmem>>, vector<1x1x896xf32>
      %170 = vector.shape_cast %169 : vector<1x1x896xf32> to vector<1x896xf32>
      %cst_56 = arith.constant dense<0.000000e+00> : vector<896xf32>
      %171 = vector.multi_reduction <add>, %111, %cst_56 [0] : vector<4x896xf32> to vector<896xf32>
      %172 = vector.shape_cast %171 : vector<896xf32> to vector<1x896xf32>
      %173 = arith.addf %170, %172 : vector<1x896xf32>
      %c0_57 = arith.constant 0 : index
      %c2_58 = arith.constant 2 : index
      %c0_59 = arith.constant 0 : index
      %174 = vector.load %arg4[%c0_57, %c2_58, %c0_59] : memref<1x4x896xf32, #tpu.memory_space<vmem>>, vector<1x1x896xf32>
      %175 = vector.shape_cast %174 : vector<1x1x896xf32> to vector<1x896xf32>
      %176 = vector.shape_cast %173 : vector<1x896xf32> to vector<1x1x896xf32>
      tpu.vector_store %arg4[%c0_57, %c2_58, %c0_59], %176 {strides = array<i32>} : memref<1x4x896xf32, #tpu.memory_space<vmem>>, vector<1x1x896xf32>,
      %c0_60 = arith.constant 0 : index
      %c3 = arith.constant 3 : index
      %c0_61 = arith.constant 0 : index
      %177 = vector.load %arg4[%c0_60, %c3, %c0_61] : memref<1x4x896xf32, #tpu.memory_space<vmem>>, vector<1x1x896xf32>
      %178 = vector.shape_cast %177 : vector<1x1x896xf32> to vector<1x896xf32>
      %cst_62 = arith.constant dense<0.000000e+00> : vector<896xf32>
      %179 = vector.multi_reduction <add>, %147, %cst_62 [0] : vector<4x896xf32> to vector<896xf32>
      %180 = vector.shape_cast %179 : vector<896xf32> to vector<1x896xf32>
      %181 = arith.addf %178, %180 : vector<1x896xf32>
      %c0_63 = arith.constant 0 : index
      %c3_64 = arith.constant 3 : index
      %c0_65 = arith.constant 0 : index
      %182 = vector.load %arg4[%c0_63, %c3_64, %c0_65] : memref<1x4x896xf32, #tpu.memory_space<vmem>>, vector<1x1x896xf32>
      %183 = vector.shape_cast %182 : vector<1x1x896xf32> to vector<1x896xf32>
      %184 = vector.shape_cast %181 : vector<1x896xf32> to vector<1x1x896xf32>
      tpu.vector_store %arg4[%c0_63, %c3_64, %c0_65], %184 {strides = array<i32>} : memref<1x4x896xf32, #tpu.memory_space<vmem>>, vector<1x1x896xf32>,
    } else {
    }
    return
  }
  func.func @transform_0(%arg0: i32, %arg1: i32) -> (i32, i32) {
    %c1_i32 = arith.constant 1 : i32
    %0 = arith.muli %arg0, %c1_i32 : i32
    %1 = arith.addi %0, %arg1 : i32
    %c0_i32 = arith.constant 0 : i32
    %2 = arith.minsi %1, %c0_i32 : i32
    %c0_i32_0 = arith.constant 0 : i32
    %c0_i32_1 = arith.constant 0 : i32
    return %2, %c0_i32_0 : i32, i32
  }
  func.func @transform_1(%arg0: i32, %arg1: i32) -> (i32, i32) {
    %c1_i32 = arith.constant 1 : i32
    %0 = arith.muli %arg0, %c1_i32 : i32
    %1 = arith.addi %0, %arg1 : i32
    %c0_i32 = arith.constant 0 : i32
    %2 = arith.minsi %1, %c0_i32 : i32
    %c0_i32_0 = arith.constant 0 : i32
    %c0_i32_1 = arith.constant 0 : i32
    return %2, %c0_i32_0 : i32, i32
  }
  func.func @transform_2(%arg0: i32, %arg1: i32) -> (i32, i32, i32) {
    %c0_i32 = arith.constant 0 : i32
    %c0_i32_0 = arith.constant 0 : i32
    %c0_i32_1 = arith.constant 0 : i32
    return %arg0, %c0_i32, %c0_i32_0 : i32, i32, i32
  }
}

</mosaic_0001>

<llo_original>
// kernel: quad_loss_pallas.1
$region0: #{quad_loss_pallas.1}
  #allocation0 [shape = 'u32[]', space=smem, size = 0x4, offset = 0x4, fixed_abs, tag = 'smem constant byte address 0x4 - core index']
  #allocation1 [shape = 'u32[144,128]{1,0:T(1,128)}', space=vmem, size = 0x12000, scoped, tag = 'internal scratch']
  %s0 = inlined_call_operand.vmem [shape: f32[4,896], index: 0, kind: input, shape index: {}]
  %s1 = inlined_call_operand.vmem [shape: f32[4,896], index: 1, kind: input, shape index: {}]
  %s2 = inlined_call_operand.vmem [shape: f32[2,4,896], index: 2, kind: output, shape index: {}]
  %s3 = sld [smem:[#allocation0]]
  $region53: #{quad_loss_pallas.1} parent=0
    _
  %s5 = ssub.s32 1, %s3
  %s6 = scalar_select 0, %s5, %s3
  loop: start=0, step=1, limit=4
  $region2: #{quad_loss_pallas.1} parent=0 // loop_pre_header
    _
  $region3: #{quad_loss_pallas.1} parent=0 // loop_header
    %s8 = sphi 0, %s12
    %p9 = scmp.ge.s32.totalorder %s8, 4
    %s15 = sphi 0, %s27
    %s16 = sphi 0, %s23
    %s17 = sphi 0, %s15
    %s18 = sphi 0, %s16
    %s19 = sphi 0, %s17
    %s20 = sphi 0, %s18
    %s36 = sphi 0, %s38
    %s39 = sphi 0, %s36
    %s40 = sphi 0, %s39
    %s56 = sphi 0, %s40
    %s68 = sphi 0, %s70
    %s71 = sphi 0, %s68
    %s72 = sphi 0, %s71
    %s88 = sphi 0, %s72
    %s94 = sphi 0, %s96
    %s97 = sphi 0, %s94
    %s98 = sphi 0, %s97
    %s114 = sphi 0, %s98
  $region4: #{quad_loss_pallas.1} parent=0 // loop_header_branch
    %11 = sbr.rel (%p9) target = $region8
  $region5: #{quad_loss_pallas.1} parent=0 // loop_body
    %s13 = ssub.s32 %s8, 1
    %s14 = ssub.s32 %s8, 2
    %s21 = sadd.s32 1, %s16
    %p22 = scmp.ge.s32.totalorder %s21, 1
    %s23 = scalar_select %p22, 0, %s21
    %s24 = sadd.s32 1, %s15
    %s25 = scalar_select %p22, %s24, %s15
    %p26 = scmp.ge.s32.totalorder %s25, 2
    %s27 = scalar_select %p26, 0, %s25
    %s28 = sadd.s32 %s15, %s16
    %p29 = scmp.lt.s32.totalorder %s28, 0
    %s30 = scalar_select %p29, %s28, 0
    %s31 = sadd.s32 %s27, %s23
    %p32 = scmp.lt.s32.totalorder %s31, 0
    %s33 = scalar_select %p32, %s31, 0
    %s34 = ssub.s32 %s30, %s33
    %p35 = scmp.eq.s32.totalorder %s34, 0
    %s37 = sadd.s32 %s36, 1
    %s38 = scalar_select %p35, %s36, %s37
    %p41 = pneg %p35
    %p42 = scmp.eq.s32.totalorder %s8, 1
    %p43 = por %p41, %p42
    %p44 = scmp.ne.s32.totalorder %s36, %s39
    %p45 = scmp.eq.s32.totalorder %s8, 0
    %p46 = por %p44, %p45
    %p47 = scmp.ne.s32.totalorder %s36, %s39
    %p48 = scmp.eq.s32.totalorder %s13, 1
    %p49 = por %p47, %p48
    %p50 = scmp.ne.s32.totalorder %s39, %s40
    %p51 = scmp.eq.s32.totalorder %s13, 0
    %p52 = por %p50, %p51
    %p53 = scmp.ne.s32.totalorder %s39, %s40
    %p54 = scmp.eq.s32.totalorder %s14, 1
    %p55 = por %p53, %p54
    %p57 = scmp.ne.s32.totalorder %s40, %s56
    %p58 = scmp.eq.s32.totalorder %s14, 0
    %p59 = por %p57, %p58
    %s60 = sadd.s32 %s15, %s16
    %p61 = scmp.lt.s32.totalorder %s60, 0
    %s62 = scalar_select %p61, %s60, 0
    %s63 = sadd.s32 %s27, %s23
    %p64 = scmp.lt.s32.totalorder %s63, 0
    %s65 = scalar_select %p64, %s63, 0
    %s66 = ssub.s32 %s62, %s65
    %p67 = scmp.eq.s32.totalorder %s66, 0
    %s69 = sadd.s32 %s68, 1
    %s70 = scalar_select %p67, %s68, %s69
    %p73 = pneg %p67
    %p74 = scmp.eq.s32.totalorder %s8, 1
    %p75 = por %p73, %p74
    %p76 = scmp.ne.s32.totalorder %s68, %s71
    %p77 = scmp.eq.s32.totalorder %s8, 0
    %p78 = por %p76, %p77
    %p79 = scmp.ne.s32.totalorder %s68, %s71
    %p80 = scmp.eq.s32.totalorder %s13, 1
    %p81 = por %p79, %p80
    %p82 = scmp.ne.s32.totalorder %s71, %s72
    %p83 = scmp.eq.s32.totalorder %s13, 0
    %p84 = por %p82, %p83
    %p85 = scmp.ne.s32.totalorder %s71, %s72
    %p86 = scmp.eq.s32.totalorder %s14, 1
    %p87 = por %p85, %p86
    %p89 = scmp.ne.s32.totalorder %s72, %s88
    %p90 = scmp.eq.s32.totalorder %s14, 0
    %p91 = por %p89, %p90
    %s92 = ssub.s32 %s15, %s27
    %p93 = scmp.eq.s32.totalorder %s92, 0
    %s95 = sadd.s32 %s94, 1
    %s96 = scalar_select %p93, %s94, %s95
    %p99 = pneg %p93
    %p100 = scmp.eq.s32.totalorder %s8, 1
    %p101 = por %p99, %p100
    %p102 = scmp.ne.s32.totalorder %s94, %s97
    %p103 = scmp.eq.s32.totalorder %s8, 0
    %p104 = por %p102, %p103
    %p105 = scmp.ne.s32.totalorder %s94, %s97
    %p106 = scmp.eq.s32.totalorder %s13, 1
    %p107 = por %p105, %p106
    %p108 = scmp.ne.s32.totalorder %s97, %s98
    %p109 = scmp.eq.s32.totalorder %s13, 0
    %p110 = por %p108, %p109
    %p111 = scmp.ne.s32.totalorder %s97, %s98
    %p112 = scmp.eq.s32.totalorder %s14, 1
    %p113 = por %p111, %p112
    %p115 = scmp.ne.s32.totalorder %s98, %s114
    %p116 = scmp.eq.s32.totalorder %s14, 0
    %p117 = por %p115, %p116
    %p118 = scmp.le.s32.totalorder 1, %s8
    %p119 = scmp.lt.s32.totalorder %s8, 3
    %p120 = pnand %p118, %p119
    %p121 = pneg %p120
    // Predicated region
    $region9: #{quad_loss_pallas.1} parent=5 // pred_check
      _
    $region10: #{quad_loss_pallas.1} parent=5 // pred_check_branch
      %123 = sbr.rel (%p120) target = $region12
    $region11: #{quad_loss_pallas.1} parent=5 // pred_region
      %s124 = ssub.s32 %s8, 1
    $region12: #{quad_loss_pallas.1} parent=5 // pred_fallthru
      _
    %p125 = scmp.lt.s32.totalorder %s8, 2
    // Predicated region
    $region13: #{quad_loss_pallas.1} parent=5 // pred_check
      %p126 = pneg %p125
    $region14: #{quad_loss_pallas.1} parent=5 // pred_check_branch
      %128 = sbr.rel (%p126) target = $region16
    $region15: #{quad_loss_pallas.1} parent=5 // pred_region
      // Predicated region
      $region17: #{quad_loss_pallas.1} parent=15 // pred_check
        %p129 = pneg %p46
      $region18: #{quad_loss_pallas.1} parent=15 // pred_check_branch
        %131 = sbr.rel (%p129) target = $region20
      $region19: #{quad_loss_pallas.1} parent=15 // pred_region
        %s132 = sadd.s32 %s15, %s16
        %p133 = scmp.lt.s32.totalorder %s132, 0
        %s134 = scalar_select %p133, %s132, 0
        %p135 = scmp.lt.s32.totalorder %s134, 0
        %s136 = scalar_select %p135, %s134, 0
        %s137 = smul.addr %s136, 7
        %s138 = smul.addr %s137, 4
        %s139 = scalar_lea.vmem %s0, %s138
        %s140 = sadd.s32 %s15, %s16
        %p141 = scmp.lt.s32.totalorder %s140, 0
        %s142 = scalar_select %p141, %s140, 0
      $region20: #{quad_loss_pallas.1} parent=15 // pred_fallthru
        _
      // Predicated region
      $region21: #{quad_loss_pallas.1} parent=15 // pred_check
        %p143 = pneg %p78
      $region22: #{quad_loss_pallas.1} parent=15 // pred_check_branch
        %145 = sbr.rel (%p143) target = $region24
      $region23: #{quad_loss_pallas.1} parent=15 // pred_region
        %s146 = sadd.s32 %s15, %s16
        %p147 = scmp.lt.s32.totalorder %s146, 0
        %s148 = scalar_select %p147, %s146, 0
        %p149 = scmp.lt.s32.totalorder %s148, 0
        %s150 = scalar_select %p149, %s148, 0
        %s151 = smul.addr %s150, 7
        %s152 = smul.addr %s151, 4
        %s153 = scalar_lea.vmem %s1, %s152
        %s154 = sadd.s32 %s15, %s16
        %p155 = scmp.lt.s32.totalorder %s154, 0
        %s156 = scalar_select %p155, %s154, 0
      $region24: #{quad_loss_pallas.1} parent=15 // pred_fallthru
        _
    $region16: #{quad_loss_pallas.1} parent=5 // pred_fallthru
      _
    %p157 = scmp.le.s32.totalorder 1, %s8
    %p158 = scmp.lt.s32.totalorder %s8, 3
    %p159 = pnand %p157, %p158
    %p160 = pneg %p159
    // Predicated region
    $region25: #{quad_loss_pallas.1} parent=5 // pred_check
      _
    $region26: #{quad_loss_pallas.1} parent=5 // pred_check_branch
      %162 = sbr.rel (%p159) target = $region28
    $region27: #{quad_loss_pallas.1} parent=5 // pred_region
      %s163 = ssub.s32 %s8, 1
      %s164 = sadd.s32 %s17, %s18
      %p165 = scmp.lt.s32.totalorder %s164, 0
      %s166 = scalar_select %p165, %s164, 0
      %p167 = scmp.lt.s32.totalorder %s166, 0
      %s168 = scalar_select %p167, %s166, 0
      %s169 = smul.addr %s168, 7
      %s170 = smul.addr %s169, 4
      %s171 = scalar_lea.vmem %s0, %s170
      %p172 = pneg %p52
      %p173 = pneg %p49
      %s174 = sadd.s32 %s17, %s18
      %p175 = scmp.lt.s32.totalorder %s174, 0
      %s176 = scalar_select %p175, %s174, 0
      %p177 = scmp.lt.s32.totalorder %s176, 0
      %s178 = scalar_select %p177, %s176, 0
      %s179 = smul.addr %s178, 7
      %s180 = smul.addr %s179, 4
      %s181 = scalar_lea.vmem %s1, %s180
      %p182 = pneg %p84
      %p183 = pneg %p81
      %p184 = pneg %p110
      %p185 = pneg %p107
      %p186 = scmp.lt.s32.totalorder %s17, 1
      %s187 = scalar_select %p186, %s17, 1
      %s188 = smul.addr %s187, 7
      %s189 = smul.addr %s188, 4
      %s190 = scalar_lea.vmem %s2, %s189
      %s191 = sadd.s32 %s17, %s18
      %p192 = scmp.lt.s32.totalorder %s191, 0
      %s193 = scalar_select %p192, %s191, 0
      %p194 = scmp.lt.s32.totalorder %s193, 0
      %s195 = scalar_select %p194, %s193, 0
      %s196 = smul.addr %s195, 7
      %s197 = smul.addr %s196, 4
      %s198 = scalar_lea.vmem %s0, %s197
      %s199 = sadd.s32 %s17, %s18
      %p200 = scmp.lt.s32.totalorder %s199, 0
      %s201 = scalar_select %p200, %s199, 0
      %s202 = sadd.s32 %s17, %s18
      %p203 = scmp.lt.s32.totalorder %s202, 0
      %s204 = scalar_select %p203, %s202, 0
      %p205 = scmp.lt.s32.totalorder %s204, 0
      %s206 = scalar_select %p205, %s204, 0
      %s207 = smul.addr %s206, 7
      %s208 = smul.addr %s207, 4
      %s209 = scalar_lea.vmem %s1, %s208
      %s210 = sadd.s32 %s17, %s18
      %p211 = scmp.lt.s32.totalorder %s210, 0
      %s212 = scalar_select %p211, %s210, 0
      %p213 = scmp.lt.s32.totalorder %s17, 1
      %s214 = scalar_select %p213, %s17, 1
      %s215 = smul.addr %s214, 7
      %s216 = smul.addr %s215, 4
      %s217 = scalar_lea.vmem %s2, %s216
      %p218 = scmp.eq.s32.totalorder %s18, 0
      // Predicated region
      $region29: #{quad_loss_pallas.1} parent=27 // pred_check
        %p219 = pneg %p218
      $region30: #{quad_loss_pallas.1} parent=27 // pred_check_branch
        %221 = sbr.rel (%p219) target = $region32
      $region31: #{quad_loss_pallas.1} parent=27 // pred_region
        %222 = vst [vmem:[%s217] sm:$0xff] 0.0
        %223 = vst [vmem:[%s217 + $0x8] sm:$0xff] 0.0
        %224 = vst [vmem:[%s217 + $0x10] sm:$0xff] 0.0
        %225 = vst [vmem:[%s217 + $0x18] sm:$0xf] 0.0
      $region32: #{quad_loss_pallas.1} parent=27 // pred_fallthru
        _
      %v226 = vld [vmem:[%s198] sm:$0xff]
      %v227 = vld [vmem:[%s198 + $0x8] sm:$0xff]
      %v228 = vld [vmem:[%s198 + $0x10] sm:$0xff]
      %v229 = vld [vmem:[%s198 + $0x18] sm:$0xf]
      %v230 = vld [vmem:[%s209] sm:$0xff]
      %v231 = vld [vmem:[%s209 + $0x8] sm:$0xff]
      %v232 = vld [vmem:[%s209 + $0x10] sm:$0xff]
      %v233 = vld [vmem:[%s209 + $0x18] sm:$0xf]
      %s234 = sadd.s32 %s17, %s18
      %s235 = smul.u32 %s234, 4
      %s236 = sadd.s32 %s235, 4
      %s237 = smul.u32 %s236, 128
      %p238 = scmp.le.s32.totalorder %s237, 512
      // Predicated region
      $region33: #{quad_loss_pallas.1} parent=27 // pred_check
        %p239 = pneg %p238
      $region34: #{quad_loss_pallas.1} parent=27 // pred_check_branch
        %241 = sbr.rel (%p239) target = $region36
      $region35: #{quad_loss_pallas.1} parent=27 // pred_region
        %v242 = vlaneseq
        %v243 = vand.u32 %v242, 127
        %v244 = vadd.s32 %v243, 128
        %v245 = vadd.s32 %v243, 256
        %v246 = vadd.s32 %v243, 384
        %v247 = vadd.s32 %v243, 512
        %v248 = vadd.s32 %v243, 640
        %v249 = vadd.s32 %v243, 768
        %vm250 = vcmp.lt.s32.totalorder %v243, 0
        %v251 = vsub.s32 0, %v243
        %v252 = vsel %vm250, %v251, %v243
        %v253 = vmul.u32.u64.compose %v252, 2454267026
        %v254 = vextract.low.u32 %v253
        %v255 = vextract.high.u32 %v253
        %vm256 = vc.u32 %v254, 2454267026
        %v257 = vsel %vm256, 1, 0
        %v258 = vadd.s32 %v255, %v257
        %v259 = vshrl.u32 %v258, 2
        %v260 = vmul.u32 %v259, 7
        %v261 = vsub.s32 %v252, %v260
        %v262 = vsub.s32 0, %v261
        %v263 = vsel %vm250, %v262, %v261
        %vm264 = vcmp.lt.s32.totalorder %v244, 0
        %v265 = vsub.s32 0, %v244
        %v266 = vsel %vm264, %v265, %v244
        %v267 = vmul.u32.u64.compose %v266, 2454267026
        %v268 = vextract.low.u32 %v267
        %v269 = vextract.high.u32 %v267
        %vm270 = vc.u32 %v268, 2454267026
        %v271 = vsel %vm270, 1, 0
        %v272 = vadd.s32 %v269, %v271
        %v273 = vshrl.u32 %v272, 2
        %v274 = vmul.u32 %v273, 7
        %v275 = vsub.s32 %v266, %v274
        %v276 = vsub.s32 0, %v275
        %v277 = vsel %vm264, %v276, %v275
        %vm278 = vcmp.lt.s32.totalorder %v245, 0
        %v279 = vsub.s32 0, %v245
        %v280 = vsel %vm278, %v279, %v245
        %v281 = vmul.u32.u64.compose %v280, 2454267026
        %v282 = vextract.low.u32 %v281
        %v283 = vextract.high.u32 %v281
        %vm284 = vc.u32 %v282, 2454267026
        %v285 = vsel %vm284, 1, 0
        %v286 = vadd.s32 %v283, %v285
        %v287 = vshrl.u32 %v286, 2
        %v288 = vmul.u32 %v287, 7
        %v289 = vsub.s32 %v280, %v288
        %v290 = vsub.s32 0, %v289
        %v291 = vsel %vm278, %v290, %v289
        %vm292 = vcmp.lt.s32.totalorder %v246, 0
        %v293 = vsub.s32 0, %v246
        %v294 = vsel %vm292, %v293, %v246
        %v295 = vmul.u32.u64.compose %v294, 2454267026
        %v296 = vextract.low.u32 %v295
        %v297 = vextract.high.u32 %v295
        %vm298 = vc.u32 %v296, 2454267026
        %v299 = vsel %vm298, 1, 0
        %v300 = vadd.s32 %v297, %v299
        %v301 = vshrl.u32 %v300, 2
        %v302 = vmul.u32 %v301, 7
        %v303 = vsub.s32 %v294, %v302
        %v304 = vsub.s32 0, %v303
        %v305 = vsel %vm292, %v304, %v303
        %vm306 = vcmp.lt.s32.totalorder %v247, 0
        %v307 = vsub.s32 0, %v247
        %v308 = vsel %vm306, %v307, %v247
        %v309 = vmul.u32.u64.compose %v308, 2454267026
        %v310 = vextract.low.u32 %v309
        %v311 = vextract.high.u32 %v309
        %vm312 = vc.u32 %v310, 2454267026
        %v313 = vsel %vm312, 1, 0
        %v314 = vadd.s32 %v311, %v313
        %v315 = vshrl.u32 %v314, 2
        %v316 = vmul.u32 %v315, 7
        %v317 = vsub.s32 %v308, %v316
        %v318 = vsub.s32 0, %v317
        %v319 = vsel %vm306, %v318, %v317
        %vm320 = vcmp.lt.s32.totalorder %v248, 0
        %v321 = vsub.s32 0, %v248
        %v322 = vsel %vm320, %v321, %v248
        %v323 = vmul.u32.u64.compose %v322, 2454267026
        %v324 = vextract.low.u32 %v323
        %v325 = vextract.high.u32 %v323
        %vm326 = vc.u32 %v324, 2454267026
        %v327 = vsel %vm326, 1, 0
        %v328 = vadd.s32 %v325, %v327
        %v329 = vshrl.u32 %v328, 2
        %v330 = vmul.u32 %v329, 7
        %v331 = vsub.s32 %v322, %v330
        %v332 = vsub.s32 0, %v331
        %v333 = vsel %vm320, %v332, %v331
        %vm334 = vcmp.lt.s32.totalorder %v249, 0
        %v335 = vsub.s32 0, %v249
        %v336 = vsel %vm334, %v335, %v249
        %v337 = vmul.u32.u64.compose %v336, 2454267026
        %v338 = vextract.low.u32 %v337
        %v339 = vextract.high.u32 %v337
        %vm340 = vc.u32 %v338, 2454267026
        %v341 = vsel %vm340, 1, 0
        %v342 = vadd.s32 %v339, %v341
        %v343 = vshrl.u32 %v342, 2
        %v344 = vmul.u32 %v343, 7
        %v345 = vsub.s32 %v336, %v344
        %v346 = vsub.s32 0, %v345
        %v347 = vsel %vm334, %v346, %v345
        %vm348 = vcmp.ne.s32.totalorder %v263, 0
        %vm349 = vcmp.ne.s32.totalorder %v277, 0
        %vm350 = vcmp.ne.s32.totalorder %v291, 0
        %vm351 = vcmp.ne.s32.totalorder %v305, 0
        %vm352 = vcmp.ne.s32.totalorder %v319, 0
        %vm353 = vcmp.ne.s32.totalorder %v333, 0
        %vm354 = vcmp.ne.s32.totalorder %v347, 0
        %vm355 = vcmp.lt.s32.totalorder %v263, 0
        %vm356 = vcmp.lt.s32.totalorder %v277, 0
        %vm357 = vcmp.lt.s32.totalorder %v291, 0
        %vm358 = vcmp.lt.s32.totalorder %v305, 0
        %vm359 = vcmp.lt.s32.totalorder %v319, 0
        %vm360 = vcmp.lt.s32.totalorder %v333, 0
        %vm361 = vcmp.lt.s32.totalorder %v347, 0
        %vm362 = vmand %vm355, %vm348
        %vm363 = vmand %vm356, %vm349
        %vm364 = vmand %vm357, %vm350
        %vm365 = vmand %vm358, %vm351
        %vm366 = vmand %vm359, %vm352
        %vm367 = vmand %vm360, %vm353
        %vm368 = vmand %vm361, %vm354
        %v369 = vadd.s32 %v263, 7
        %v370 = vadd.s32 %v277, 7
        %v371 = vadd.s32 %v291, 7
        %v372 = vadd.s32 %v305, 7
        %v373 = vadd.s32 %v319, 7
        %v374 = vadd.s32 %v333, 7
        %v375 = vadd.s32 %v347, 7
        %v376 = vsel %vm362, %v369, %v263
        %v377 = vsel %vm363, %v370, %v277
        %v378 = vsel %vm364, %v371, %v291
        %v379 = vsel %vm365, %v372, %v305
        %v380 = vsel %vm366, %v373, %v319
        %v381 = vsel %vm367, %v374, %v333
        %v382 = vsel %vm368, %v375, %v347
        %vm383 = vcmp.eq.s32.totalorder %v376, 1
        %vm384 = vcmp.eq.s32.totalorder %v377, 1
        %vm385 = vcmp.eq.s32.totalorder %v378, 1
        %vm386 = vcmp.eq.s32.totalorder %v379, 1
        %vm387 = vcmp.eq.s32.totalorder %v380, 1
        %vm388 = vcmp.eq.s32.totalorder %v381, 1
        %vm389 = vcmp.eq.s32.totalorder %v382, 1
        %vm390 = vcmp.eq.s32.totalorder %v376, 2
        %vm391 = vcmp.eq.s32.totalorder %v377, 2
        %vm392 = vcmp.eq.s32.totalorder %v378, 2
        %vm393 = vcmp.eq.s32.totalorder %v379, 2
        %vm394 = vcmp.eq.s32.totalorder %v380, 2
        %vm395 = vcmp.eq.s32.totalorder %v381, 2
        %vm396 = vcmp.eq.s32.totalorder %v382, 2
        %vm397 = vcmp.eq.s32.totalorder %v376, 0
        %vm398 = vcmp.eq.s32.totalorder %v377, 0
        %vm399 = vcmp.eq.s32.totalorder %v378, 0
        %vm400 = vcmp.eq.s32.totalorder %v379, 0
        %vm401 = vcmp.eq.s32.totalorder %v380, 0
        %vm402 = vcmp.eq.s32.totalorder %v381, 0
        %vm403 = vcmp.eq.s32.totalorder %v382, 0
        %v404 = vsel %vm397, 1, 0
        %v405 = vsel %vm398, 1, 0
        %v406 = vsel %vm399, 1, 0
        %v407 = vsel %vm400, 1, 0
        %v408 = vsel %vm401, 1, 0
        %v409 = vsel %vm402, 1, 0
        %v410 = vsel %vm403, 1, 0
        %v411 = vcvt.s32.f32 %v404
        %v412 = vcvt.s32.f32 %v405
        %v413 = vcvt.s32.f32 %v406
        %v414 = vcvt.s32.f32 %v407
        %v415 = vcvt.s32.f32 %v408
        %v416 = vcvt.s32.f32 %v409
        %v417 = vcvt.s32.f32 %v410
        %vm418 = vcmp.le.s32.totalorder %v376, 1
        %vm419 = vcmp.le.s32.totalorder %v377, 1
        %vm420 = vcmp.le.s32.totalorder %v378, 1
        %vm421 = vcmp.le.s32.totalorder %v379, 1
        %vm422 = vcmp.le.s32.totalorder %v380, 1
        %vm423 = vcmp.le.s32.totalorder %v381, 1
        %vm424 = vcmp.le.s32.totalorder %v382, 1
        %v425 = vsel %vm418, 1, 0
        %v426 = vsel %vm419, 1, 0
        %v427 = vsel %vm420, 1, 0
        %v428 = vsel %vm421, 1, 0
        %v429 = vsel %vm422, 1, 0
        %v430 = vsel %vm423, 1, 0
        %v431 = vsel %vm424, 1, 0
        %v432 = vcvt.s32.f32 %v425
        %v433 = vcvt.s32.f32 %v426
        %v434 = vcvt.s32.f32 %v427
        %v435 = vcvt.s32.f32 %v428
        %v436 = vcvt.s32.f32 %v429
        %v437 = vcvt.s32.f32 %v430
        %v438 = vcvt.s32.f32 %v431
        %vm439 = vcmp.ge.s32.totalorder %v376, 2
        %vm440 = vcmp.ge.s32.totalorder %v377, 2
        %vm441 = vcmp.ge.s32.totalorder %v378, 2
        %vm442 = vcmp.ge.s32.totalorder %v379, 2
        %vm443 = vcmp.ge.s32.totalorder %v380, 2
        %vm444 = vcmp.ge.s32.totalorder %v381, 2
        %vm445 = vcmp.ge.s32.totalorder %v382, 2
        %vm446 = vcmp.le.s32.totalorder %v376, 3
        %vm447 = vcmp.le.s32.totalorder %v377, 3
        %vm448 = vcmp.le.s32.totalorder %v378, 3
        %vm449 = vcmp.le.s32.totalorder %v379, 3
        %vm450 = vcmp.le.s32.totalorder %v380, 3
        %vm451 = vcmp.le.s32.totalorder %v381, 3
        %vm452 = vcmp.le.s32.totalorder %v382, 3
        %vm453 = vmand %vm439, %vm446
        %vm454 = vmand %vm440, %vm447
        %vm455 = vmand %vm441, %vm448
        %vm456 = vmand %vm442, %vm449
        %vm457 = vmand %vm443, %vm450
        %vm458 = vmand %vm444, %vm451
        %vm459 = vmand %vm445, %vm452
        %v460 = vsel %vm453, 1, 0
        %v461 = vsel %vm454, 1, 0
        %v462 = vsel %vm455, 1, 0
        %v463 = vsel %vm456, 1, 0
        %v464 = vsel %vm457, 1, 0
        %v465 = vsel %vm458, 1, 0
        %v466 = vsel %vm459, 1, 0
        %v467 = vcvt.s32.f32 %v460
        %v468 = vcvt.s32.f32 %v461
        %v469 = vcvt.s32.f32 %v462
        %v470 = vcvt.s32.f32 %v463
        %v471 = vcvt.s32.f32 %v464
        %v472 = vcvt.s32.f32 %v465
        %v473 = vcvt.s32.f32 %v466
        %vm474 = vcmp.eq.s32.totalorder %v376, 3
        %vm475 = vcmp.eq.s32.totalorder %v377, 3
        %vm476 = vcmp.eq.s32.totalorder %v378, 3
        %vm477 = vcmp.eq.s32.totalorder %v379, 3
        %vm478 = vcmp.eq.s32.totalorder %v380, 3
        %vm479 = vcmp.eq.s32.totalorder %v381, 3
        %vm480 = vcmp.eq.s32.totalorder %v382, 3
        %v481 = vsel %vm474, 1, 0
        %v482 = vsel %vm475, 1, 0
        %v483 = vsel %vm476, 1, 0
        %v484 = vsel %vm477, 1, 0
        %v485 = vsel %vm478, 1, 0
        %v486 = vsel %vm479, 1, 0
        %v487 = vsel %vm480, 1, 0
        %v488 = vcvt.s32.f32 %v481
        %v489 = vcvt.s32.f32 %v482
        %v490 = vcvt.s32.f32 %v483
        %v491 = vcvt.s32.f32 %v484
        %v492 = vcvt.s32.f32 %v485
        %v493 = vcvt.s32.f32 %v486
        %v494 = vcvt.s32.f32 %v487
        %vm495 = vcmp.eq.f32.partialorder %v230, 1.0
        %vm496 = vcmp.eq.f32.partialorder %v231, 1.0
        %vm497 = vcmp.eq.f32.partialorder %v232, 1.0
        %vm498 = vcmp.eq.f32.partialorder %v233, 1.0
        %v499 = vsel %vm495, 1, 0
        %v500 = vsel %vm496, 1, 0
        %v501 = vsel %vm497, 1, 0
        %v502 = vsel %vm498, 1, 0
        %v503 = vcvt.s32.f32 %v499
        %v504 = vcvt.s32.f32 %v500
        %v505 = vcvt.s32.f32 %v501
        %v506 = vcvt.s32.f32 %v502
        %v511 = vcombine.high %v503, %v503
        %v512 = vcombine.high %v504, %v504
        %v513 = vcombine.high %v505, %v505
        %514 = vrot.lane.b32.xlu0 %v503, 1
        %v515 = vpop.permute.xlu0 %514
        %516 = vrot.lane.b32.xlu0 %v511, 1
        %v517 = vpop.permute.xlu0 %516
        %518 = vrot.lane.b32.xlu0 %v504, 1
        %v519 = vpop.permute.xlu0 %518
        %520 = vrot.lane.b32.xlu0 %v512, 1
        %v521 = vpop.permute.xlu0 %520
        %522 = vrot.lane.b32.xlu0 %v505, 1
        %v523 = vpop.permute.xlu0 %522
        %524 = vrot.lane.b32.xlu0 %v513, 1
        %v525 = vpop.permute.xlu0 %524
        %526 = vrot.lane.b32.xlu0 %v506, 1
        %v527 = vpop.permute.xlu0 %526
        %vm528 = vcmask 7168
        %v529 = vsel %vm528, %v515, %v517
        %v530 = vsel %vm528, %v517, %v519
        %v531 = vsel %vm528, %v519, %v521
        %v532 = vsel %vm528, %v521, %v523
        %v533 = vsel %vm528, %v523, %v525
        %v534 = vsel %vm528, %v525, %v527
        %v542 = vsel %vm528, 0.0, %v515
        %543 = vrot.lane.b32.xlu0 %v503, 2
        %v544 = vpop.permute.xlu0 %543
        %545 = vrot.lane.b32.xlu0 %v511, 2
        %v546 = vpop.permute.xlu0 %545
        %547 = vrot.lane.b32.xlu0 %v504, 2
        %v548 = vpop.permute.xlu0 %547
        %549 = vrot.lane.b32.xlu0 %v512, 2
        %v550 = vpop.permute.xlu0 %549
        %551 = vrot.lane.b32.xlu0 %v505, 2
        %v552 = vpop.permute.xlu0 %551
        %553 = vrot.lane.b32.xlu0 %v513, 2
        %v554 = vpop.permute.xlu0 %553
        %555 = vrot.lane.b32.xlu0 %v506, 2
        %v556 = vpop.permute.xlu0 %555
        %vm557 = vcmask 15360
        %v558 = vsel %vm557, %v544, %v546
        %v559 = vsel %vm557, %v546, %v548
        %v560 = vsel %vm557, %v548, %v550
        %v561 = vsel %vm557, %v550, %v552
        %v562 = vsel %vm557, %v552, %v554
        %v563 = vsel %vm557, %v554, %v556
        %v571 = vsel %vm557, 0.0, %v544
        %v572 = vsel %vm390, 1, 0
        %v573 = vsel %vm391, 1, 0
        %v574 = vsel %vm392, 1, 0
        %v575 = vsel %vm393, 1, 0
        %v576 = vsel %vm394, 1, 0
        %v577 = vsel %vm395, 1, 0
        %v578 = vsel %vm396, 1, 0
        %vm579 = vcmp.eq.s32.totalorder %v572, 1
        %vm580 = vcmp.eq.s32.totalorder %v573, 1
        %vm581 = vcmp.eq.s32.totalorder %v574, 1
        %vm582 = vcmp.eq.s32.totalorder %v575, 1
        %vm583 = vcmp.eq.s32.totalorder %v576, 1
        %vm584 = vcmp.eq.s32.totalorder %v577, 1
        %vm585 = vcmp.eq.s32.totalorder %v578, 1
        %v586 = vsel %vm579, %v571, %v411
        %v587 = vsel %vm580, %v558, %v412
        %v588 = vsel %vm581, %v559, %v413
        %v589 = vsel %vm582, %v560, %v414
        %v590 = vsel %vm583, %v561, %v415
        %v591 = vsel %vm584, %v562, %v416
        %v592 = vsel %vm585, %v563, %v417
        %v593 = vsel %vm383, 1, 0
        %v594 = vsel %vm384, 1, 0
        %v595 = vsel %vm385, 1, 0
        %v596 = vsel %vm386, 1, 0
        %v597 = vsel %vm387, 1, 0
        %v598 = vsel %vm388, 1, 0
        %v599 = vsel %vm389, 1, 0
        %vm600 = vcmp.eq.s32.totalorder %v593, 1
        %vm601 = vcmp.eq.s32.totalorder %v594, 1
        %vm602 = vcmp.eq.s32.totalorder %v595, 1
        %vm603 = vcmp.eq.s32.totalorder %v596, 1
        %vm604 = vcmp.eq.s32.totalorder %v597, 1
        %vm605 = vcmp.eq.s32.totalorder %v598, 1
        %vm606 = vcmp.eq.s32.totalorder %v599, 1
        %v607 = vsel %vm600, %v542, %v586
        %v608 = vsel %vm601, %v529, %v587
        %v609 = vsel %vm602, %v530, %v588
        %v610 = vsel %vm603, %v531, %v589
        %v611 = vsel %vm604, %v532, %v590
        %v612 = vsel %vm605, %v533, %v591
        %v613 = vsel %vm606, %v534, %v592
        %v614 = vsub.f32 0.0, %v226
        %v615 = vsub.f32 0.0, %v227
        %v616 = vsub.f32 0.0, %v228
        %v617 = vsub.f32 0.0, %v229
        %v618 = vmul.f32 %v614, 1.442695
        %v619 = vpow.pop %v618
        %v620 = vmul.f32 %v615, 1.442695
        %v621 = vpow.pop %v620
        %v622 = vmul.f32 %v616, 1.442695
        %v623 = vpow.pop %v622
        %v624 = vmul.f32 %v617, 1.442695
        %v625 = vpow.pop %v624
        %v626 = vadd.f32 %v619, 1.0
        %v627 = vadd.f32 %v621, 1.0
        %v628 = vadd.f32 %v623, 1.0
        %v629 = vadd.f32 %v625, 1.0
        %v630 = vrcp.pop %v626
        %v631 = vmul.f32 1.0, %v630
        %v632 = vrcp.pop %v627
        %v633 = vmul.f32 1.0, %v632
        %v634 = vrcp.pop %v628
        %v635 = vmul.f32 1.0, %v634
        %v636 = vrcp.pop %v629
        %v637 = vmul.f32 1.0, %v636
        %v638 = vadd.f32 %v631, 0.0001
        %v639 = vadd.f32 %v633, 0.0001
        %v640 = vadd.f32 %v635, 0.0001
        %v641 = vadd.f32 %v637, 0.0001
        %v642 = vlog2.pop %v638
        %v643 = vmul.f32 %v642, 0.6931472
        %v644 = vlog2.pop %v639
        %v645 = vmul.f32 %v644, 0.6931472
        %v646 = vlog2.pop %v640
        %v647 = vmul.f32 %v646, 0.6931472
        %v648 = vlog2.pop %v641
        %v649 = vmul.f32 %v648, 0.6931472
        %v650 = vsub.f32 1.0, %v631
        %v651 = vsub.f32 1.0, %v633
        %v652 = vsub.f32 1.0, %v635
        %v653 = vsub.f32 1.0, %v637
        %v654 = vadd.f32 %v650, 0.0001
        %v655 = vadd.f32 %v651, 0.0001
        %v656 = vadd.f32 %v652, 0.0001
        %v657 = vadd.f32 %v653, 0.0001
        %v658 = vlog2.pop %v654
        %v659 = vmul.f32 %v658, 0.6931472
        %v660 = vlog2.pop %v655
        %v661 = vmul.f32 %v660, 0.6931472
        %v662 = vlog2.pop %v656
        %v663 = vmul.f32 %v662, 0.6931472
        %v664 = vlog2.pop %v657
        %v665 = vmul.f32 %v664, 0.6931472
        %v666 = vmul.f32 %v230, %v643
        %v667 = vmul.f32 %v231, %v645
        %v668 = vmul.f32 %v232, %v647
        %v669 = vmul.f32 %v233, %v649
        %v673 = vcombine.high %v666, %v666
        %v674 = vcombine.high %v667, %v667
        %v675 = vcombine.high %v668, %v668
        %v679 = vmul.f32 %v607, %v666
        %v680 = vmul.f32 %v608, %v673
        %v681 = vmul.f32 %v609, %v667
        %v682 = vmul.f32 %v610, %v674
        %v683 = vmul.f32 %v611, %v668
        %v684 = vmul.f32 %v612, %v675
        %v685 = vmul.f32 %v613, %v669
        %v686 = vsub.f32 1.0, %v230
        %v687 = vsub.f32 1.0, %v231
        %v688 = vsub.f32 1.0, %v232
        %v689 = vsub.f32 1.0, %v233
        %v690 = vmul.f32 %v686, %v659
        %v691 = vmul.f32 %v687, %v661
        %v692 = vmul.f32 %v688, %v663
        %v693 = vmul.f32 %v689, %v665
        %v697 = vcombine.high %v690, %v690
        %v698 = vcombine.high %v691, %v691
        %v699 = vcombine.high %v692, %v692
        %v703 = vmul.f32 %v607, %v690
        %v704 = vmul.f32 %v608, %v697
        %v705 = vmul.f32 %v609, %v691
        %v706 = vmul.f32 %v610, %v698
        %v707 = vmul.f32 %v611, %v692
        %v708 = vmul.f32 %v612, %v699
        %v709 = vmul.f32 %v613, %v693
        %v710 = vsub.f32 %v226, %v230
        %v711 = vsub.f32 %v227, %v231
        %v712 = vsub.f32 %v228, %v232
        %v713 = vsub.f32 %v229, %v233
        %v714 = vand.u32 2147483647, %v710
        %v715 = vand.u32 2147483647, %v711
        %v716 = vand.u32 2147483647, %v712
        %v717 = vand.u32 2147483647, %v713
        %vm718 = vcmp.lt.f32.partialorder %v714, 1.0
        %vm719 = vcmp.lt.f32.partialorder %v715, 1.0
        %vm720 = vcmp.lt.f32.partialorder %v716, 1.0
        %vm721 = vcmp.lt.f32.partialorder %v717, 1.0
        %v722 = vmul.f32 %v714, 0.5
        %v723 = vmul.f32 %v715, 0.5
        %v724 = vmul.f32 %v716, 0.5
        %v725 = vmul.f32 %v717, 0.5
        %v726 = vmul.f32 %v722, %v714
        %v727 = vmul.f32 %v723, %v715
        %v728 = vmul.f32 %v724, %v716
        %v729 = vmul.f32 %v725, %v717
        %v730 = vsel %vm718, %v726, %v714
        %v731 = vsel %vm719, %v727, %v715
        %v732 = vsel %vm720, %v728, %v716
        %v733 = vsel %vm721, %v729, %v717
        %v738 = vcombine.high %v730, %v730
        %v739 = vcombine.high %v731, %v731
        %v740 = vcombine.high %v732, %v732
        %741 = vrot.lane.b32.xlu0 %v730, 127
        %v742 = vpop.permute.xlu0 %741
        %743 = vrot.lane.b32.xlu0 %v738, 127
        %v744 = vpop.permute.xlu0 %743
        %745 = vrot.lane.b32.xlu0 %v731, 127
        %v746 = vpop.permute.xlu0 %745
        %747 = vrot.lane.b32.xlu0 %v739, 127
        %v748 = vpop.permute.xlu0 %747
        %749 = vrot.lane.b32.xlu0 %v732, 127
        %v750 = vpop.permute.xlu0 %749
        %751 = vrot.lane.b32.xlu0 %v740, 127
        %v752 = vpop.permute.xlu0 %751
        %753 = vrot.lane.b32.xlu0 %v733, 127
        %v754 = vpop.permute.xlu0 %753
        %vm755 = vcmask 1039360
        %v756 = vsel %vm755, %v742, %v744
        %v757 = vsel %vm755, %v744, %v746
        %v758 = vsel %vm755, %v746, %v748
        %v759 = vsel %vm755, %v748, %v750
        %v760 = vsel %vm755, %v750, %v752
        %v761 = vsel %vm755, %v752, %v754
        %v763 = vsel %vm755, %v754, 0.0
        %v764 = vcombine.low %v756, %v757
        %v765 = vcombine.low %v758, %v759
        %v766 = vcombine.low %v760, %v761
        %v770 = vadd.f32 %v730, %v764
        %v771 = vadd.f32 %v731, %v765
        %v772 = vadd.f32 %v732, %v766
        %v773 = vadd.f32 %v733, %v763
        %v778 = vcombine.high %v770, %v770
        %v779 = vcombine.high %v771, %v771
        %v780 = vcombine.high %v772, %v772
        %781 = vrot.lane.b32.xlu0 %v770, 126
        %v782 = vpop.permute.xlu0 %781
        %783 = vrot.lane.b32.xlu0 %v778, 126
        %v784 = vpop.permute.xlu0 %783
        %785 = vrot.lane.b32.xlu0 %v771, 126
        %v786 = vpop.permute.xlu0 %785
        %787 = vrot.lane.b32.xlu0 %v779, 126
        %v788 = vpop.permute.xlu0 %787
        %789 = vrot.lane.b32.xlu0 %v772, 126
        %v790 = vpop.permute.xlu0 %789
        %791 = vrot.lane.b32.xlu0 %v780, 126
        %v792 = vpop.permute.xlu0 %791
        %793 = vrot.lane.b32.xlu0 %v773, 126
        %v794 = vpop.permute.xlu0 %793
        %vm795 = vcmask 1031168
        %v796 = vsel %vm795, %v782, %v784
        %v797 = vsel %vm795, %v784, %v786
        %v798 = vsel %vm795, %v786, %v788
        %v799 = vsel %vm795, %v788, %v790
        %v800 = vsel %vm795, %v790, %v792
        %v801 = vsel %vm795, %v792, %v794
        %v803 = vsel %vm795, %v794, 0.0
        %v804 = vcombine.low %v796, %v797
        %v805 = vcombine.low %v798, %v799
        %v806 = vcombine.low %v800, %v801
        %v810 = vadd.f32 %v770, %v804
        %v811 = vadd.f32 %v771, %v805
        %v812 = vadd.f32 %v772, %v806
        %v813 = vadd.f32 %v773, %v803
        %v818 = vcombine.high %v230, %v230
        %v819 = vcombine.high %v231, %v231
        %v820 = vcombine.high %v232, %v232
        %821 = vrot.lane.b32.xlu0 %v230, 126
        %v822 = vpop.permute.xlu0 %821
        %823 = vrot.lane.b32.xlu0 %v818, 126
        %v824 = vpop.permute.xlu0 %823
        %825 = vrot.lane.b32.xlu0 %v231, 126
        %v826 = vpop.permute.xlu0 %825
        %827 = vrot.lane.b32.xlu0 %v819, 126
        %v828 = vpop.permute.xlu0 %827
        %829 = vrot.lane.b32.xlu0 %v232, 126
        %v830 = vpop.permute.xlu0 %829
        %831 = vrot.lane.b32.xlu0 %v820, 126
        %v832 = vpop.permute.xlu0 %831
        %833 = vrot.lane.b32.xlu0 %v233, 126
        %v834 = vpop.permute.xlu0 %833
        %v835 = vsel %vm795, %v822, %v824
        %v836 = vsel %vm795, %v824, %v826
        %v837 = vsel %vm795, %v826, %v828
        %v838 = vsel %vm795, %v828, %v830
        %v839 = vsel %vm795, %v830, %v832
        %v840 = vsel %vm795, %v832, %v834
        %v842 = vsel %vm795, %v834, 0.0
        %v843 = vcombine.low %v835, %v836
        %v844 = vcombine.low %v837, %v838
        %v845 = vcombine.low %v839, %v840
        %v849 = vsub.f32 %v230, %v843
        %v850 = vsub.f32 %v231, %v844
        %v851 = vsub.f32 %v232, %v845
        %v852 = vsub.f32 %v233, %v842
        %v853 = vmul.f32 %v849, %v849
        %v854 = vmul.f32 %v850, %v850
        %v855 = vmul.f32 %v851, %v851
        %v856 = vmul.f32 %v852, %v852
        %v861 = vcombine.high %v853, %v853
        %v862 = vcombine.high %v854, %v854
        %v863 = vcombine.high %v855, %v855
        %864 = vrot.lane.b32.xlu0 %v853, 127
        %v865 = vpop.permute.xlu0 %864
        %866 = vrot.lane.b32.xlu0 %v861, 127
        %v867 = vpop.permute.xlu0 %866
        %868 = vrot.lane.b32.xlu0 %v854, 127
        %v869 = vpop.permute.xlu0 %868
        %870 = vrot.lane.b32.xlu0 %v862, 127
        %v871 = vpop.permute.xlu0 %870
        %872 = vrot.lane.b32.xlu0 %v855, 127
        %v873 = vpop.permute.xlu0 %872
        %874 = vrot.lane.b32.xlu0 %v863, 127
        %v875 = vpop.permute.xlu0 %874
        %876 = vrot.lane.b32.xlu0 %v856, 127
        %v877 = vpop.permute.xlu0 %876
        %v878 = vsel %vm755, %v865, %v867
        %v879 = vsel %vm755, %v867, %v869
        %v880 = vsel %vm755, %v869, %v871
        %v881 = vsel %vm755, %v871, %v873
        %v882 = vsel %vm755, %v873, %v875
        %v883 = vsel %vm755, %v875, %v877
        %v885 = vsel %vm755, %v877, 0.0
        %v886 = vcombine.low %v878, %v879
        %v887 = vcombine.low %v880, %v881
        %v888 = vcombine.low %v882, %v883
        %v892 = vadd.f32 %v853, %v886
        %v893 = vadd.f32 %v854, %v887
        %v894 = vadd.f32 %v855, %v888
        %v895 = vadd.f32 %v856, %v885
        %v896 = vrsqrt.pop %v892
        %v897 = vmul.f32 %v892, %v896
        %vm898 = vcmp.eq.f32.partialorder %v892, inf
        %v899 = vsel %vm898, %v892, %v897
        %vm900 = vcmp.eq.f32.partialorder %v892, 0.0
        %v901 = vand.u32 %v892, 2147483648
        %v902 = vsel %vm900, %v901, %v899
        %v903 = vrsqrt.pop %v893
        %v904 = vmul.f32 %v893, %v903
        %vm905 = vcmp.eq.f32.partialorder %v893, inf
        %v906 = vsel %vm905, %v893, %v904
        %vm907 = vcmp.eq.f32.partialorder %v893, 0.0
        %v908 = vand.u32 %v893, 2147483648
        %v909 = vsel %vm907, %v908, %v906
        %v910 = vrsqrt.pop %v894
        %v911 = vmul.f32 %v894, %v910
        %vm912 = vcmp.eq.f32.partialorder %v894, inf
        %v913 = vsel %vm912, %v894, %v911
        %vm914 = vcmp.eq.f32.partialorder %v894, 0.0
        %v915 = vand.u32 %v894, 2147483648
        %v916 = vsel %vm914, %v915, %v913
        %v917 = vrsqrt.pop %v895
        %v918 = vmul.f32 %v895, %v917
        %vm919 = vcmp.eq.f32.partialorder %v895, inf
        %v920 = vsel %vm919, %v895, %v918
        %vm921 = vcmp.eq.f32.partialorder %v895, 0.0
        %v922 = vand.u32 %v895, 2147483648
        %v923 = vsel %vm921, %v922, %v920
        %v924 = vmul.f32 %v902, 4.0
        %v925 = vmul.f32 %v909, 4.0
        %v926 = vmul.f32 %v916, 4.0
        %v927 = vmul.f32 %v923, 4.0
        %v928 = vadd.f32 %v924, 0.0001
        %v929 = vadd.f32 %v925, 0.0001
        %v930 = vadd.f32 %v926, 0.0001
        %v931 = vadd.f32 %v927, 0.0001
        %v932 = vmul.f32 %v488, %v571
        %v933 = vmul.f32 %v489, %v558
        %v934 = vmul.f32 %v490, %v559
        %v935 = vmul.f32 %v491, %v560
        %v936 = vmul.f32 %v492, %v561
        %v937 = vmul.f32 %v493, %v562
        %v938 = vmul.f32 %v494, %v563
        %v939 = vsub.f32 %v810, 2.0
        %v940 = vsub.f32 %v811, 2.0
        %v941 = vsub.f32 %v812, 2.0
        %v942 = vsub.f32 %v813, 2.0
        %v946 = vcombine.high %v939, %v939
        %v947 = vcombine.high %v940, %v940
        %v948 = vcombine.high %v941, %v941
        %v952 = vmul.f32 %v932, %v939
        %v953 = vmul.f32 %v933, %v946
        %v954 = vmul.f32 %v934, %v940
        %v955 = vmul.f32 %v935, %v947
        %v956 = vmul.f32 %v936, %v941
        %v957 = vmul.f32 %v937, %v948
        %v958 = vmul.f32 %v938, %v942
        %v962 = vcombine.high %v928, %v928
        %v963 = vcombine.high %v929, %v929
        %v964 = vcombine.high %v930, %v930
        %v968 = vrcp.pop %v928
        %v969 = vmul.f32 %v952, %v968
        %v970 = vrcp.pop %v962
        %v971 = vmul.f32 %v953, %v970
        %v972 = vrcp.pop %v929
        %v973 = vmul.f32 %v954, %v972
        %v974 = vrcp.pop %v963
        %v975 = vmul.f32 %v955, %v974
        %v976 = vrcp.pop %v930
        %v977 = vmul.f32 %v956, %v976
        %v978 = vrcp.pop %v964
        %v979 = vmul.f32 %v957, %v978
        %v980 = vrcp.pop %v931
        %v981 = vmul.f32 %v958, %v980
        %v988 = vcombine.low %v432, %v433
        %v989 = vcombine.low %v434, %v435
        %v990 = vcombine.low %v436, %v437
        %v994 = vmul.f32 %v230, %v988
        %v995 = vmul.f32 %v231, %v989
        %v996 = vmul.f32 %v232, %v990
        %v997 = vmul.f32 %v233, %v438
        %v998 = vmul.f32 %v571, %v467
        %v999 = vmul.f32 %v558, %v468
        %v1000 = vmul.f32 %v559, %v469
        %v1001 = vmul.f32 %v560, %v470
        %v1002 = vmul.f32 %v561, %v471
        %v1003 = vmul.f32 %v562, %v472
        %v1004 = vmul.f32 %v563, %v473
        %v1011 = vcombine.low %v998, %v999
        %v1012 = vcombine.low %v1000, %v1001
        %v1013 = vcombine.low %v1002, %v1003
        %v1017 = vadd.f32 %v994, %v1011
        %v1018 = vadd.f32 %v995, %v1012
        %v1019 = vadd.f32 %v996, %v1013
        %v1020 = vadd.f32 %v997, %v1004
        %v1021 = vld [vmem:[%s217] ss:$4 sm:$0xff]
        %v1025 = vcombine.high %v1017, %v1017
        %v1026 = vcombine.high %v1018, %v1018
        %v1027 = vcombine.high %v1019, %v1019
        %vm1031 = vcmask 1043456
        %v1032 = vsel %vm1031, %v1017, 0.0
        %v1033 = vrot.slane %v1032, 4
        %v1034 = vadd.f32 %v1032, %v1033
        %v1035 = vrot.slane %v1034, 2
        %v1036 = vadd.f32 %v1034, %v1035
        %v1037 = vrot.slane %v1036, 1
        %v1038 = vadd.f32 %v1036, %v1037
        %v1039 = vsel %vm1031, %v1025, 0.0
        %v1040 = vrot.slane %v1039, 4
        %v1041 = vadd.f32 %v1039, %v1040
        %v1042 = vrot.slane %v1041, 2
        %v1043 = vadd.f32 %v1041, %v1042
        %v1044 = vrot.slane %v1043, 1
        %v1045 = vadd.f32 %v1043, %v1044
        %v1046 = vsel %vm1031, %v1018, 0.0
        %v1047 = vrot.slane %v1046, 4
        %v1048 = vadd.f32 %v1046, %v1047
        %v1049 = vrot.slane %v1048, 2
        %v1050 = vadd.f32 %v1048, %v1049
        %v1051 = vrot.slane %v1050, 1
        %v1052 = vadd.f32 %v1050, %v1051
        %v1053 = vsel %vm1031, %v1026, 0.0
        %v1054 = vrot.slane %v1053, 4
        %v1055 = vadd.f32 %v1053, %v1054
        %v1056 = vrot.slane %v1055, 2
        %v1057 = vadd.f32 %v1055, %v1056
        %v1058 = vrot.slane %v1057, 1
        %v1059 = vadd.f32 %v1057, %v1058
        %v1060 = vsel %vm1031, %v1019, 0.0
        %v1061 = vrot.slane %v1060, 4
        %v1062 = vadd.f32 %v1060, %v1061
        %v1063 = vrot.slane %v1062, 2
        %v1064 = vadd.f32 %v1062, %v1063
        %v1065 = vrot.slane %v1064, 1
        %v1066 = vadd.f32 %v1064, %v1065
        %v1067 = vsel %vm1031, %v1027, 0.0
        %v1068 = vrot.slane %v1067, 4
        %v1069 = vadd.f32 %v1067, %v1068
        %v1070 = vrot.slane %v1069, 2
        %v1071 = vadd.f32 %v1069, %v1070
        %v1072 = vrot.slane %v1071, 1
        %v1073 = vadd.f32 %v1071, %v1072
        %v1074 = vsel %vm1031, %v1020, 0.0
        %v1075 = vrot.slane %v1074, 4
        %v1076 = vadd.f32 %v1074, %v1075
        %v1077 = vrot.slane %v1076, 2
        %v1078 = vadd.f32 %v1076, %v1077
        %v1079 = vrot.slane %v1078, 1
        %v1080 = vadd.f32 %v1078, %v1079
        %v1088 = vcombine.low %v1038, %v1045
        %v1089 = vcombine.low %v1052, %v1059
        %v1090 = vcombine.low %v1066, %v1073
        %v1092 = vunpack.c.l.s4 1966171168
        %v1093 = vunpack.c.0.s8 %v1092
        %v1094 = vlaneseq
        %v1095 = vshrl.u32 %v1094, 7
        %v1096 = vsub.s32 %v1093, %v1095
        %v1097 = vrot.slane %v1088, %v1096
        %v1099 = vunpack.c.l.s4 1966171168
        %v1100 = vunpack.c.0.s8 %v1099
        %v1101 = vlaneseq
        %v1102 = vshrl.u32 %v1101, 7
        %v1103 = vsub.s32 %v1100, %v1102
        %v1104 = vrot.slane %v1089, %v1103
        %v1106 = vunpack.c.l.s4 1966171168
        %v1107 = vunpack.c.0.s8 %v1106
        %v1108 = vlaneseq
        %v1109 = vshrl.u32 %v1108, 7
        %v1110 = vsub.s32 %v1107, %v1109
        %v1111 = vrot.slane %v1090, %v1110
        %v1113 = vunpack.c.l.s4 1966171168
        %v1114 = vunpack.c.0.s8 %v1113
        %v1115 = vlaneseq
        %v1116 = vshrl.u32 %v1115, 7
        %v1117 = vsub.s32 %v1114, %v1116
        %v1118 = vrot.slane %v1080, %v1117
        %v1119 = vcombine.low %v1097, %v1104
        %v1120 = vcombine.low %v1111, %v1118
        %v1122 = vunpack.c.l.s4 1966171168
        %v1123 = vunpack.c.0.s8 %v1122
        %v1124 = vlaneseq
        %v1125 = vshrl.u32 %v1124, 7
        %v1126 = vsub.s32 %v1123, %v1125
        %v1127 = vrot.slane %v1119, %v1126
        %v1129 = vunpack.c.l.s4 1966171168
        %v1130 = vunpack.c.0.s8 %v1129
        %v1131 = vlaneseq
        %v1132 = vshrl.u32 %v1131, 7
        %v1133 = vsub.s32 %v1130, %v1132
        %v1134 = vrot.slane %v1120, %v1133
        %v1135 = vcombine.low %v1127, %v1134
        %v1137 = vadd.f32 %v1021, %v1135
        %v1138 = vlaneseq
        %vm1139 = vcmp.ge.s32.totalorder %v1138, 0
        %vm1140 = vcmp.lt.s32.totalorder %v1138, 896
        %vm1141 = vmand %vm1139, %vm1140
        %1142 = vst.msk [vmem:[%s217] ss:$4 sm:$0x7f] %vm1141, %v1137
        %s1143 = scalar_lea.vmem %s217, 1
        %v1144 = vld [vmem:[%s1143] ss:$4 sm:$0xff]
        %v1145 = vsel %vm1031, %v679, 0.0
        %v1146 = vrot.slane %v1145, 4
        %v1147 = vadd.f32 %v1145, %v1146
        %v1148 = vrot.slane %v1147, 2
        %v1149 = vadd.f32 %v1147, %v1148
        %v1150 = vrot.slane %v1149, 1
        %v1151 = vadd.f32 %v1149, %v1150
        %v1152 = vsel %vm1031, %v680, 0.0
        %v1153 = vrot.slane %v1152, 4
        %v1154 = vadd.f32 %v1152, %v1153
        %v1155 = vrot.slane %v1154, 2
        %v1156 = vadd.f32 %v1154, %v1155
        %v1157 = vrot.slane %v1156, 1
        %v1158 = vadd.f32 %v1156, %v1157
        %v1159 = vsel %vm1031, %v681, 0.0
        %v1160 = vrot.slane %v1159, 4
        %v1161 = vadd.f32 %v1159, %v1160
        %v1162 = vrot.slane %v1161, 2
        %v1163 = vadd.f32 %v1161, %v1162
        %v1164 = vrot.slane %v1163, 1
        %v1165 = vadd.f32 %v1163, %v1164
        %v1166 = vsel %vm1031, %v682, 0.0
        %v1167 = vrot.slane %v1166, 4
        %v1168 = vadd.f32 %v1166, %v1167
        %v1169 = vrot.slane %v1168, 2
        %v1170 = vadd.f32 %v1168, %v1169
        %v1171 = vrot.slane %v1170, 1
        %v1172 = vadd.f32 %v1170, %v1171
        %v1173 = vsel %vm1031, %v683, 0.0
        %v1174 = vrot.slane %v1173, 4
        %v1175 = vadd.f32 %v1173, %v1174
        %v1176 = vrot.slane %v1175, 2
        %v1177 = vadd.f32 %v1175, %v1176
        %v1178 = vrot.slane %v1177, 1
        %v1179 = vadd.f32 %v1177, %v1178
        %v1180 = vsel %vm1031, %v684, 0.0
        %v1181 = vrot.slane %v1180, 4
        %v1182 = vadd.f32 %v1180, %v1181
        %v1183 = vrot.slane %v1182, 2
        %v1184 = vadd.f32 %v1182, %v1183
        %v1185 = vrot.slane %v1184, 1
        %v1186 = vadd.f32 %v1184, %v1185
        %v1187 = vsel %vm1031, %v685, 0.0
        %v1188 = vrot.slane %v1187, 4
        %v1189 = vadd.f32 %v1187, %v1188
        %v1190 = vrot.slane %v1189, 2
        %v1191 = vadd.f32 %v1189, %v1190
        %v1192 = vrot.slane %v1191, 1
        %v1193 = vadd.f32 %v1191, %v1192
        %v1201 = vcombine.low %v1151, %v1158
        %v1202 = vcombine.low %v1165, %v1172
        %v1203 = vcombine.low %v1179, %v1186
        %v1205 = vunpack.c.l.s4 1966171168
        %v1206 = vunpack.c.0.s8 %v1205
        %v1207 = vlaneseq
        %v1208 = vshrl.u32 %v1207, 7
        %v1209 = vsub.s32 %v1206, %v1208
        %v1210 = vrot.slane %v1201, %v1209
        %v1212 = vunpack.c.l.s4 1966171168
        %v1213 = vunpack.c.0.s8 %v1212
        %v1214 = vlaneseq
        %v1215 = vshrl.u32 %v1214, 7
        %v1216 = vsub.s32 %v1213, %v1215
        %v1217 = vrot.slane %v1202, %v1216
        %v1219 = vunpack.c.l.s4 1966171168
        %v1220 = vunpack.c.0.s8 %v1219
        %v1221 = vlaneseq
        %v1222 = vshrl.u32 %v1221, 7
        %v1223 = vsub.s32 %v1220, %v1222
        %v1224 = vrot.slane %v1203, %v1223
        %v1226 = vunpack.c.l.s4 1966171168
        %v1227 = vunpack.c.0.s8 %v1226
        %v1228 = vlaneseq
        %v1229 = vshrl.u32 %v1228, 7
        %v1230 = vsub.s32 %v1227, %v1229
        %v1231 = vrot.slane %v1193, %v1230
        %v1232 = vcombine.low %v1210, %v1217
        %v1233 = vcombine.low %v1224, %v1231
        %v1235 = vunpack.c.l.s4 1966171168
        %v1236 = vunpack.c.0.s8 %v1235
        %v1237 = vlaneseq
        %v1238 = vshrl.u32 %v1237, 7
        %v1239 = vsub.s32 %v1236, %v1238
        %v1240 = vrot.slane %v1232, %v1239
        %v1242 = vunpack.c.l.s4 1966171168
        %v1243 = vunpack.c.0.s8 %v1242
        %v1244 = vlaneseq
        %v1245 = vshrl.u32 %v1244, 7
        %v1246 = vsub.s32 %v1243, %v1245
        %v1247 = vrot.slane %v1233, %v1246
        %v1248 = vcombine.low %v1240, %v1247
        %v1250 = vadd.f32 %v1144, %v1248
        %1251 = vst.msk [vmem:[%s1143] ss:$4 sm:$0x7f] %vm1141, %v1250
        %s1252 = scalar_lea.vmem %s217, 2
        %v1253 = vld [vmem:[%s1252] ss:$4 sm:$0xff]
        %v1254 = vsel %vm1031, %v703, 0.0
        %v1255 = vrot.slane %v1254, 4
        %v1256 = vadd.f32 %v1254, %v1255
        %v1257 = vrot.slane %v1256, 2
        %v1258 = vadd.f32 %v1256, %v1257
        %v1259 = vrot.slane %v1258, 1
        %v1260 = vadd.f32 %v1258, %v1259
        %v1261 = vsel %vm1031, %v704, 0.0
        %v1262 = vrot.slane %v1261, 4
        %v1263 = vadd.f32 %v1261, %v1262
        %v1264 = vrot.slane %v1263, 2
        %v1265 = vadd.f32 %v1263, %v1264
        %v1266 = vrot.slane %v1265, 1
        %v1267 = vadd.f32 %v1265, %v1266
        %v1268 = vsel %vm1031, %v705, 0.0
        %v1269 = vrot.slane %v1268, 4
        %v1270 = vadd.f32 %v1268, %v1269
        %v1271 = vrot.slane %v1270, 2
        %v1272 = vadd.f32 %v1270, %v1271
        %v1273 = vrot.slane %v1272, 1
        %v1274 = vadd.f32 %v1272, %v1273
        %v1275 = vsel %vm1031, %v706, 0.0
        %v1276 = vrot.slane %v1275, 4
        %v1277 = vadd.f32 %v1275, %v1276
        %v1278 = vrot.slane %v1277, 2
        %v1279 = vadd.f32 %v1277, %v1278
        %v1280 = vrot.slane %v1279, 1
        %v1281 = vadd.f32 %v1279, %v1280
        %v1282 = vsel %vm1031, %v707, 0.0
        %v1283 = vrot.slane %v1282, 4
        %v1284 = vadd.f32 %v1282, %v1283
        %v1285 = vrot.slane %v1284, 2
        %v1286 = vadd.f32 %v1284, %v1285
        %v1287 = vrot.slane %v1286, 1
        %v1288 = vadd.f32 %v1286, %v1287
        %v1289 = vsel %vm1031, %v708, 0.0
        %v1290 = vrot.slane %v1289, 4
        %v1291 = vadd.f32 %v1289, %v1290
        %v1292 = vrot.slane %v1291, 2
        %v1293 = vadd.f32 %v1291, %v1292
        %v1294 = vrot.slane %v1293, 1
        %v1295 = vadd.f32 %v1293, %v1294
        %v1296 = vsel %vm1031, %v709, 0.0
        %v1297 = vrot.slane %v1296, 4
        %v1298 = vadd.f32 %v1296, %v1297
        %v1299 = vrot.slane %v1298, 2
        %v1300 = vadd.f32 %v1298, %v1299
        %v1301 = vrot.slane %v1300, 1
        %v1302 = vadd.f32 %v1300, %v1301
        %v1310 = vcombine.low %v1260, %v1267
        %v1311 = vcombine.low %v1274, %v1281
        %v1312 = vcombine.low %v1288, %v1295
        %v1314 = vunpack.c.l.s4 1966171168
        %v1315 = vunpack.c.0.s8 %v1314
        %v1316 = vlaneseq
        %v1317 = vshrl.u32 %v1316, 7
        %v1318 = vsub.s32 %v1315, %v1317
        %v1319 = vrot.slane %v1310, %v1318
        %v1321 = vunpack.c.l.s4 1966171168
        %v1322 = vunpack.c.0.s8 %v1321
        %v1323 = vlaneseq
        %v1324 = vshrl.u32 %v1323, 7
        %v1325 = vsub.s32 %v1322, %v1324
        %v1326 = vrot.slane %v1311, %v1325
        %v1328 = vunpack.c.l.s4 1966171168
        %v1329 = vunpack.c.0.s8 %v1328
        %v1330 = vlaneseq
        %v1331 = vshrl.u32 %v1330, 7
        %v1332 = vsub.s32 %v1329, %v1331
        %v1333 = vrot.slane %v1312, %v1332
        %v1335 = vunpack.c.l.s4 1966171168
        %v1336 = vunpack.c.0.s8 %v1335
        %v1337 = vlaneseq
        %v1338 = vshrl.u32 %v1337, 7
        %v1339 = vsub.s32 %v1336, %v1338
        %v1340 = vrot.slane %v1302, %v1339
        %v1341 = vcombine.low %v1319, %v1326
        %v1342 = vcombine.low %v1333, %v1340
        %v1344 = vunpack.c.l.s4 1966171168
        %v1345 = vunpack.c.0.s8 %v1344
        %v1346 = vlaneseq
        %v1347 = vshrl.u32 %v1346, 7
        %v1348 = vsub.s32 %v1345, %v1347
        %v1349 = vrot.slane %v1341, %v1348
        %v1351 = vunpack.c.l.s4 1966171168
        %v1352 = vunpack.c.0.s8 %v1351
        %v1353 = vlaneseq
        %v1354 = vshrl.u32 %v1353, 7
        %v1355 = vsub.s32 %v1352, %v1354
        %v1356 = vrot.slane %v1342, %v1355
        %v1357 = vcombine.low %v1349, %v1356
        %v1359 = vadd.f32 %v1253, %v1357
        %1360 = vst.msk [vmem:[%s1252] ss:$4 sm:$0x7f] %vm1141, %v1359
        %s1361 = scalar_lea.vmem %s217, 3
        %v1362 = vld [vmem:[%s1361] ss:$4 sm:$0xff]
        %v1363 = vsel %vm1031, %v969, 0.0
        %v1364 = vrot.slane %v1363, 4
        %v1365 = vadd.f32 %v1363, %v1364
        %v1366 = vrot.slane %v1365, 2
        %v1367 = vadd.f32 %v1365, %v1366
        %v1368 = vrot.slane %v1367, 1
        %v1369 = vadd.f32 %v1367, %v1368
        %v1370 = vsel %vm1031, %v971, 0.0
        %v1371 = vrot.slane %v1370, 4
        %v1372 = vadd.f32 %v1370, %v1371
        %v1373 = vrot.slane %v1372, 2
        %v1374 = vadd.f32 %v1372, %v1373
        %v1375 = vrot.slane %v1374, 1
        %v1376 = vadd.f32 %v1374, %v1375
        %v1377 = vsel %vm1031, %v973, 0.0
        %v1378 = vrot.slane %v1377, 4
        %v1379 = vadd.f32 %v1377, %v1378
        %v1380 = vrot.slane %v1379, 2
        %v1381 = vadd.f32 %v1379, %v1380
        %v1382 = vrot.slane %v1381, 1
        %v1383 = vadd.f32 %v1381, %v1382
        %v1384 = vsel %vm1031, %v975, 0.0
        %v1385 = vrot.slane %v1384, 4
        %v1386 = vadd.f32 %v1384, %v1385
        %v1387 = vrot.slane %v1386, 2
        %v1388 = vadd.f32 %v1386, %v1387
        %v1389 = vrot.slane %v1388, 1
        %v1390 = vadd.f32 %v1388, %v1389
        %v1391 = vsel %vm1031, %v977, 0.0
        %v1392 = vrot.slane %v1391, 4
        %v1393 = vadd.f32 %v1391, %v1392
        %v1394 = vrot.slane %v1393, 2
        %v1395 = vadd.f32 %v1393, %v1394
        %v1396 = vrot.slane %v1395, 1
        %v1397 = vadd.f32 %v1395, %v1396
        %v1398 = vsel %vm1031, %v979, 0.0
        %v1399 = vrot.slane %v1398, 4
        %v1400 = vadd.f32 %v1398, %v1399
        %v1401 = vrot.slane %v1400, 2
        %v1402 = vadd.f32 %v1400, %v1401
        %v1403 = vrot.slane %v1402, 1
        %v1404 = vadd.f32 %v1402, %v1403
        %v1405 = vsel %vm1031, %v981, 0.0
        %v1406 = vrot.slane %v1405, 4
        %v1407 = vadd.f32 %v1405, %v1406
        %v1408 = vrot.slane %v1407, 2
        %v1409 = vadd.f32 %v1407, %v1408
        %v1410 = vrot.slane %v1409, 1
        %v1411 = vadd.f32 %v1409, %v1410
        %v1419 = vcombine.low %v1369, %v1376
        %v1420 = vcombine.low %v1383, %v1390
        %v1421 = vcombine.low %v1397, %v1404
        %v1423 = vunpack.c.l.s4 1966171168
        %v1424 = vunpack.c.0.s8 %v1423
        %v1425 = vlaneseq
        %v1426 = vshrl.u32 %v1425, 7
        %v1427 = vsub.s32 %v1424, %v1426
        %v1428 = vrot.slane %v1419, %v1427
        %v1430 = vunpack.c.l.s4 1966171168
        %v1431 = vunpack.c.0.s8 %v1430
        %v1432 = vlaneseq
        %v1433 = vshrl.u32 %v1432, 7
        %v1434 = vsub.s32 %v1431, %v1433
        %v1435 = vrot.slane %v1420, %v1434
        %v1437 = vunpack.c.l.s4 1966171168
        %v1438 = vunpack.c.0.s8 %v1437
        %v1439 = vlaneseq
        %v1440 = vshrl.u32 %v1439, 7
        %v1441 = vsub.s32 %v1438, %v1440
        %v1442 = vrot.slane %v1421, %v1441
        %v1444 = vunpack.c.l.s4 1966171168
        %v1445 = vunpack.c.0.s8 %v1444
        %v1446 = vlaneseq
        %v1447 = vshrl.u32 %v1446, 7
        %v1448 = vsub.s32 %v1445, %v1447
        %v1449 = vrot.slane %v1411, %v1448
        %v1450 = vcombine.low %v1428, %v1435
        %v1451 = vcombine.low %v1442, %v1449
        %v1453 = vunpack.c.l.s4 1966171168
        %v1454 = vunpack.c.0.s8 %v1453
        %v1455 = vlaneseq
        %v1456 = vshrl.u32 %v1455, 7
        %v1457 = vsub.s32 %v1454, %v1456
        %v1458 = vrot.slane %v1450, %v1457
        %v1460 = vunpack.c.l.s4 1966171168
        %v1461 = vunpack.c.0.s8 %v1460
        %v1462 = vlaneseq
        %v1463 = vshrl.u32 %v1462, 7
        %v1464 = vsub.s32 %v1461, %v1463
        %v1465 = vrot.slane %v1451, %v1464
        %v1466 = vcombine.low %v1458, %v1465
        %v1468 = vadd.f32 %v1362, %v1466
        %1469 = vst.msk [vmem:[%s1361] ss:$4 sm:$0x7f] %vm1141, %v1468
      $region36: #{quad_loss_pallas.1} parent=27 // pred_fallthru
        _
      %p1470 = scmp.gt.s32.totalorder %s237, 512
      // Predicated region
      $region37: #{quad_loss_pallas.1} parent=27 // pred_check
        %p1471 = pneg %p1470
      $region38: #{quad_loss_pallas.1} parent=27 // pred_check_branch
        %1473 = sbr.rel (%p1471) target = $region40
      $region39: #{quad_loss_pallas.1} parent=27 // pred_region
        %v1474 = vlaneseq
        %v1475 = vshrl.u32 %v1474, 7
        %v1476 = vlaneseq
        %v1477 = vand.u32 %v1476, 127
        %v1478 = vadd.s32 %v1477, 128
        %v1479 = vadd.s32 %v1477, 256
        %v1480 = vadd.s32 %v1477, 384
        %v1481 = vadd.s32 %v1477, 512
        %v1482 = vadd.s32 %v1477, 640
        %v1483 = vadd.s32 %v1477, 768
        %v1484 = vstv %s235
        %v1485 = vadd.s32 %v1484, %v1475
        %v1486 = vmul.u32 %v1485, 128
        %v1487 = vsub.s32 512, %v1486
        %v1488 = vmul.u32 %v1487, 7
        %vm1489 = vcmp.lt.s32.totalorder %v1477, %v1488
        %vm1490 = vcmp.lt.s32.totalorder %v1478, %v1488
        %vm1491 = vcmp.lt.s32.totalorder %v1479, %v1488
        %vm1492 = vcmp.lt.s32.totalorder %v1480, %v1488
        %vm1493 = vcmp.lt.s32.totalorder %v1481, %v1488
        %vm1494 = vcmp.lt.s32.totalorder %v1482, %v1488
        %vm1495 = vcmp.lt.s32.totalorder %v1483, %v1488
        %v1499 = vcombine.high %v226, %v226
        %v1500 = vcombine.high %v227, %v227
        %v1501 = vcombine.high %v228, %v228
        %v1505 = vsel %vm1489, %v226, 0.0
        %v1506 = vsel %vm1490, %v1499, 0.0
        %v1507 = vsel %vm1491, %v227, 0.0
        %v1508 = vsel %vm1492, %v1500, 0.0
        %v1509 = vsel %vm1493, %v228, 0.0
        %v1510 = vsel %vm1494, %v1501, 0.0
        %v1511 = vsel %vm1495, %v229, 0.0
        %v1515 = vcombine.high %v230, %v230
        %v1516 = vcombine.high %v231, %v231
        %v1517 = vcombine.high %v232, %v232
        %v1521 = vsel %vm1489, %v230, 0.0
        %v1522 = vsel %vm1490, %v1515, 0.0
        %v1523 = vsel %vm1491, %v231, 0.0
        %v1524 = vsel %vm1492, %v1516, 0.0
        %v1525 = vsel %vm1493, %v232, 0.0
        %v1526 = vsel %vm1494, %v1517, 0.0
        %v1527 = vsel %vm1495, %v233, 0.0
        %vm1528 = vcmp.lt.s32.totalorder %v1477, 0
        %v1529 = vsub.s32 0, %v1477
        %v1530 = vsel %vm1528, %v1529, %v1477
        %v1531 = vmul.u32.u64.compose %v1530, 2454267026
        %v1532 = vextract.low.u32 %v1531
        %v1533 = vextract.high.u32 %v1531
        %vm1534 = vc.u32 %v1532, 2454267026
        %v1535 = vsel %vm1534, 1, 0
        %v1536 = vadd.s32 %v1533, %v1535
        %v1537 = vshrl.u32 %v1536, 2
        %v1538 = vmul.u32 %v1537, 7
        %v1539 = vsub.s32 %v1530, %v1538
        %v1540 = vsub.s32 0, %v1539
        %v1541 = vsel %vm1528, %v1540, %v1539
        %vm1542 = vcmp.lt.s32.totalorder %v1478, 0
        %v1543 = vsub.s32 0, %v1478
        %v1544 = vsel %vm1542, %v1543, %v1478
        %v1545 = vmul.u32.u64.compose %v1544, 2454267026
        %v1546 = vextract.low.u32 %v1545
        %v1547 = vextract.high.u32 %v1545
        %vm1548 = vc.u32 %v1546, 2454267026
        %v1549 = vsel %vm1548, 1, 0
        %v1550 = vadd.s32 %v1547, %v1549
        %v1551 = vshrl.u32 %v1550, 2
        %v1552 = vmul.u32 %v1551, 7
        %v1553 = vsub.s32 %v1544, %v1552
        %v1554 = vsub.s32 0, %v1553
        %v1555 = vsel %vm1542, %v1554, %v1553
        %vm1556 = vcmp.lt.s32.totalorder %v1479, 0
        %v1557 = vsub.s32 0, %v1479
        %v1558 = vsel %vm1556, %v1557, %v1479
        %v1559 = vmul.u32.u64.compose %v1558, 2454267026
        %v1560 = vextract.low.u32 %v1559
        %v1561 = vextract.high.u32 %v1559
        %vm1562 = vc.u32 %v1560, 2454267026
        %v1563 = vsel %vm1562, 1, 0
        %v1564 = vadd.s32 %v1561, %v1563
        %v1565 = vshrl.u32 %v1564, 2
        %v1566 = vmul.u32 %v1565, 7
        %v1567 = vsub.s32 %v1558, %v1566
        %v1568 = vsub.s32 0, %v1567
        %v1569 = vsel %vm1556, %v1568, %v1567
        %vm1570 = vcmp.lt.s32.totalorder %v1480, 0
        %v1571 = vsub.s32 0, %v1480
        %v1572 = vsel %vm1570, %v1571, %v1480
        %v1573 = vmul.u32.u64.compose %v1572, 2454267026
        %v1574 = vextract.low.u32 %v1573
        %v1575 = vextract.high.u32 %v1573
        %vm1576 = vc.u32 %v1574, 2454267026
        %v1577 = vsel %vm1576, 1, 0
        %v1578 = vadd.s32 %v1575, %v1577
        %v1579 = vshrl.u32 %v1578, 2
        %v1580 = vmul.u32 %v1579, 7
        %v1581 = vsub.s32 %v1572, %v1580
        %v1582 = vsub.s32 0, %v1581
        %v1583 = vsel %vm1570, %v1582, %v1581
        %vm1584 = vcmp.lt.s32.totalorder %v1481, 0
        %v1585 = vsub.s32 0, %v1481
        %v1586 = vsel %vm1584, %v1585, %v1481
        %v1587 = vmul.u32.u64.compose %v1586, 2454267026
        %v1588 = vextract.low.u32 %v1587
        %v1589 = vextract.high.u32 %v1587
        %vm1590 = vc.u32 %v1588, 2454267026
        %v1591 = vsel %vm1590, 1, 0
        %v1592 = vadd.s32 %v1589, %v1591
        %v1593 = vshrl.u32 %v1592, 2
        %v1594 = vmul.u32 %v1593, 7
        %v1595 = vsub.s32 %v1586, %v1594
        %v1596 = vsub.s32 0, %v1595
        %v1597 = vsel %vm1584, %v1596, %v1595
        %vm1598 = vcmp.lt.s32.totalorder %v1482, 0
        %v1599 = vsub.s32 0, %v1482
        %v1600 = vsel %vm1598, %v1599, %v1482
        %v1601 = vmul.u32.u64.compose %v1600, 2454267026
        %v1602 = vextract.low.u32 %v1601
        %v1603 = vextract.high.u32 %v1601
        %vm1604 = vc.u32 %v1602, 2454267026
        %v1605 = vsel %vm1604, 1, 0
        %v1606 = vadd.s32 %v1603, %v1605
        %v1607 = vshrl.u32 %v1606, 2
        %v1608 = vmul.u32 %v1607, 7
        %v1609 = vsub.s32 %v1600, %v1608
        %v1610 = vsub.s32 0, %v1609
        %v1611 = vsel %vm1598, %v1610, %v1609
        %vm1612 = vcmp.lt.s32.totalorder %v1483, 0
        %v1613 = vsub.s32 0, %v1483
        %v1614 = vsel %vm1612, %v1613, %v1483
        %v1615 = vmul.u32.u64.compose %v1614, 2454267026
        %v1616 = vextract.low.u32 %v1615
        %v1617 = vextract.high.u32 %v1615
        %vm1618 = vc.u32 %v1616, 2454267026
        %v1619 = vsel %vm1618, 1, 0
        %v1620 = vadd.s32 %v1617, %v1619
        %v1621 = vshrl.u32 %v1620, 2
        %v1622 = vmul.u32 %v1621, 7
        %v1623 = vsub.s32 %v1614, %v1622
        %v1624 = vsub.s32 0, %v1623
        %v1625 = vsel %vm1612, %v1624, %v1623
        %vm1626 = vcmp.ne.s32.totalorder %v1541, 0
        %vm1627 = vcmp.ne.s32.totalorder %v1555, 0
        %vm1628 = vcmp.ne.s32.totalorder %v1569, 0
        %vm1629 = vcmp.ne.s32.totalorder %v1583, 0
        %vm1630 = vcmp.ne.s32.totalorder %v1597, 0
        %vm1631 = vcmp.ne.s32.totalorder %v1611, 0
        %vm1632 = vcmp.ne.s32.totalorder %v1625, 0
        %vm1633 = vcmp.lt.s32.totalorder %v1541, 0
        %vm1634 = vcmp.lt.s32.totalorder %v1555, 0
        %vm1635 = vcmp.lt.s32.totalorder %v1569, 0
        %vm1636 = vcmp.lt.s32.totalorder %v1583, 0
        %vm1637 = vcmp.lt.s32.totalorder %v1597, 0
        %vm1638 = vcmp.lt.s32.totalorder %v1611, 0
        %vm1639 = vcmp.lt.s32.totalorder %v1625, 0
        %vm1640 = vmand %vm1633, %vm1626
        %vm1641 = vmand %vm1634, %vm1627
        %vm1642 = vmand %vm1635, %vm1628
        %vm1643 = vmand %vm1636, %vm1629
        %vm1644 = vmand %vm1637, %vm1630
        %vm1645 = vmand %vm1638, %vm1631
        %vm1646 = vmand %vm1639, %vm1632
        %v1647 = vadd.s32 %v1541, 7
        %v1648 = vadd.s32 %v1555, 7
        %v1649 = vadd.s32 %v1569, 7
        %v1650 = vadd.s32 %v1583, 7
        %v1651 = vadd.s32 %v1597, 7
        %v1652 = vadd.s32 %v1611, 7
        %v1653 = vadd.s32 %v1625, 7
        %v1654 = vsel %vm1640, %v1647, %v1541
        %v1655 = vsel %vm1641, %v1648, %v1555
        %v1656 = vsel %vm1642, %v1649, %v1569
        %v1657 = vsel %vm1643, %v1650, %v1583
        %v1658 = vsel %vm1644, %v1651, %v1597
        %v1659 = vsel %vm1645, %v1652, %v1611
        %v1660 = vsel %vm1646, %v1653, %v1625
        %vm1661 = vcmp.eq.s32.totalorder %v1654, 1
        %vm1662 = vcmp.eq.s32.totalorder %v1655, 1
        %vm1663 = vcmp.eq.s32.totalorder %v1656, 1
        %vm1664 = vcmp.eq.s32.totalorder %v1657, 1
        %vm1665 = vcmp.eq.s32.totalorder %v1658, 1
        %vm1666 = vcmp.eq.s32.totalorder %v1659, 1
        %vm1667 = vcmp.eq.s32.totalorder %v1660, 1
        %vm1668 = vcmp.eq.s32.totalorder %v1654, 2
        %vm1669 = vcmp.eq.s32.totalorder %v1655, 2
        %vm1670 = vcmp.eq.s32.totalorder %v1656, 2
        %vm1671 = vcmp.eq.s32.totalorder %v1657, 2
        %vm1672 = vcmp.eq.s32.totalorder %v1658, 2
        %vm1673 = vcmp.eq.s32.totalorder %v1659, 2
        %vm1674 = vcmp.eq.s32.totalorder %v1660, 2
        %vm1675 = vcmp.eq.s32.totalorder %v1654, 0
        %vm1676 = vcmp.eq.s32.totalorder %v1655, 0
        %vm1677 = vcmp.eq.s32.totalorder %v1656, 0
        %vm1678 = vcmp.eq.s32.totalorder %v1657, 0
        %vm1679 = vcmp.eq.s32.totalorder %v1658, 0
        %vm1680 = vcmp.eq.s32.totalorder %v1659, 0
        %vm1681 = vcmp.eq.s32.totalorder %v1660, 0
        %v1682 = vsel %vm1675, 1, 0
        %v1683 = vsel %vm1676, 1, 0
        %v1684 = vsel %vm1677, 1, 0
        %v1685 = vsel %vm1678, 1, 0
        %v1686 = vsel %vm1679, 1, 0
        %v1687 = vsel %vm1680, 1, 0
        %v1688 = vsel %vm1681, 1, 0
        %v1689 = vcvt.s32.f32 %v1682
        %v1690 = vcvt.s32.f32 %v1683
        %v1691 = vcvt.s32.f32 %v1684
        %v1692 = vcvt.s32.f32 %v1685
        %v1693 = vcvt.s32.f32 %v1686
        %v1694 = vcvt.s32.f32 %v1687
        %v1695 = vcvt.s32.f32 %v1688
        %vm1696 = vcmp.le.s32.totalorder %v1654, 1
        %vm1697 = vcmp.le.s32.totalorder %v1655, 1
        %vm1698 = vcmp.le.s32.totalorder %v1656, 1
        %vm1699 = vcmp.le.s32.totalorder %v1657, 1
        %vm1700 = vcmp.le.s32.totalorder %v1658, 1
        %vm1701 = vcmp.le.s32.totalorder %v1659, 1
        %vm1702 = vcmp.le.s32.totalorder %v1660, 1
        %v1703 = vsel %vm1696, 1, 0
        %v1704 = vsel %vm1697, 1, 0
        %v1705 = vsel %vm1698, 1, 0
        %v1706 = vsel %vm1699, 1, 0
        %v1707 = vsel %vm1700, 1, 0
        %v1708 = vsel %vm1701, 1, 0
        %v1709 = vsel %vm1702, 1, 0
        %v1710 = vcvt.s32.f32 %v1703
        %v1711 = vcvt.s32.f32 %v1704
        %v1712 = vcvt.s32.f32 %v1705
        %v1713 = vcvt.s32.f32 %v1706
        %v1714 = vcvt.s32.f32 %v1707
        %v1715 = vcvt.s32.f32 %v1708
        %v1716 = vcvt.s32.f32 %v1709
        %vm1717 = vcmp.ge.s32.totalorder %v1654, 2
        %vm1718 = vcmp.ge.s32.totalorder %v1655, 2
        %vm1719 = vcmp.ge.s32.totalorder %v1656, 2
        %vm1720 = vcmp.ge.s32.totalorder %v1657, 2
        %vm1721 = vcmp.ge.s32.totalorder %v1658, 2
        %vm1722 = vcmp.ge.s32.totalorder %v1659, 2
        %vm1723 = vcmp.ge.s32.totalorder %v1660, 2
        %vm1724 = vcmp.le.s32.totalorder %v1654, 3
        %vm1725 = vcmp.le.s32.totalorder %v1655, 3
        %vm1726 = vcmp.le.s32.totalorder %v1656, 3
        %vm1727 = vcmp.le.s32.totalorder %v1657, 3
        %vm1728 = vcmp.le.s32.totalorder %v1658, 3
        %vm1729 = vcmp.le.s32.totalorder %v1659, 3
        %vm1730 = vcmp.le.s32.totalorder %v1660, 3
        %vm1731 = vmand %vm1717, %vm1724
        %vm1732 = vmand %vm1718, %vm1725
        %vm1733 = vmand %vm1719, %vm1726
        %vm1734 = vmand %vm1720, %vm1727
        %vm1735 = vmand %vm1721, %vm1728
        %vm1736 = vmand %vm1722, %vm1729
        %vm1737 = vmand %vm1723, %vm1730
        %v1738 = vsel %vm1731, 1, 0
        %v1739 = vsel %vm1732, 1, 0
        %v1740 = vsel %vm1733, 1, 0
        %v1741 = vsel %vm1734, 1, 0
        %v1742 = vsel %vm1735, 1, 0
        %v1743 = vsel %vm1736, 1, 0
        %v1744 = vsel %vm1737, 1, 0
        %v1745 = vcvt.s32.f32 %v1738
        %v1746 = vcvt.s32.f32 %v1739
        %v1747 = vcvt.s32.f32 %v1740
        %v1748 = vcvt.s32.f32 %v1741
        %v1749 = vcvt.s32.f32 %v1742
        %v1750 = vcvt.s32.f32 %v1743
        %v1751 = vcvt.s32.f32 %v1744
        %vm1752 = vcmp.eq.s32.totalorder %v1654, 3
        %vm1753 = vcmp.eq.s32.totalorder %v1655, 3
        %vm1754 = vcmp.eq.s32.totalorder %v1656, 3
        %vm1755 = vcmp.eq.s32.totalorder %v1657, 3
        %vm1756 = vcmp.eq.s32.totalorder %v1658, 3
        %vm1757 = vcmp.eq.s32.totalorder %v1659, 3
        %vm1758 = vcmp.eq.s32.totalorder %v1660, 3
        %v1759 = vsel %vm1752, 1, 0
        %v1760 = vsel %vm1753, 1, 0
        %v1761 = vsel %vm1754, 1, 0
        %v1762 = vsel %vm1755, 1, 0
        %v1763 = vsel %vm1756, 1, 0
        %v1764 = vsel %vm1757, 1, 0
        %v1765 = vsel %vm1758, 1, 0
        %v1766 = vcvt.s32.f32 %v1759
        %v1767 = vcvt.s32.f32 %v1760
        %v1768 = vcvt.s32.f32 %v1761
        %v1769 = vcvt.s32.f32 %v1762
        %v1770 = vcvt.s32.f32 %v1763
        %v1771 = vcvt.s32.f32 %v1764
        %v1772 = vcvt.s32.f32 %v1765
        %vm1773 = vcmp.eq.f32.partialorder %v1521, 1.0
        %vm1774 = vcmp.eq.f32.partialorder %v1522, 1.0
        %vm1775 = vcmp.eq.f32.partialorder %v1523, 1.0
        %vm1776 = vcmp.eq.f32.partialorder %v1524, 1.0
        %vm1777 = vcmp.eq.f32.partialorder %v1525, 1.0
        %vm1778 = vcmp.eq.f32.partialorder %v1526, 1.0
        %vm1779 = vcmp.eq.f32.partialorder %v1527, 1.0
        %v1780 = vsel %vm1773, 1, 0
        %v1781 = vsel %vm1774, 1, 0
        %v1782 = vsel %vm1775, 1, 0
        %v1783 = vsel %vm1776, 1, 0
        %v1784 = vsel %vm1777, 1, 0
        %v1785 = vsel %vm1778, 1, 0
        %v1786 = vsel %vm1779, 1, 0
        %v1787 = vcvt.s32.f32 %v1780
        %v1788 = vcvt.s32.f32 %v1781
        %v1789 = vcvt.s32.f32 %v1782
        %v1790 = vcvt.s32.f32 %v1783
        %v1791 = vcvt.s32.f32 %v1784
        %v1792 = vcvt.s32.f32 %v1785
        %v1793 = vcvt.s32.f32 %v1786
        %1801 = vrot.lane.b32.xlu0 %v1787, 1
        %v1802 = vpop.permute.xlu0 %1801
        %1803 = vrot.lane.b32.xlu0 %v1788, 1
        %v1804 = vpop.permute.xlu0 %1803
        %1805 = vrot.lane.b32.xlu0 %v1789, 1
        %v1806 = vpop.permute.xlu0 %1805
        %1807 = vrot.lane.b32.xlu0 %v1790, 1
        %v1808 = vpop.permute.xlu0 %1807
        %1809 = vrot.lane.b32.xlu0 %v1791, 1
        %v1810 = vpop.permute.xlu0 %1809
        %1811 = vrot.lane.b32.xlu0 %v1792, 1
        %v1812 = vpop.permute.xlu0 %1811
        %1813 = vrot.lane.b32.xlu0 %v1793, 1
        %v1814 = vpop.permute.xlu0 %1813
        %vm1815 = vcmask 7168
        %v1816 = vsel %vm1815, %v1802, %v1804
        %v1817 = vsel %vm1815, %v1804, %v1806
        %v1818 = vsel %vm1815, %v1806, %v1808
        %v1819 = vsel %vm1815, %v1808, %v1810
        %v1820 = vsel %vm1815, %v1810, %v1812
        %v1821 = vsel %vm1815, %v1812, %v1814
        %v1829 = vsel %vm1815, 0.0, %v1802
        %1830 = vrot.lane.b32.xlu0 %v1787, 2
        %v1831 = vpop.permute.xlu0 %1830
        %1832 = vrot.lane.b32.xlu0 %v1788, 2
        %v1833 = vpop.permute.xlu0 %1832
        %1834 = vrot.lane.b32.xlu0 %v1789, 2
        %v1835 = vpop.permute.xlu0 %1834
        %1836 = vrot.lane.b32.xlu0 %v1790, 2
        %v1837 = vpop.permute.xlu0 %1836
        %1838 = vrot.lane.b32.xlu0 %v1791, 2
        %v1839 = vpop.permute.xlu0 %1838
        %1840 = vrot.lane.b32.xlu0 %v1792, 2
        %v1841 = vpop.permute.xlu0 %1840
        %1842 = vrot.lane.b32.xlu0 %v1793, 2
        %v1843 = vpop.permute.xlu0 %1842
        %vm1844 = vcmask 15360
        %v1845 = vsel %vm1844, %v1831, %v1833
        %v1846 = vsel %vm1844, %v1833, %v1835
        %v1847 = vsel %vm1844, %v1835, %v1837
        %v1848 = vsel %vm1844, %v1837, %v1839
        %v1849 = vsel %vm1844, %v1839, %v1841
        %v1850 = vsel %vm1844, %v1841, %v1843
        %v1858 = vsel %vm1844, 0.0, %v1831
        %v1859 = vsel %vm1668, 1, 0
        %v1860 = vsel %vm1669, 1, 0
        %v1861 = vsel %vm1670, 1, 0
        %v1862 = vsel %vm1671, 1, 0
        %v1863 = vsel %vm1672, 1, 0
        %v1864 = vsel %vm1673, 1, 0
        %v1865 = vsel %vm1674, 1, 0
        %vm1866 = vcmp.eq.s32.totalorder %v1859, 1
        %vm1867 = vcmp.eq.s32.totalorder %v1860, 1
        %vm1868 = vcmp.eq.s32.totalorder %v1861, 1
        %vm1869 = vcmp.eq.s32.totalorder %v1862, 1
        %vm1870 = vcmp.eq.s32.totalorder %v1863, 1
        %vm1871 = vcmp.eq.s32.totalorder %v1864, 1
        %vm1872 = vcmp.eq.s32.totalorder %v1865, 1
        %v1873 = vsel %vm1866, %v1858, %v1689
        %v1874 = vsel %vm1867, %v1845, %v1690
        %v1875 = vsel %vm1868, %v1846, %v1691
        %v1876 = vsel %vm1869, %v1847, %v1692
        %v1877 = vsel %vm1870, %v1848, %v1693
        %v1878 = vsel %vm1871, %v1849, %v1694
        %v1879 = vsel %vm1872, %v1850, %v1695
        %v1880 = vsel %vm1661, 1, 0
        %v1881 = vsel %vm1662, 1, 0
        %v1882 = vsel %vm1663, 1, 0
        %v1883 = vsel %vm1664, 1, 0
        %v1884 = vsel %vm1665, 1, 0
        %v1885 = vsel %vm1666, 1, 0
        %v1886 = vsel %vm1667, 1, 0
        %vm1887 = vcmp.eq.s32.totalorder %v1880, 1
        %vm1888 = vcmp.eq.s32.totalorder %v1881, 1
        %vm1889 = vcmp.eq.s32.totalorder %v1882, 1
        %vm1890 = vcmp.eq.s32.totalorder %v1883, 1
        %vm1891 = vcmp.eq.s32.totalorder %v1884, 1
        %vm1892 = vcmp.eq.s32.totalorder %v1885, 1
        %vm1893 = vcmp.eq.s32.totalorder %v1886, 1
        %v1894 = vsel %vm1887, %v1829, %v1873
        %v1895 = vsel %vm1888, %v1816, %v1874
        %v1896 = vsel %vm1889, %v1817, %v1875
        %v1897 = vsel %vm1890, %v1818, %v1876
        %v1898 = vsel %vm1891, %v1819, %v1877
        %v1899 = vsel %vm1892, %v1820, %v1878
        %v1900 = vsel %vm1893, %v1821, %v1879
        %v1901 = vsel %vm1489, %v1894, 0.0
        %v1902 = vsel %vm1490, %v1895, 0.0
        %v1903 = vsel %vm1491, %v1896, 0.0
        %v1904 = vsel %vm1492, %v1897, 0.0
        %v1905 = vsel %vm1493, %v1898, 0.0
        %v1906 = vsel %vm1494, %v1899, 0.0
        %v1907 = vsel %vm1495, %v1900, 0.0
        %v1908 = vsub.f32 0.0, %v1505
        %v1909 = vsub.f32 0.0, %v1506
        %v1910 = vsub.f32 0.0, %v1507
        %v1911 = vsub.f32 0.0, %v1508
        %v1912 = vsub.f32 0.0, %v1509
        %v1913 = vsub.f32 0.0, %v1510
        %v1914 = vsub.f32 0.0, %v1511
        %v1915 = vmul.f32 %v1908, 1.442695
        %v1916 = vpow.pop %v1915
        %v1917 = vmul.f32 %v1909, 1.442695
        %v1918 = vpow.pop %v1917
        %v1919 = vmul.f32 %v1910, 1.442695
        %v1920 = vpow.pop %v1919
        %v1921 = vmul.f32 %v1911, 1.442695
        %v1922 = vpow.pop %v1921
        %v1923 = vmul.f32 %v1912, 1.442695
        %v1924 = vpow.pop %v1923
        %v1925 = vmul.f32 %v1913, 1.442695
        %v1926 = vpow.pop %v1925
        %v1927 = vmul.f32 %v1914, 1.442695
        %v1928 = vpow.pop %v1927
        %v1929 = vadd.f32 %v1916, 1.0
        %v1930 = vadd.f32 %v1918, 1.0
        %v1931 = vadd.f32 %v1920, 1.0
        %v1932 = vadd.f32 %v1922, 1.0
        %v1933 = vadd.f32 %v1924, 1.0
        %v1934 = vadd.f32 %v1926, 1.0
        %v1935 = vadd.f32 %v1928, 1.0
        %v1936 = vrcp.pop %v1929
        %v1937 = vmul.f32 1.0, %v1936
        %v1938 = vrcp.pop %v1930
        %v1939 = vmul.f32 1.0, %v1938
        %v1940 = vrcp.pop %v1931
        %v1941 = vmul.f32 1.0, %v1940
        %v1942 = vrcp.pop %v1932
        %v1943 = vmul.f32 1.0, %v1942
        %v1944 = vrcp.pop %v1933
        %v1945 = vmul.f32 1.0, %v1944
        %v1946 = vrcp.pop %v1934
        %v1947 = vmul.f32 1.0, %v1946
        %v1948 = vrcp.pop %v1935
        %v1949 = vmul.f32 1.0, %v1948
        %v1950 = vadd.f32 %v1937, 0.0001
        %v1951 = vadd.f32 %v1939, 0.0001
        %v1952 = vadd.f32 %v1941, 0.0001
        %v1953 = vadd.f32 %v1943, 0.0001
        %v1954 = vadd.f32 %v1945, 0.0001
        %v1955 = vadd.f32 %v1947, 0.0001
        %v1956 = vadd.f32 %v1949, 0.0001
        %v1957 = vlog2.pop %v1950
        %v1958 = vmul.f32 %v1957, 0.6931472
        %v1959 = vlog2.pop %v1951
        %v1960 = vmul.f32 %v1959, 0.6931472
        %v1961 = vlog2.pop %v1952
        %v1962 = vmul.f32 %v1961, 0.6931472
        %v1963 = vlog2.pop %v1953
        %v1964 = vmul.f32 %v1963, 0.6931472
        %v1965 = vlog2.pop %v1954
        %v1966 = vmul.f32 %v1965, 0.6931472
        %v1967 = vlog2.pop %v1955
        %v1968 = vmul.f32 %v1967, 0.6931472
        %v1969 = vlog2.pop %v1956
        %v1970 = vmul.f32 %v1969, 0.6931472
        %v1971 = vsub.f32 1.0, %v1937
        %v1972 = vsub.f32 1.0, %v1939
        %v1973 = vsub.f32 1.0, %v1941
        %v1974 = vsub.f32 1.0, %v1943
        %v1975 = vsub.f32 1.0, %v1945
        %v1976 = vsub.f32 1.0, %v1947
        %v1977 = vsub.f32 1.0, %v1949
        %v1978 = vadd.f32 %v1971, 0.0001
        %v1979 = vadd.f32 %v1972, 0.0001
        %v1980 = vadd.f32 %v1973, 0.0001
        %v1981 = vadd.f32 %v1974, 0.0001
        %v1982 = vadd.f32 %v1975, 0.0001
        %v1983 = vadd.f32 %v1976, 0.0001
        %v1984 = vadd.f32 %v1977, 0.0001
        %v1985 = vlog2.pop %v1978
        %v1986 = vmul.f32 %v1985, 0.6931472
        %v1987 = vlog2.pop %v1979
        %v1988 = vmul.f32 %v1987, 0.6931472
        %v1989 = vlog2.pop %v1980
        %v1990 = vmul.f32 %v1989, 0.6931472
        %v1991 = vlog2.pop %v1981
        %v1992 = vmul.f32 %v1991, 0.6931472
        %v1993 = vlog2.pop %v1982
        %v1994 = vmul.f32 %v1993, 0.6931472
        %v1995 = vlog2.pop %v1983
        %v1996 = vmul.f32 %v1995, 0.6931472
        %v1997 = vlog2.pop %v1984
        %v1998 = vmul.f32 %v1997, 0.6931472
        %v1999 = vmul.f32 %v1521, %v1958
        %v2000 = vmul.f32 %v1522, %v1960
        %v2001 = vmul.f32 %v1523, %v1962
        %v2002 = vmul.f32 %v1524, %v1964
        %v2003 = vmul.f32 %v1525, %v1966
        %v2004 = vmul.f32 %v1526, %v1968
        %v2005 = vmul.f32 %v1527, %v1970
        %v2006 = vmul.f32 %v1901, %v1999
        %v2007 = vmul.f32 %v1902, %v2000
        %v2008 = vmul.f32 %v1903, %v2001
        %v2009 = vmul.f32 %v1904, %v2002
        %v2010 = vmul.f32 %v1905, %v2003
        %v2011 = vmul.f32 %v1906, %v2004
        %v2012 = vmul.f32 %v1907, %v2005
        %v2013 = vsub.f32 1.0, %v1521
        %v2014 = vsub.f32 1.0, %v1522
        %v2015 = vsub.f32 1.0, %v1523
        %v2016 = vsub.f32 1.0, %v1524
        %v2017 = vsub.f32 1.0, %v1525
        %v2018 = vsub.f32 1.0, %v1526
        %v2019 = vsub.f32 1.0, %v1527
        %v2020 = vmul.f32 %v2013, %v1986
        %v2021 = vmul.f32 %v2014, %v1988
        %v2022 = vmul.f32 %v2015, %v1990
        %v2023 = vmul.f32 %v2016, %v1992
        %v2024 = vmul.f32 %v2017, %v1994
        %v2025 = vmul.f32 %v2018, %v1996
        %v2026 = vmul.f32 %v2019, %v1998
        %v2027 = vmul.f32 %v1901, %v2020
        %v2028 = vmul.f32 %v1902, %v2021
        %v2029 = vmul.f32 %v1903, %v2022
        %v2030 = vmul.f32 %v1904, %v2023
        %v2031 = vmul.f32 %v1905, %v2024
        %v2032 = vmul.f32 %v1906, %v2025
        %v2033 = vmul.f32 %v1907, %v2026
        %v2034 = vsub.f32 %v1505, %v1521
        %v2035 = vsub.f32 %v1506, %v1522
        %v2036 = vsub.f32 %v1507, %v1523
        %v2037 = vsub.f32 %v1508, %v1524
        %v2038 = vsub.f32 %v1509, %v1525
        %v2039 = vsub.f32 %v1510, %v1526
        %v2040 = vsub.f32 %v1511, %v1527
        %v2041 = vand.u32 2147483647, %v2034
        %v2042 = vand.u32 2147483647, %v2035
        %v2043 = vand.u32 2147483647, %v2036
        %v2044 = vand.u32 2147483647, %v2037
        %v2045 = vand.u32 2147483647, %v2038
        %v2046 = vand.u32 2147483647, %v2039
        %v2047 = vand.u32 2147483647, %v2040
        %vm2048 = vcmp.lt.f32.partialorder %v2041, 1.0
        %vm2049 = vcmp.lt.f32.partialorder %v2042, 1.0
        %vm2050 = vcmp.lt.f32.partialorder %v2043, 1.0
        %vm2051 = vcmp.lt.f32.partialorder %v2044, 1.0
        %vm2052 = vcmp.lt.f32.partialorder %v2045, 1.0
        %vm2053 = vcmp.lt.f32.partialorder %v2046, 1.0
        %vm2054 = vcmp.lt.f32.partialorder %v2047, 1.0
        %v2055 = vmul.f32 %v2041, 0.5
        %v2056 = vmul.f32 %v2042, 0.5
        %v2057 = vmul.f32 %v2043, 0.5
        %v2058 = vmul.f32 %v2044, 0.5
        %v2059 = vmul.f32 %v2045, 0.5
        %v2060 = vmul.f32 %v2046, 0.5
        %v2061 = vmul.f32 %v2047, 0.5
        %v2062 = vmul.f32 %v2055, %v2041
        %v2063 = vmul.f32 %v2056, %v2042
        %v2064 = vmul.f32 %v2057, %v2043
        %v2065 = vmul.f32 %v2058, %v2044
        %v2066 = vmul.f32 %v2059, %v2045
        %v2067 = vmul.f32 %v2060, %v2046
        %v2068 = vmul.f32 %v2061, %v2047
        %v2069 = vsel %vm2048, %v2062, %v2041
        %v2070 = vsel %vm2049, %v2063, %v2042
        %v2071 = vsel %vm2050, %v2064, %v2043
        %v2072 = vsel %vm2051, %v2065, %v2044
        %v2073 = vsel %vm2052, %v2066, %v2045
        %v2074 = vsel %vm2053, %v2067, %v2046
        %v2075 = vsel %vm2054, %v2068, %v2047
        %2083 = vrot.lane.b32.xlu0 %v2069, 127
        %v2084 = vpop.permute.xlu0 %2083
        %2085 = vrot.lane.b32.xlu0 %v2070, 127
        %v2086 = vpop.permute.xlu0 %2085
        %2087 = vrot.lane.b32.xlu0 %v2071, 127
        %v2088 = vpop.permute.xlu0 %2087
        %2089 = vrot.lane.b32.xlu0 %v2072, 127
        %v2090 = vpop.permute.xlu0 %2089
        %2091 = vrot.lane.b32.xlu0 %v2073, 127
        %v2092 = vpop.permute.xlu0 %2091
        %2093 = vrot.lane.b32.xlu0 %v2074, 127
        %v2094 = vpop.permute.xlu0 %2093
        %2095 = vrot.lane.b32.xlu0 %v2075, 127
        %v2096 = vpop.permute.xlu0 %2095
        %vm2097 = vcmask 1039360
        %v2098 = vsel %vm2097, %v2084, %v2086
        %v2099 = vsel %vm2097, %v2086, %v2088
        %v2100 = vsel %vm2097, %v2088, %v2090
        %v2101 = vsel %vm2097, %v2090, %v2092
        %v2102 = vsel %vm2097, %v2092, %v2094
        %v2103 = vsel %vm2097, %v2094, %v2096
        %v2111 = vsel %vm2097, %v2096, 0.0
        %v2112 = vadd.f32 %v2069, %v2098
        %v2113 = vadd.f32 %v2070, %v2099
        %v2114 = vadd.f32 %v2071, %v2100
        %v2115 = vadd.f32 %v2072, %v2101
        %v2116 = vadd.f32 %v2073, %v2102
        %v2117 = vadd.f32 %v2074, %v2103
        %v2118 = vadd.f32 %v2075, %v2111
        %2126 = vrot.lane.b32.xlu0 %v2112, 126
        %v2127 = vpop.permute.xlu0 %2126
        %2128 = vrot.lane.b32.xlu0 %v2113, 126
        %v2129 = vpop.permute.xlu0 %2128
        %2130 = vrot.lane.b32.xlu0 %v2114, 126
        %v2131 = vpop.permute.xlu0 %2130
        %2132 = vrot.lane.b32.xlu0 %v2115, 126
        %v2133 = vpop.permute.xlu0 %2132
        %2134 = vrot.lane.b32.xlu0 %v2116, 126
        %v2135 = vpop.permute.xlu0 %2134
        %2136 = vrot.lane.b32.xlu0 %v2117, 126
        %v2137 = vpop.permute.xlu0 %2136
        %2138 = vrot.lane.b32.xlu0 %v2118, 126
        %v2139 = vpop.permute.xlu0 %2138
        %vm2140 = vcmask 1031168
        %v2141 = vsel %vm2140, %v2127, %v2129
        %v2142 = vsel %vm2140, %v2129, %v2131
        %v2143 = vsel %vm2140, %v2131, %v2133
        %v2144 = vsel %vm2140, %v2133, %v2135
        %v2145 = vsel %vm2140, %v2135, %v2137
        %v2146 = vsel %vm2140, %v2137, %v2139
        %v2154 = vsel %vm2140, %v2139, 0.0
        %v2155 = vadd.f32 %v2112, %v2141
        %v2156 = vadd.f32 %v2113, %v2142
        %v2157 = vadd.f32 %v2114, %v2143
        %v2158 = vadd.f32 %v2115, %v2144
        %v2159 = vadd.f32 %v2116, %v2145
        %v2160 = vadd.f32 %v2117, %v2146
        %v2161 = vadd.f32 %v2118, %v2154
        %2169 = vrot.lane.b32.xlu0 %v1521, 126
        %v2170 = vpop.permute.xlu0 %2169
        %2171 = vrot.lane.b32.xlu0 %v1522, 126
        %v2172 = vpop.permute.xlu0 %2171
        %2173 = vrot.lane.b32.xlu0 %v1523, 126
        %v2174 = vpop.permute.xlu0 %2173
        %2175 = vrot.lane.b32.xlu0 %v1524, 126
        %v2176 = vpop.permute.xlu0 %2175
        %2177 = vrot.lane.b32.xlu0 %v1525, 126
        %v2178 = vpop.permute.xlu0 %2177
        %2179 = vrot.lane.b32.xlu0 %v1526, 126
        %v2180 = vpop.permute.xlu0 %2179
        %2181 = vrot.lane.b32.xlu0 %v1527, 126
        %v2182 = vpop.permute.xlu0 %2181
        %v2183 = vsel %vm2140, %v2170, %v2172
        %v2184 = vsel %vm2140, %v2172, %v2174
        %v2185 = vsel %vm2140, %v2174, %v2176
        %v2186 = vsel %vm2140, %v2176, %v2178
        %v2187 = vsel %vm2140, %v2178, %v2180
        %v2188 = vsel %vm2140, %v2180, %v2182
        %v2196 = vsel %vm2140, %v2182, 0.0
        %v2197 = vsub.f32 %v1521, %v2183
        %v2198 = vsub.f32 %v1522, %v2184
        %v2199 = vsub.f32 %v1523, %v2185
        %v2200 = vsub.f32 %v1524, %v2186
        %v2201 = vsub.f32 %v1525, %v2187
        %v2202 = vsub.f32 %v1526, %v2188
        %v2203 = vsub.f32 %v1527, %v2196
        %v2204 = vmul.f32 %v2197, %v2197
        %v2205 = vmul.f32 %v2198, %v2198
        %v2206 = vmul.f32 %v2199, %v2199
        %v2207 = vmul.f32 %v2200, %v2200
        %v2208 = vmul.f32 %v2201, %v2201
        %v2209 = vmul.f32 %v2202, %v2202
        %v2210 = vmul.f32 %v2203, %v2203
        %2218 = vrot.lane.b32.xlu0 %v2204, 127
        %v2219 = vpop.permute.xlu0 %2218
        %2220 = vrot.lane.b32.xlu0 %v2205, 127
        %v2221 = vpop.permute.xlu0 %2220
        %2222 = vrot.lane.b32.xlu0 %v2206, 127
        %v2223 = vpop.permute.xlu0 %2222
        %2224 = vrot.lane.b32.xlu0 %v2207, 127
        %v2225 = vpop.permute.xlu0 %2224
        %2226 = vrot.lane.b32.xlu0 %v2208, 127
        %v2227 = vpop.permute.xlu0 %2226
        %2228 = vrot.lane.b32.xlu0 %v2209, 127
        %v2229 = vpop.permute.xlu0 %2228
        %2230 = vrot.lane.b32.xlu0 %v2210, 127
        %v2231 = vpop.permute.xlu0 %2230
        %v2232 = vsel %vm2097, %v2219, %v2221
        %v2233 = vsel %vm2097, %v2221, %v2223
        %v2234 = vsel %vm2097, %v2223, %v2225
        %v2235 = vsel %vm2097, %v2225, %v2227
        %v2236 = vsel %vm2097, %v2227, %v2229
        %v2237 = vsel %vm2097, %v2229, %v2231
        %v2245 = vsel %vm2097, %v2231, 0.0
        %v2246 = vadd.f32 %v2204, %v2232
        %v2247 = vadd.f32 %v2205, %v2233
        %v2248 = vadd.f32 %v2206, %v2234
        %v2249 = vadd.f32 %v2207, %v2235
        %v2250 = vadd.f32 %v2208, %v2236
        %v2251 = vadd.f32 %v2209, %v2237
        %v2252 = vadd.f32 %v2210, %v2245
        %v2253 = vrsqrt.pop %v2246
        %v2254 = vmul.f32 %v2246, %v2253
        %vm2255 = vcmp.eq.f32.partialorder %v2246, inf
        %v2256 = vsel %vm2255, %v2246, %v2254
        %vm2257 = vcmp.eq.f32.partialorder %v2246, 0.0
        %v2258 = vand.u32 %v2246, 2147483648
        %v2259 = vsel %vm2257, %v2258, %v2256
        %v2260 = vrsqrt.pop %v2247
        %v2261 = vmul.f32 %v2247, %v2260
        %vm2262 = vcmp.eq.f32.partialorder %v2247, inf
        %v2263 = vsel %vm2262, %v2247, %v2261
        %vm2264 = vcmp.eq.f32.partialorder %v2247, 0.0
        %v2265 = vand.u32 %v2247, 2147483648
        %v2266 = vsel %vm2264, %v2265, %v2263
        %v2267 = vrsqrt.pop %v2248
        %v2268 = vmul.f32 %v2248, %v2267
        %vm2269 = vcmp.eq.f32.partialorder %v2248, inf
        %v2270 = vsel %vm2269, %v2248, %v2268
        %vm2271 = vcmp.eq.f32.partialorder %v2248, 0.0
        %v2272 = vand.u32 %v2248, 2147483648
        %v2273 = vsel %vm2271, %v2272, %v2270
        %v2274 = vrsqrt.pop %v2249
        %v2275 = vmul.f32 %v2249, %v2274
        %vm2276 = vcmp.eq.f32.partialorder %v2249, inf
        %v2277 = vsel %vm2276, %v2249, %v2275
        %vm2278 = vcmp.eq.f32.partialorder %v2249, 0.0
        %v2279 = vand.u32 %v2249, 2147483648
        %v2280 = vsel %vm2278, %v2279, %v2277
        %v2281 = vrsqrt.pop %v2250
        %v2282 = vmul.f32 %v2250, %v2281
        %vm2283 = vcmp.eq.f32.partialorder %v2250, inf
        %v2284 = vsel %vm2283, %v2250, %v2282
        %vm2285 = vcmp.eq.f32.partialorder %v2250, 0.0
        %v2286 = vand.u32 %v2250, 2147483648
        %v2287 = vsel %vm2285, %v2286, %v2284
        %v2288 = vrsqrt.pop %v2251
        %v2289 = vmul.f32 %v2251, %v2288
        %vm2290 = vcmp.eq.f32.partialorder %v2251, inf
        %v2291 = vsel %vm2290, %v2251, %v2289
        %vm2292 = vcmp.eq.f32.partialorder %v2251, 0.0
        %v2293 = vand.u32 %v2251, 2147483648
        %v2294 = vsel %vm2292, %v2293, %v2291
        %v2295 = vrsqrt.pop %v2252
        %v2296 = vmul.f32 %v2252, %v2295
        %vm2297 = vcmp.eq.f32.partialorder %v2252, inf
        %v2298 = vsel %vm2297, %v2252, %v2296
        %vm2299 = vcmp.eq.f32.partialorder %v2252, 0.0
        %v2300 = vand.u32 %v2252, 2147483648
        %v2301 = vsel %vm2299, %v2300, %v2298
        %v2302 = vmul.f32 %v2259, 4.0
        %v2303 = vmul.f32 %v2266, 4.0
        %v2304 = vmul.f32 %v2273, 4.0
        %v2305 = vmul.f32 %v2280, 4.0
        %v2306 = vmul.f32 %v2287, 4.0
        %v2307 = vmul.f32 %v2294, 4.0
        %v2308 = vmul.f32 %v2301, 4.0
        %v2309 = vadd.f32 %v2302, 0.0001
        %v2310 = vadd.f32 %v2303, 0.0001
        %v2311 = vadd.f32 %v2304, 0.0001
        %v2312 = vadd.f32 %v2305, 0.0001
        %v2313 = vadd.f32 %v2306, 0.0001
        %v2314 = vadd.f32 %v2307, 0.0001
        %v2315 = vadd.f32 %v2308, 0.0001
        %v2316 = vmul.f32 %v1766, %v1858
        %v2317 = vmul.f32 %v1767, %v1845
        %v2318 = vmul.f32 %v1768, %v1846
        %v2319 = vmul.f32 %v1769, %v1847
        %v2320 = vmul.f32 %v1770, %v1848
        %v2321 = vmul.f32 %v1771, %v1849
        %v2322 = vmul.f32 %v1772, %v1850
        %v2323 = vsub.f32 %v2155, 2.0
        %v2324 = vsub.f32 %v2156, 2.0
        %v2325 = vsub.f32 %v2157, 2.0
        %v2326 = vsub.f32 %v2158, 2.0
        %v2327 = vsub.f32 %v2159, 2.0
        %v2328 = vsub.f32 %v2160, 2.0
        %v2329 = vsub.f32 %v2161, 2.0
        %v2330 = vmul.f32 %v2316, %v2323
        %v2331 = vmul.f32 %v2317, %v2324
        %v2332 = vmul.f32 %v2318, %v2325
        %v2333 = vmul.f32 %v2319, %v2326
        %v2334 = vmul.f32 %v2320, %v2327
        %v2335 = vmul.f32 %v2321, %v2328
        %v2336 = vmul.f32 %v2322, %v2329
        %v2337 = vrcp.pop %v2309
        %v2338 = vmul.f32 %v2330, %v2337
        %v2339 = vrcp.pop %v2310
        %v2340 = vmul.f32 %v2331, %v2339
        %v2341 = vrcp.pop %v2311
        %v2342 = vmul.f32 %v2332, %v2341
        %v2343 = vrcp.pop %v2312
        %v2344 = vmul.f32 %v2333, %v2343
        %v2345 = vrcp.pop %v2313
        %v2346 = vmul.f32 %v2334, %v2345
        %v2347 = vrcp.pop %v2314
        %v2348 = vmul.f32 %v2335, %v2347
        %v2349 = vrcp.pop %v2315
        %v2350 = vmul.f32 %v2336, %v2349
        %v2351 = vmul.f32 %v1521, %v1710
        %v2352 = vmul.f32 %v1522, %v1711
        %v2353 = vmul.f32 %v1523, %v1712
        %v2354 = vmul.f32 %v1524, %v1713
        %v2355 = vmul.f32 %v1525, %v1714
        %v2356 = vmul.f32 %v1526, %v1715
        %v2357 = vmul.f32 %v1527, %v1716
        %v2358 = vmul.f32 %v1858, %v1745
        %v2359 = vmul.f32 %v1845, %v1746
        %v2360 = vmul.f32 %v1846, %v1747
        %v2361 = vmul.f32 %v1847, %v1748
        %v2362 = vmul.f32 %v1848, %v1749
        %v2363 = vmul.f32 %v1849, %v1750
        %v2364 = vmul.f32 %v1850, %v1751
        %v2365 = vadd.f32 %v2351, %v2358
        %v2366 = vadd.f32 %v2352, %v2359
        %v2367 = vadd.f32 %v2353, %v2360
        %v2368 = vadd.f32 %v2354, %v2361
        %v2369 = vadd.f32 %v2355, %v2362
        %v2370 = vadd.f32 %v2356, %v2363
        %v2371 = vadd.f32 %v2357, %v2364
        %v2372 = vld [vmem:[%s217] ss:$4 sm:$0xff]
        %vm2373 = vcmask 1043456
        %v2374 = vsel %vm2373, %v2365, 0.0
        %v2375 = vrot.slane %v2374, 4
        %v2376 = vadd.f32 %v2374, %v2375
        %v2377 = vrot.slane %v2376, 2
        %v2378 = vadd.f32 %v2376, %v2377
        %v2379 = vrot.slane %v2378, 1
        %v2380 = vadd.f32 %v2378, %v2379
        %v2381 = vsel %vm2373, %v2366, 0.0
        %v2382 = vrot.slane %v2381, 4
        %v2383 = vadd.f32 %v2381, %v2382
        %v2384 = vrot.slane %v2383, 2
        %v2385 = vadd.f32 %v2383, %v2384
        %v2386 = vrot.slane %v2385, 1
        %v2387 = vadd.f32 %v2385, %v2386
        %v2388 = vsel %vm2373, %v2367, 0.0
        %v2389 = vrot.slane %v2388, 4
        %v2390 = vadd.f32 %v2388, %v2389
        %v2391 = vrot.slane %v2390, 2
        %v2392 = vadd.f32 %v2390, %v2391
        %v2393 = vrot.slane %v2392, 1
        %v2394 = vadd.f32 %v2392, %v2393
        %v2395 = vsel %vm2373, %v2368, 0.0
        %v2396 = vrot.slane %v2395, 4
        %v2397 = vadd.f32 %v2395, %v2396
        %v2398 = vrot.slane %v2397, 2
        %v2399 = vadd.f32 %v2397, %v2398
        %v2400 = vrot.slane %v2399, 1
        %v2401 = vadd.f32 %v2399, %v2400
        %v2402 = vsel %vm2373, %v2369, 0.0
        %v2403 = vrot.slane %v2402, 4
        %v2404 = vadd.f32 %v2402, %v2403
        %v2405 = vrot.slane %v2404, 2
        %v2406 = vadd.f32 %v2404, %v2405
        %v2407 = vrot.slane %v2406, 1
        %v2408 = vadd.f32 %v2406, %v2407
        %v2409 = vsel %vm2373, %v2370, 0.0
        %v2410 = vrot.slane %v2409, 4
        %v2411 = vadd.f32 %v2409, %v2410
        %v2412 = vrot.slane %v2411, 2
        %v2413 = vadd.f32 %v2411, %v2412
        %v2414 = vrot.slane %v2413, 1
        %v2415 = vadd.f32 %v2413, %v2414
        %v2416 = vsel %vm2373, %v2371, 0.0
        %v2417 = vrot.slane %v2416, 4
        %v2418 = vadd.f32 %v2416, %v2417
        %v2419 = vrot.slane %v2418, 2
        %v2420 = vadd.f32 %v2418, %v2419
        %v2421 = vrot.slane %v2420, 1
        %v2422 = vadd.f32 %v2420, %v2421
        %v2430 = vcombine.low %v2380, %v2387
        %v2431 = vcombine.low %v2394, %v2401
        %v2432 = vcombine.low %v2408, %v2415
        %v2434 = vunpack.c.l.s4 1966171168
        %v2435 = vunpack.c.0.s8 %v2434
        %v2436 = vlaneseq
        %v2437 = vshrl.u32 %v2436, 7
        %v2438 = vsub.s32 %v2435, %v2437
        %v2439 = vrot.slane %v2430, %v2438
        %v2441 = vunpack.c.l.s4 1966171168
        %v2442 = vunpack.c.0.s8 %v2441
        %v2443 = vlaneseq
        %v2444 = vshrl.u32 %v2443, 7
        %v2445 = vsub.s32 %v2442, %v2444
        %v2446 = vrot.slane %v2431, %v2445
        %v2448 = vunpack.c.l.s4 1966171168
        %v2449 = vunpack.c.0.s8 %v2448
        %v2450 = vlaneseq
        %v2451 = vshrl.u32 %v2450, 7
        %v2452 = vsub.s32 %v2449, %v2451
        %v2453 = vrot.slane %v2432, %v2452
        %v2455 = vunpack.c.l.s4 1966171168
        %v2456 = vunpack.c.0.s8 %v2455
        %v2457 = vlaneseq
        %v2458 = vshrl.u32 %v2457, 7
        %v2459 = vsub.s32 %v2456, %v2458
        %v2460 = vrot.slane %v2422, %v2459
        %v2461 = vcombine.low %v2439, %v2446
        %v2462 = vcombine.low %v2453, %v2460
        %v2464 = vunpack.c.l.s4 1966171168
        %v2465 = vunpack.c.0.s8 %v2464
        %v2466 = vlaneseq
        %v2467 = vshrl.u32 %v2466, 7
        %v2468 = vsub.s32 %v2465, %v2467
        %v2469 = vrot.slane %v2461, %v2468
        %v2471 = vunpack.c.l.s4 1966171168
        %v2472 = vunpack.c.0.s8 %v2471
        %v2473 = vlaneseq
        %v2474 = vshrl.u32 %v2473, 7
        %v2475 = vsub.s32 %v2472, %v2474
        %v2476 = vrot.slane %v2462, %v2475
        %v2477 = vcombine.low %v2469, %v2476
        %v2479 = vadd.f32 %v2372, %v2477
        %v2480 = vlaneseq
        %vm2481 = vcmp.ge.s32.totalorder %v2480, 0
        %vm2482 = vcmp.lt.s32.totalorder %v2480, 896
        %vm2483 = vmand %vm2481, %vm2482
        %2484 = vst.msk [vmem:[%s217] ss:$4 sm:$0x7f] %vm2483, %v2479
        %s2485 = scalar_lea.vmem %s217, 1
        %v2486 = vld [vmem:[%s2485] ss:$4 sm:$0xff]
        %v2487 = vsel %vm2373, %v2006, 0.0
        %v2488 = vrot.slane %v2487, 4
        %v2489 = vadd.f32 %v2487, %v2488
        %v2490 = vrot.slane %v2489, 2
        %v2491 = vadd.f32 %v2489, %v2490
        %v2492 = vrot.slane %v2491, 1
        %v2493 = vadd.f32 %v2491, %v2492
        %v2494 = vsel %vm2373, %v2007, 0.0
        %v2495 = vrot.slane %v2494, 4
        %v2496 = vadd.f32 %v2494, %v2495
        %v2497 = vrot.slane %v2496, 2
        %v2498 = vadd.f32 %v2496, %v2497
        %v2499 = vrot.slane %v2498, 1
        %v2500 = vadd.f32 %v2498, %v2499
        %v2501 = vsel %vm2373, %v2008, 0.0
        %v2502 = vrot.slane %v2501, 4
        %v2503 = vadd.f32 %v2501, %v2502
        %v2504 = vrot.slane %v2503, 2
        %v2505 = vadd.f32 %v2503, %v2504
        %v2506 = vrot.slane %v2505, 1
        %v2507 = vadd.f32 %v2505, %v2506
        %v2508 = vsel %vm2373, %v2009, 0.0
        %v2509 = vrot.slane %v2508, 4
        %v2510 = vadd.f32 %v2508, %v2509
        %v2511 = vrot.slane %v2510, 2
        %v2512 = vadd.f32 %v2510, %v2511
        %v2513 = vrot.slane %v2512, 1
        %v2514 = vadd.f32 %v2512, %v2513
        %v2515 = vsel %vm2373, %v2010, 0.0
        %v2516 = vrot.slane %v2515, 4
        %v2517 = vadd.f32 %v2515, %v2516
        %v2518 = vrot.slane %v2517, 2
        %v2519 = vadd.f32 %v2517, %v2518
        %v2520 = vrot.slane %v2519, 1
        %v2521 = vadd.f32 %v2519, %v2520
        %v2522 = vsel %vm2373, %v2011, 0.0
        %v2523 = vrot.slane %v2522, 4
        %v2524 = vadd.f32 %v2522, %v2523
        %v2525 = vrot.slane %v2524, 2
        %v2526 = vadd.f32 %v2524, %v2525
        %v2527 = vrot.slane %v2526, 1
        %v2528 = vadd.f32 %v2526, %v2527
        %v2529 = vsel %vm2373, %v2012, 0.0
        %v2530 = vrot.slane %v2529, 4
        %v2531 = vadd.f32 %v2529, %v2530
        %v2532 = vrot.slane %v2531, 2
        %v2533 = vadd.f32 %v2531, %v2532
        %v2534 = vrot.slane %v2533, 1
        %v2535 = vadd.f32 %v2533, %v2534
        %v2543 = vcombine.low %v2493, %v2500
        %v2544 = vcombine.low %v2507, %v2514
        %v2545 = vcombine.low %v2521, %v2528
        %v2547 = vunpack.c.l.s4 1966171168
        %v2548 = vunpack.c.0.s8 %v2547
        %v2549 = vlaneseq
        %v2550 = vshrl.u32 %v2549, 7
        %v2551 = vsub.s32 %v2548, %v2550
        %v2552 = vrot.slane %v2543, %v2551
        %v2554 = vunpack.c.l.s4 1966171168
        %v2555 = vunpack.c.0.s8 %v2554
        %v2556 = vlaneseq
        %v2557 = vshrl.u32 %v2556, 7
        %v2558 = vsub.s32 %v2555, %v2557
        %v2559 = vrot.slane %v2544, %v2558
        %v2561 = vunpack.c.l.s4 1966171168
        %v2562 = vunpack.c.0.s8 %v2561
        %v2563 = vlaneseq
        %v2564 = vshrl.u32 %v2563, 7
        %v2565 = vsub.s32 %v2562, %v2564
        %v2566 = vrot.slane %v2545, %v2565
        %v2568 = vunpack.c.l.s4 1966171168
        %v2569 = vunpack.c.0.s8 %v2568
        %v2570 = vlaneseq
        %v2571 = vshrl.u32 %v2570, 7
        %v2572 = vsub.s32 %v2569, %v2571
        %v2573 = vrot.slane %v2535, %v2572
        %v2574 = vcombine.low %v2552, %v2559
        %v2575 = vcombine.low %v2566, %v2573
        %v2577 = vunpack.c.l.s4 1966171168
        %v2578 = vunpack.c.0.s8 %v2577
        %v2579 = vlaneseq
        %v2580 = vshrl.u32 %v2579, 7
        %v2581 = vsub.s32 %v2578, %v2580
        %v2582 = vrot.slane %v2574, %v2581
        %v2584 = vunpack.c.l.s4 1966171168
        %v2585 = vunpack.c.0.s8 %v2584
        %v2586 = vlaneseq
        %v2587 = vshrl.u32 %v2586, 7
        %v2588 = vsub.s32 %v2585, %v2587
        %v2589 = vrot.slane %v2575, %v2588
        %v2590 = vcombine.low %v2582, %v2589
        %v2592 = vadd.f32 %v2486, %v2590
        %2593 = vst.msk [vmem:[%s2485] ss:$4 sm:$0x7f] %vm2483, %v2592
        %s2594 = scalar_lea.vmem %s217, 2
        %v2595 = vld [vmem:[%s2594] ss:$4 sm:$0xff]
        %v2596 = vsel %vm2373, %v2027, 0.0
        %v2597 = vrot.slane %v2596, 4
        %v2598 = vadd.f32 %v2596, %v2597
        %v2599 = vrot.slane %v2598, 2
        %v2600 = vadd.f32 %v2598, %v2599
        %v2601 = vrot.slane %v2600, 1
        %v2602 = vadd.f32 %v2600, %v2601
        %v2603 = vsel %vm2373, %v2028, 0.0
        %v2604 = vrot.slane %v2603, 4
        %v2605 = vadd.f32 %v2603, %v2604
        %v2606 = vrot.slane %v2605, 2
        %v2607 = vadd.f32 %v2605, %v2606
        %v2608 = vrot.slane %v2607, 1
        %v2609 = vadd.f32 %v2607, %v2608
        %v2610 = vsel %vm2373, %v2029, 0.0
        %v2611 = vrot.slane %v2610, 4
        %v2612 = vadd.f32 %v2610, %v2611
        %v2613 = vrot.slane %v2612, 2
        %v2614 = vadd.f32 %v2612, %v2613
        %v2615 = vrot.slane %v2614, 1
        %v2616 = vadd.f32 %v2614, %v2615
        %v2617 = vsel %vm2373, %v2030, 0.0
        %v2618 = vrot.slane %v2617, 4
        %v2619 = vadd.f32 %v2617, %v2618
        %v2620 = vrot.slane %v2619, 2
        %v2621 = vadd.f32 %v2619, %v2620
        %v2622 = vrot.slane %v2621, 1
        %v2623 = vadd.f32 %v2621, %v2622
        %v2624 = vsel %vm2373, %v2031, 0.0
        %v2625 = vrot.slane %v2624, 4
        %v2626 = vadd.f32 %v2624, %v2625
        %v2627 = vrot.slane %v2626, 2
        %v2628 = vadd.f32 %v2626, %v2627
        %v2629 = vrot.slane %v2628, 1
        %v2630 = vadd.f32 %v2628, %v2629
        %v2631 = vsel %vm2373, %v2032, 0.0
        %v2632 = vrot.slane %v2631, 4
        %v2633 = vadd.f32 %v2631, %v2632
        %v2634 = vrot.slane %v2633, 2
        %v2635 = vadd.f32 %v2633, %v2634
        %v2636 = vrot.slane %v2635, 1
        %v2637 = vadd.f32 %v2635, %v2636
        %v2638 = vsel %vm2373, %v2033, 0.0
        %v2639 = vrot.slane %v2638, 4
        %v2640 = vadd.f32 %v2638, %v2639
        %v2641 = vrot.slane %v2640, 2
        %v2642 = vadd.f32 %v2640, %v2641
        %v2643 = vrot.slane %v2642, 1
        %v2644 = vadd.f32 %v2642, %v2643
        %v2652 = vcombine.low %v2602, %v2609
        %v2653 = vcombine.low %v2616, %v2623
        %v2654 = vcombine.low %v2630, %v2637
        %v2656 = vunpack.c.l.s4 1966171168
        %v2657 = vunpack.c.0.s8 %v2656
        %v2658 = vlaneseq
        %v2659 = vshrl.u32 %v2658, 7
        %v2660 = vsub.s32 %v2657, %v2659
        %v2661 = vrot.slane %v2652, %v2660
        %v2663 = vunpack.c.l.s4 1966171168
        %v2664 = vunpack.c.0.s8 %v2663
        %v2665 = vlaneseq
        %v2666 = vshrl.u32 %v2665, 7
        %v2667 = vsub.s32 %v2664, %v2666
        %v2668 = vrot.slane %v2653, %v2667
        %v2670 = vunpack.c.l.s4 1966171168
        %v2671 = vunpack.c.0.s8 %v2670
        %v2672 = vlaneseq
        %v2673 = vshrl.u32 %v2672, 7
        %v2674 = vsub.s32 %v2671, %v2673
        %v2675 = vrot.slane %v2654, %v2674
        %v2677 = vunpack.c.l.s4 1966171168
        %v2678 = vunpack.c.0.s8 %v2677
        %v2679 = vlaneseq
        %v2680 = vshrl.u32 %v2679, 7
        %v2681 = vsub.s32 %v2678, %v2680
        %v2682 = vrot.slane %v2644, %v2681
        %v2683 = vcombine.low %v2661, %v2668
        %v2684 = vcombine.low %v2675, %v2682
        %v2686 = vunpack.c.l.s4 1966171168
        %v2687 = vunpack.c.0.s8 %v2686
        %v2688 = vlaneseq
        %v2689 = vshrl.u32 %v2688, 7
        %v2690 = vsub.s32 %v2687, %v2689
        %v2691 = vrot.slane %v2683, %v2690
        %v2693 = vunpack.c.l.s4 1966171168
        %v2694 = vunpack.c.0.s8 %v2693
        %v2695 = vlaneseq
        %v2696 = vshrl.u32 %v2695, 7
        %v2697 = vsub.s32 %v2694, %v2696
        %v2698 = vrot.slane %v2684, %v2697
        %v2699 = vcombine.low %v2691, %v2698
        %v2701 = vadd.f32 %v2595, %v2699
        %2702 = vst.msk [vmem:[%s2594] ss:$4 sm:$0x7f] %vm2483, %v2701
        %s2703 = scalar_lea.vmem %s217, 3
        %v2704 = vld [vmem:[%s2703] ss:$4 sm:$0xff]
        %v2705 = vsel %vm2373, %v2338, 0.0
        %v2706 = vrot.slane %v2705, 4
        %v2707 = vadd.f32 %v2705, %v2706
        %v2708 = vrot.slane %v2707, 2
        %v2709 = vadd.f32 %v2707, %v2708
        %v2710 = vrot.slane %v2709, 1
        %v2711 = vadd.f32 %v2709, %v2710
        %v2712 = vsel %vm2373, %v2340, 0.0
        %v2713 = vrot.slane %v2712, 4
        %v2714 = vadd.f32 %v2712, %v2713
        %v2715 = vrot.slane %v2714, 2
        %v2716 = vadd.f32 %v2714, %v2715
        %v2717 = vrot.slane %v2716, 1
        %v2718 = vadd.f32 %v2716, %v2717
        %v2719 = vsel %vm2373, %v2342, 0.0
        %v2720 = vrot.slane %v2719, 4
        %v2721 = vadd.f32 %v2719, %v2720
        %v2722 = vrot.slane %v2721, 2
        %v2723 = vadd.f32 %v2721, %v2722
        %v2724 = vrot.slane %v2723, 1
        %v2725 = vadd.f32 %v2723, %v2724
        %v2726 = vsel %vm2373, %v2344, 0.0
        %v2727 = vrot.slane %v2726, 4
        %v2728 = vadd.f32 %v2726, %v2727
        %v2729 = vrot.slane %v2728, 2
        %v2730 = vadd.f32 %v2728, %v2729
        %v2731 = vrot.slane %v2730, 1
        %v2732 = vadd.f32 %v2730, %v2731
        %v2733 = vsel %vm2373, %v2346, 0.0
        %v2734 = vrot.slane %v2733, 4
        %v2735 = vadd.f32 %v2733, %v2734
        %v2736 = vrot.slane %v2735, 2
        %v2737 = vadd.f32 %v2735, %v2736
        %v2738 = vrot.slane %v2737, 1
        %v2739 = vadd.f32 %v2737, %v2738
        %v2740 = vsel %vm2373, %v2348, 0.0
        %v2741 = vrot.slane %v2740, 4
        %v2742 = vadd.f32 %v2740, %v2741
        %v2743 = vrot.slane %v2742, 2
        %v2744 = vadd.f32 %v2742, %v2743
        %v2745 = vrot.slane %v2744, 1
        %v2746 = vadd.f32 %v2744, %v2745
        %v2747 = vsel %vm2373, %v2350, 0.0
        %v2748 = vrot.slane %v2747, 4
        %v2749 = vadd.f32 %v2747, %v2748
        %v2750 = vrot.slane %v2749, 2
        %v2751 = vadd.f32 %v2749, %v2750
        %v2752 = vrot.slane %v2751, 1
        %v2753 = vadd.f32 %v2751, %v2752
        %v2761 = vcombine.low %v2711, %v2718
        %v2762 = vcombine.low %v2725, %v2732
        %v2763 = vcombine.low %v2739, %v2746
        %v2765 = vunpack.c.l.s4 1966171168
        %v2766 = vunpack.c.0.s8 %v2765
        %v2767 = vlaneseq
        %v2768 = vshrl.u32 %v2767, 7
        %v2769 = vsub.s32 %v2766, %v2768
        %v2770 = vrot.slane %v2761, %v2769
        %v2772 = vunpack.c.l.s4 1966171168
        %v2773 = vunpack.c.0.s8 %v2772
        %v2774 = vlaneseq
        %v2775 = vshrl.u32 %v2774, 7
        %v2776 = vsub.s32 %v2773, %v2775
        %v2777 = vrot.slane %v2762, %v2776
        %v2779 = vunpack.c.l.s4 1966171168
        %v2780 = vunpack.c.0.s8 %v2779
        %v2781 = vlaneseq
        %v2782 = vshrl.u32 %v2781, 7
        %v2783 = vsub.s32 %v2780, %v2782
        %v2784 = vrot.slane %v2763, %v2783
        %v2786 = vunpack.c.l.s4 1966171168
        %v2787 = vunpack.c.0.s8 %v2786
        %v2788 = vlaneseq
        %v2789 = vshrl.u32 %v2788, 7
        %v2790 = vsub.s32 %v2787, %v2789
        %v2791 = vrot.slane %v2753, %v2790
        %v2792 = vcombine.low %v2770, %v2777
        %v2793 = vcombine.low %v2784, %v2791
        %v2795 = vunpack.c.l.s4 1966171168
        %v2796 = vunpack.c.0.s8 %v2795
        %v2797 = vlaneseq
        %v2798 = vshrl.u32 %v2797, 7
        %v2799 = vsub.s32 %v2796, %v2798
        %v2800 = vrot.slane %v2792, %v2799
        %v2802 = vunpack.c.l.s4 1966171168
        %v2803 = vunpack.c.0.s8 %v2802
        %v2804 = vlaneseq
        %v2805 = vshrl.u32 %v2804, 7
        %v2806 = vsub.s32 %v2803, %v2805
        %v2807 = vrot.slane %v2793, %v2806
        %v2808 = vcombine.low %v2800, %v2807
        %v2810 = vadd.f32 %v2704, %v2808
        %2811 = vst.msk [vmem:[%s2703] ss:$4 sm:$0x7f] %vm2483, %v2810
      $region40: #{quad_loss_pallas.1} parent=27 // pred_fallthru
        _
      %p2812 = scmp.lt.s32.totalorder %s17, 1
      %s2813 = scalar_select %p2812, %s17, 1
      %s2814 = smul.addr %s2813, 7
      %s2815 = smul.addr %s2814, 4
      %s2816 = scalar_lea.vmem %s2, %s2815
      // Predicated region
      $region41: #{quad_loss_pallas.1} parent=27 // pred_check
        %p2817 = pneg %p107
      $region42: #{quad_loss_pallas.1} parent=27 // pred_check_branch
        %2819 = sbr.rel (%p2817) target = $region44
      $region43: #{quad_loss_pallas.1} parent=27 // pred_region
        _
      $region44: #{quad_loss_pallas.1} parent=27 // pred_fallthru
        _
    $region28: #{quad_loss_pallas.1} parent=5 // pred_fallthru
      _
    %p2820 = scmp.le.s32.totalorder 2, %s8
    // Predicated region
    $region45: #{quad_loss_pallas.1} parent=5 // pred_check
      %p2821 = pneg %p2820
    $region46: #{quad_loss_pallas.1} parent=5 // pred_check_branch
      %2823 = sbr.rel (%p2821) target = $region48
    $region47: #{quad_loss_pallas.1} parent=5 // pred_region
      %s2824 = ssub.s32 %s8, 2
      // Predicated region
      $region49: #{quad_loss_pallas.1} parent=47 // pred_check
        %p2825 = pneg %p113
      $region50: #{quad_loss_pallas.1} parent=47 // pred_check_branch
        %2827 = sbr.rel (%p2825) target = $region52
      $region51: #{quad_loss_pallas.1} parent=47 // pred_region
        %p2828 = scmp.lt.s32.totalorder %s19, 1
        %s2829 = scalar_select %p2828, %s19, 1
        %s2830 = smul.addr %s2829, 7
        %s2831 = smul.addr %s2830, 4
        %s2832 = scalar_lea.vmem %s2, %s2831
      $region52: #{quad_loss_pallas.1} parent=47 // pred_fallthru
        _
    $region48: #{quad_loss_pallas.1} parent=5 // pred_fallthru
      _
  $region6: #{quad_loss_pallas.1} parent=0 // loop_footer
    %s12 = sadd.s32 1, %s8
  $region7: #{quad_loss_pallas.1} parent=0 // loop_footer_branch
    %7 = sbr.rel target = $region3
  $region8: #{quad_loss_pallas.1} parent=0 // loop_exit
    _

</llo_original>
